<compile_context>
chip_gen: v5e
topology: v5e:2x2
jax: 0.10.0
libtpu: 0.0.40
codegen_flags: <defaults>
</compile_context>

<pallas_src>
import functools

import jax
import jax.numpy as jnp
from jax import lax
from jax.experimental import pallas as pl
from jax.experimental.pallas import tpu as pltpu


# ---------------------------------------------------------------------------
# Chip limits / tiling helpers
# ---------------------------------------------------------------------------
def _tpu_limits():
    """Returns (vmem_capacity_bytes, num_cores) with conservative fallbacks."""
    vmem_cap = 64 * 1024 * 1024      # assume the smallest (v7x) if unknown
    num_cores = 1
    try:
        info = pltpu.get_tpu_info()
        cap = getattr(info, "vmem_capacity_bytes", None)
        if cap:
            vmem_cap = int(cap)
        for attr in ("num_cores", "num_cores_per_chip", "core_count"):
            val = getattr(info, attr, None)
            if val:
                num_cores = int(val)
                break
    except Exception:
        pass
    return vmem_cap, num_cores


def _round_batch_tile(tb, B):
    """Batch (sublane) tiles must be a multiple of 8 or the full dim."""
    tb = max(1, min(int(tb), B))
    if tb < B:
        tb = min(B, max(8, (tb // 8) * 8))
    return tb


def _choose_flat_batch_tile(B, M, budget_bytes, num_cores):
    row_bytes = M * 4                                   # f32 working row
    tb = _round_batch_tile(budget_bytes // max(1, row_bytes), B)
    # Megacore: only split when the chip has >=2 cores, everything would
    # otherwise land in one grid step, and there is enough work to share.
    if (num_cores >= 2 and tb == B and B >= 8 * num_cores
            and B * row_bytes >= (1 << 19)):
        tb = _round_batch_tile(pl.cdiv(B, num_cores), B)
    return tb


def _choose_mxu_tiles(B, L, C, budget_bytes):
    if C >= 128 and C % 128 == 0:
        tc_tiles = max(1, min(C // 128, budget_bytes // max(1, L * 128 * 4)))
        TC = 128 * tc_tiles                              # lane-dense tiles
    else:
        TC = C                                           # full channel axis
    TB = max(1, min(B, budget_bytes // max(1, L * TC * 4)))
    TB = min(TB, 8)                                      # cap static unroll
    return TB, TC


# ---------------------------------------------------------------------------
# Path 1: lane-dense flattened kernel (C < 128 and (L*C) % 128 == 0)
# ---------------------------------------------------------------------------
def _series_decomp_flat_kernel(x_ref, res_ref, mean_ref, *, kernel_size,
                               seq_len, num_channels):
    """One (TB, M=L*C) block: the flattened (time, channel) axis on lanes."""
    pad = (kernel_size - 1) // 2
    L, C = seq_len, num_channels
    M = L * C

    xf = x_ref[...].astype(jnp.float32)                  # cast once

    # (1, M) lane iota; all masks are plain lane thresholds (no vector divide)
    # and broadcast over the batch sublanes inside the selects.
    lane = lax.broadcasted_iota(jnp.int32, (1, M), 1)

    # Centre tap initializes the accumulator.
    acc = xf
    # Valid-window taps: static lane rolls (XLU slot) + zero-masked adds.
    d_max = min(pad, L - 1)
    for d in range(1, d_max + 1):
        sh = d * C
        fwd = pltpu.roll(xf, shift=(M - sh) % M, axis=1)   # fwd[p] == x[p + sh]
        acc = acc + jnp.where(lane < M - sh, fwd, 0.0)     # valid iff t + d <= L-1
        bwd = pltpu.roll(xf, shift=sh, axis=1)             # bwd[p] == x[p - sh]
        acc = acc + jnp.where(lane >= sh, bwd, 0.0)        # valid iff t - d >= 0

    if pad > 0:
        # Replicate-padding correction: clamped taps contribute
        # n_front[t]*x[0, c] + n_end[t]*x[L-1, c].  Build the two edge-row
        # lane broadcasts with a log-step fill, only as deep as pad requires.
        n_cov = min(pad, L)
        fb = xf                 # -> x[0,   p % C] on lanes [0, n_cov*C)
        lb = xf                 # -> x[L-1, p % C] on lanes [M - n_cov*C, M)
        filled = C
        while filled < n_cov * C:
            fb = jnp.where(lane < filled, fb,
                           pltpu.roll(fb, shift=filled, axis=1))
            lb = jnp.where(lane >= M - filled, lb,
                           pltpu.roll(lb, shift=(M - filled) % M, axis=1))
            filled *= 2
        # Per-lane clamp counts, built as staircases on the small (1, M) iota.
        n_front = jnp.zeros((1, M), jnp.float32)
        n_end = jnp.zeros((1, M), jnp.float32)
        for e in range(1, n_cov + 1):
            n_front = n_front + jnp.where(lane < e * C, 1.0, 0.0)
            n_end = n_end + jnp.where(lane >= M - e * C, 1.0, 0.0)
        extra = max(pad - L, 0)         # degenerate pad >= L: all taps clamp
        if extra:
            n_front = n_front + float(extra)
            n_end = n_end + float(extra)
        acc = acc + n_front * fb + n_end * lb

    mean = acc * (1.0 / float(kernel_size))
    mean_ref[...] = mean.astype(mean_ref.dtype)
    res_ref[...] = (xf - mean).astype(res_ref.dtype)


# ---------------------------------------------------------------------------
# Path 2: MXU kernel (banded (L, L) averaging matrix along the time axis)
# ---------------------------------------------------------------------------
def _series_decomp_mxu_kernel(a_ref, x_ref, res_ref, mean_ref):
    """One (TB, L, TC) block; window sum is a (L,L) @ (L,TC) MXU matmul."""
    a = a_ref[...]                                        # (L, L) float32
    for b in range(x_ref.shape[0]):                       # small static unroll
        xb = x_ref[b].astype(jnp.float32)                 # (L, TC)
        mb = jnp.dot(a, xb, preferred_element_type=jnp.float32)
        mean_ref[b] = mb.astype(mean_ref.dtype)
        res_ref[b] = (xb - mb).astype(res_ref.dtype)


def _build_avg_matrix(L, kernel_size):
    """(L, L) moving-average matrix with replicate-pad weights folded in."""
    pad = (kernel_size - 1) // 2
    t = jnp.arange(L, dtype=jnp.int32)
    band = (jnp.abs(t[:, None] - t[None, :]) <= pad).astype(jnp.float32)
    n_front = jnp.maximum(pad - t, 0).astype(jnp.float32)          # clamps to s=0
    n_end = jnp.maximum(t + pad - (L - 1), 0).astype(jnp.float32)  # clamps to s=L-1
    a = band.at[:, 0].add(n_front).at[:, L - 1].add(n_end)
    return a * (1.0 / float(kernel_size))


# ---------------------------------------------------------------------------
# Wrapper
# ---------------------------------------------------------------------------
def series_decomp(x, kernel_size, *, block_bytes_target=None):
    """Returns (res, moving_mean), each shaped like x = (B, L, C)."""
    assert kernel_size % 2 == 1, "stride=1 decomposition assumes odd kernel_size"
    B, L, C = x.shape
    itemsize = x.dtype.itemsize

    vmem_cap, num_cores = _tpu_limits()
    if block_bytes_target is None:
        # ~1.5 MiB f32 working blocks on 64 MiB-VMEM chips (v7x), ~3 MiB on
        # 128 MiB chips (v5e/v6e): large enough to amortize the ~0.35us/step
        # overhead, small enough for the ~8x live multiplier + I/O buffers.
        block_bytes_target = (3 << 20) if vmem_cap > (96 << 20) else (3 << 19)
    vmem_limit = int(min(max(32 << 20, int(vmem_cap * 0.7)), 100 << 20))

    use_flat = (C < 128) and ((L * C) % 128 == 0)

    if use_flat:
        M = L * C
        TB = _choose_flat_batch_tile(B, M, block_bytes_target, num_cores)
        kernel = functools.partial(_series_decomp_flat_kernel,
                                   kernel_size=kernel_size,
                                   seq_len=L, num_channels=C)
        cost = pl.CostEstimate(
            flops=3 * kernel_size * B * L * C,
            transcendentals=0,
            bytes_accessed=3 * B * L * C * itemsize,       # 1 read + 2 writes
        )
        x_flat = x.reshape(B, M)            # free for row-major (B, L, C)
        res, mean = pl.pallas_call(
            kernel,
            out_shape=(jax.ShapeDtypeStruct((B, M), x.dtype),
                       jax.ShapeDtypeStruct((B, M), x.dtype)),
            grid_spec=pltpu.PrefetchScalarGridSpec(
                num_scalar_prefetch=0,
                grid=(pl.cdiv(B, TB),),
                in_specs=[pl.BlockSpec((TB, M), lambda b: (b, 0))],
                out_specs=(pl.BlockSpec((TB, M), lambda b: (b, 0)),
                           pl.BlockSpec((TB, M), lambda b: (b, 0))),
            ),
            compiler_params=pltpu.CompilerParams(
                dimension_semantics=("parallel",),
                vmem_limit_bytes=vmem_limit),
            cost_estimate=cost,
        )(x_flat)
        return res.reshape(B, L, C), mean.reshape(B, L, C)

    # MXU path: banded (L, L) averaging matrix applied along the time axis.
    TB, TC = _choose_mxu_tiles(B, L, C, block_bytes_target)
    a_mat = _build_avg_matrix(L, kernel_size)
    cost = pl.CostEstimate(
        flops=2 * B * L * L * C + B * L * C,
        transcendentals=0,
        bytes_accessed=3 * B * L * C * itemsize + L * L * 4,
    )
    res, mean = pl.pallas_call(
        _series_decomp_mxu_kernel,
        out_shape=(jax.ShapeDtypeStruct((B, L, C), x.dtype),
                   jax.ShapeDtypeStruct((B, L, C), x.dtype)),
        grid_spec=pltpu.PrefetchScalarGridSpec(
            num_scalar_prefetch=0,
            grid=(pl.cdiv(B, TB), pl.cdiv(C, TC)),
            in_specs=[pl.BlockSpec((L, L), lambda i, j: (0, 0)),
                      pl.BlockSpec((TB, L, TC), lambda i, j: (i, 0, j))],
            out_specs=(pl.BlockSpec((TB, L, TC), lambda i, j: (i, 0, j)),
                       pl.BlockSpec((TB, L, TC), lambda i, j: (i, 0, j))),
        ),
        compiler_params=pltpu.CompilerParams(
            dimension_semantics=("parallel", "parallel"),
            vmem_limit_bytes=vmem_limit),
        cost_estimate=cost,
    )(a_mat, x)
    return res, mean


# ---------------------------------------------------------------------------
# Pure-JAX reference + self-test
# ---------------------------------------------------------------------------
def _series_decomp_ref(x, kernel_size):
    """Pure-JAX reference matching the PyTorch module."""
    pad = (kernel_size - 1) // 2
    L = x.shape[1]
    xpad = jnp.concatenate(
        [jnp.repeat(x[:, :1, :], pad, axis=1),
         x,
         jnp.repeat(x[:, -1:, :], pad, axis=1)], axis=1).astype(jnp.float32)
    windows = jnp.stack([xpad[:, j:j + L, :] for j in range(kernel_size)], axis=0)
    mean = windows.mean(axis=0).astype(x.dtype)
    return x - mean, mean


if __name__ == "__main__":
    key = jax.random.PRNGKey(0)

    # (B, L, C, kernel_size, block_bytes_target).  Cases cover:
    #   0: ZLinear-typical flat lane-roll path (C=16, K=25, M=1536 lanes).
    #   1: flat path with batch tiling and a partial last block (TB=8, B=20).
    #   2: MXU path with 128-multiple channels (lane-dense matmul path).
    #   3: MXU fallback for small, non-lane-aligned C (ETT-style C=7).
    cases = [
        (2, 96, 16, 25, None),
        (20, 8, 16, 3, 4 * 1024),
        (2, 16, 256, 5, None),
        (3, 24, 7, 7, None),
    ]
    for i, (B, L, C, K, tgt) in enumerate(cases):
        key, sub = jax.random.split(key)
        x = jax.random.normal(sub, (B, L, C), dtype=jnp.float32)

        res, mean = series_decomp(x, K, block_bytes_target=tgt)
        res = jax.block_until_ready(res)
        mean = jax.block_until_ready(mean)

        res_ref, mean_ref = _series_decomp_ref(x, K)
        assert jnp.allclose(mean, mean_ref, atol=1e-5, rtol=1e-5), f"mean mismatch (case {i})"
        assert jnp.allclose(res, res_ref, atol=1e-5, rtol=1e-5), f"res mismatch (case {i})"

    print("KERNEL_OK")
</pallas_src>

<mosaic_0001>
module attributes {stable_mosaic.version = 11 : i64} {
  func.func @_series_decomp_flat_kernel(%arg0: i32, %arg1: memref<2x1536xf32, #tpu.memory_space<vmem>>, %arg2: memref<2x1536xf32, #tpu.memory_space<vmem>>, %arg3: memref<2x1536xf32, #tpu.memory_space<vmem>>) attributes {dimension_semantics = [#tpu.dimension_semantics<parallel>], iteration_bounds = array<i64: 1>, scalar_prefetch = 0 : i64, scratch_operands = 0 : i64, tpu.core_type = #tpu.core_type<tc>, window_params = [{transform_indices = @transform_0, window_bounds = array<i64: 2, 1536>}, {transform_indices = @transform_1, window_bounds = array<i64: 2, 1536>}, {transform_indices = @transform_2, window_bounds = array<i64: 2, 1536>}]} {
    %c0 = arith.constant 0 : index
    %c0_0 = arith.constant 0 : index
    %0 = vector.load %arg1[%c0, %c0_0] : memref<2x1536xf32, #tpu.memory_space<vmem>>, vector<2x1536xf32>
    %1 = tpu.iota {dimensions = array<i32: 1>} : vector<1x1536xi32>
    %c1520_i32 = arith.constant 1520 : i32
    %2 = tpu.dynamic_rotate %0 by %c1520_i32 dim 1 : vector<2x1536xf32>, i32 -> vector<2x1536xf32>
    %c1520_i32_1 = arith.constant 1520 : i32
    %3 = vector.broadcast %c1520_i32_1 : i32 to vector<1x1536xi32>
    %4 = arith.cmpi slt, %1, %3 : vector<1x1536xi32>
    %cst = arith.constant 0.000000e+00 : f32
    %5 = vector.shape_cast %4 : vector<1x1536xi1> to vector<1x1536xi1>
    %6 = vector.broadcast %5 : vector<1x1536xi1> to vector<2x1536xi1>
    %7 = vector.broadcast %cst : f32 to vector<2x1536xf32>
    %8 = arith.select %6, %2, %7 : vector<2x1536xi1>, vector<2x1536xf32>
    %9 = arith.addf %0, %8 : vector<2x1536xf32>
    %c16_i32 = arith.constant 16 : i32
    %10 = tpu.dynamic_rotate %0 by %c16_i32 dim 1 : vector<2x1536xf32>, i32 -> vector<2x1536xf32>
    %c16_i32_2 = arith.constant 16 : i32
    %11 = vector.broadcast %c16_i32_2 : i32 to vector<1x1536xi32>
    %12 = arith.cmpi sge, %1, %11 : vector<1x1536xi32>
    %cst_3 = arith.constant 0.000000e+00 : f32
    %13 = vector.shape_cast %12 : vector<1x1536xi1> to vector<1x1536xi1>
    %14 = vector.broadcast %13 : vector<1x1536xi1> to vector<2x1536xi1>
    %15 = vector.broadcast %cst_3 : f32 to vector<2x1536xf32>
    %16 = arith.select %14, %10, %15 : vector<2x1536xi1>, vector<2x1536xf32>
    %17 = arith.addf %9, %16 : vector<2x1536xf32>
    %c1504_i32 = arith.constant 1504 : i32
    %18 = tpu.dynamic_rotate %0 by %c1504_i32 dim 1 : vector<2x1536xf32>, i32 -> vector<2x1536xf32>
    %c1504_i32_4 = arith.constant 1504 : i32
    %19 = vector.broadcast %c1504_i32_4 : i32 to vector<1x1536xi32>
    %20 = arith.cmpi slt, %1, %19 : vector<1x1536xi32>
    %cst_5 = arith.constant 0.000000e+00 : f32
    %21 = vector.shape_cast %20 : vector<1x1536xi1> to vector<1x1536xi1>
    %22 = vector.broadcast %21 : vector<1x1536xi1> to vector<2x1536xi1>
    %23 = vector.broadcast %cst_5 : f32 to vector<2x1536xf32>
    %24 = arith.select %22, %18, %23 : vector<2x1536xi1>, vector<2x1536xf32>
    %25 = arith.addf %17, %24 : vector<2x1536xf32>
    %c32_i32 = arith.constant 32 : i32
    %26 = tpu.dynamic_rotate %0 by %c32_i32 dim 1 : vector<2x1536xf32>, i32 -> vector<2x1536xf32>
    %c32_i32_6 = arith.constant 32 : i32
    %27 = vector.broadcast %c32_i32_6 : i32 to vector<1x1536xi32>
    %28 = arith.cmpi sge, %1, %27 : vector<1x1536xi32>
    %cst_7 = arith.constant 0.000000e+00 : f32
    %29 = vector.shape_cast %28 : vector<1x1536xi1> to vector<1x1536xi1>
    %30 = vector.broadcast %29 : vector<1x1536xi1> to vector<2x1536xi1>
    %31 = vector.broadcast %cst_7 : f32 to vector<2x1536xf32>
    %32 = arith.select %30, %26, %31 : vector<2x1536xi1>, vector<2x1536xf32>
    %33 = arith.addf %25, %32 : vector<2x1536xf32>
    %c1488_i32 = arith.constant 1488 : i32
    %34 = tpu.dynamic_rotate %0 by %c1488_i32 dim 1 : vector<2x1536xf32>, i32 -> vector<2x1536xf32>
    %c1488_i32_8 = arith.constant 1488 : i32
    %35 = vector.broadcast %c1488_i32_8 : i32 to vector<1x1536xi32>
    %36 = arith.cmpi slt, %1, %35 : vector<1x1536xi32>
    %cst_9 = arith.constant 0.000000e+00 : f32
    %37 = vector.shape_cast %36 : vector<1x1536xi1> to vector<1x1536xi1>
    %38 = vector.broadcast %37 : vector<1x1536xi1> to vector<2x1536xi1>
    %39 = vector.broadcast %cst_9 : f32 to vector<2x1536xf32>
    %40 = arith.select %38, %34, %39 : vector<2x1536xi1>, vector<2x1536xf32>
    %41 = arith.addf %33, %40 : vector<2x1536xf32>
    %c48_i32 = arith.constant 48 : i32
    %42 = tpu.dynamic_rotate %0 by %c48_i32 dim 1 : vector<2x1536xf32>, i32 -> vector<2x1536xf32>
    %c48_i32_10 = arith.constant 48 : i32
    %43 = vector.broadcast %c48_i32_10 : i32 to vector<1x1536xi32>
    %44 = arith.cmpi sge, %1, %43 : vector<1x1536xi32>
    %cst_11 = arith.constant 0.000000e+00 : f32
    %45 = vector.shape_cast %44 : vector<1x1536xi1> to vector<1x1536xi1>
    %46 = vector.broadcast %45 : vector<1x1536xi1> to vector<2x1536xi1>
    %47 = vector.broadcast %cst_11 : f32 to vector<2x1536xf32>
    %48 = arith.select %46, %42, %47 : vector<2x1536xi1>, vector<2x1536xf32>
    %49 = arith.addf %41, %48 : vector<2x1536xf32>
    %c1472_i32 = arith.constant 1472 : i32
    %50 = tpu.dynamic_rotate %0 by %c1472_i32 dim 1 : vector<2x1536xf32>, i32 -> vector<2x1536xf32>
    %c1472_i32_12 = arith.constant 1472 : i32
    %51 = vector.broadcast %c1472_i32_12 : i32 to vector<1x1536xi32>
    %52 = arith.cmpi slt, %1, %51 : vector<1x1536xi32>
    %cst_13 = arith.constant 0.000000e+00 : f32
    %53 = vector.shape_cast %52 : vector<1x1536xi1> to vector<1x1536xi1>
    %54 = vector.broadcast %53 : vector<1x1536xi1> to vector<2x1536xi1>
    %55 = vector.broadcast %cst_13 : f32 to vector<2x1536xf32>
    %56 = arith.select %54, %50, %55 : vector<2x1536xi1>, vector<2x1536xf32>
    %57 = arith.addf %49, %56 : vector<2x1536xf32>
    %c64_i32 = arith.constant 64 : i32
    %58 = tpu.dynamic_rotate %0 by %c64_i32 dim 1 : vector<2x1536xf32>, i32 -> vector<2x1536xf32>
    %c64_i32_14 = arith.constant 64 : i32
    %59 = vector.broadcast %c64_i32_14 : i32 to vector<1x1536xi32>
    %60 = arith.cmpi sge, %1, %59 : vector<1x1536xi32>
    %cst_15 = arith.constant 0.000000e+00 : f32
    %61 = vector.shape_cast %60 : vector<1x1536xi1> to vector<1x1536xi1>
    %62 = vector.broadcast %61 : vector<1x1536xi1> to vector<2x1536xi1>
    %63 = vector.broadcast %cst_15 : f32 to vector<2x1536xf32>
    %64 = arith.select %62, %58, %63 : vector<2x1536xi1>, vector<2x1536xf32>
    %65 = arith.addf %57, %64 : vector<2x1536xf32>
    %c1456_i32 = arith.constant 1456 : i32
    %66 = tpu.dynamic_rotate %0 by %c1456_i32 dim 1 : vector<2x1536xf32>, i32 -> vector<2x1536xf32>
    %c1456_i32_16 = arith.constant 1456 : i32
    %67 = vector.broadcast %c1456_i32_16 : i32 to vector<1x1536xi32>
    %68 = arith.cmpi slt, %1, %67 : vector<1x1536xi32>
    %cst_17 = arith.constant 0.000000e+00 : f32
    %69 = vector.shape_cast %68 : vector<1x1536xi1> to vector<1x1536xi1>
    %70 = vector.broadcast %69 : vector<1x1536xi1> to vector<2x1536xi1>
    %71 = vector.broadcast %cst_17 : f32 to vector<2x1536xf32>
    %72 = arith.select %70, %66, %71 : vector<2x1536xi1>, vector<2x1536xf32>
    %73 = arith.addf %65, %72 : vector<2x1536xf32>
    %c80_i32 = arith.constant 80 : i32
    %74 = tpu.dynamic_rotate %0 by %c80_i32 dim 1 : vector<2x1536xf32>, i32 -> vector<2x1536xf32>
    %c80_i32_18 = arith.constant 80 : i32
    %75 = vector.broadcast %c80_i32_18 : i32 to vector<1x1536xi32>
    %76 = arith.cmpi sge, %1, %75 : vector<1x1536xi32>
    %cst_19 = arith.constant 0.000000e+00 : f32
    %77 = vector.shape_cast %76 : vector<1x1536xi1> to vector<1x1536xi1>
    %78 = vector.broadcast %77 : vector<1x1536xi1> to vector<2x1536xi1>
    %79 = vector.broadcast %cst_19 : f32 to vector<2x1536xf32>
    %80 = arith.select %78, %74, %79 : vector<2x1536xi1>, vector<2x1536xf32>
    %81 = arith.addf %73, %80 : vector<2x1536xf32>
    %c1440_i32 = arith.constant 1440 : i32
    %82 = tpu.dynamic_rotate %0 by %c1440_i32 dim 1 : vector<2x1536xf32>, i32 -> vector<2x1536xf32>
    %c1440_i32_20 = arith.constant 1440 : i32
    %83 = vector.broadcast %c1440_i32_20 : i32 to vector<1x1536xi32>
    %84 = arith.cmpi slt, %1, %83 : vector<1x1536xi32>
    %cst_21 = arith.constant 0.000000e+00 : f32
    %85 = vector.shape_cast %84 : vector<1x1536xi1> to vector<1x1536xi1>
    %86 = vector.broadcast %85 : vector<1x1536xi1> to vector<2x1536xi1>
    %87 = vector.broadcast %cst_21 : f32 to vector<2x1536xf32>
    %88 = arith.select %86, %82, %87 : vector<2x1536xi1>, vector<2x1536xf32>
    %89 = arith.addf %81, %88 : vector<2x1536xf32>
    %c96_i32 = arith.constant 96 : i32
    %90 = tpu.dynamic_rotate %0 by %c96_i32 dim 1 : vector<2x1536xf32>, i32 -> vector<2x1536xf32>
    %c96_i32_22 = arith.constant 96 : i32
    %91 = vector.broadcast %c96_i32_22 : i32 to vector<1x1536xi32>
    %92 = arith.cmpi sge, %1, %91 : vector<1x1536xi32>
    %cst_23 = arith.constant 0.000000e+00 : f32
    %93 = vector.shape_cast %92 : vector<1x1536xi1> to vector<1x1536xi1>
    %94 = vector.broadcast %93 : vector<1x1536xi1> to vector<2x1536xi1>
    %95 = vector.broadcast %cst_23 : f32 to vector<2x1536xf32>
    %96 = arith.select %94, %90, %95 : vector<2x1536xi1>, vector<2x1536xf32>
    %97 = arith.addf %89, %96 : vector<2x1536xf32>
    %c1424_i32 = arith.constant 1424 : i32
    %98 = tpu.dynamic_rotate %0 by %c1424_i32 dim 1 : vector<2x1536xf32>, i32 -> vector<2x1536xf32>
    %c1424_i32_24 = arith.constant 1424 : i32
    %99 = vector.broadcast %c1424_i32_24 : i32 to vector<1x1536xi32>
    %100 = arith.cmpi slt, %1, %99 : vector<1x1536xi32>
    %cst_25 = arith.constant 0.000000e+00 : f32
    %101 = vector.shape_cast %100 : vector<1x1536xi1> to vector<1x1536xi1>
    %102 = vector.broadcast %101 : vector<1x1536xi1> to vector<2x1536xi1>
    %103 = vector.broadcast %cst_25 : f32 to vector<2x1536xf32>
    %104 = arith.select %102, %98, %103 : vector<2x1536xi1>, vector<2x1536xf32>
    %105 = arith.addf %97, %104 : vector<2x1536xf32>
    %c112_i32 = arith.constant 112 : i32
    %106 = tpu.dynamic_rotate %0 by %c112_i32 dim 1 : vector<2x1536xf32>, i32 -> vector<2x1536xf32>
    %c112_i32_26 = arith.constant 112 : i32
    %107 = vector.broadcast %c112_i32_26 : i32 to vector<1x1536xi32>
    %108 = arith.cmpi sge, %1, %107 : vector<1x1536xi32>
    %cst_27 = arith.constant 0.000000e+00 : f32
    %109 = vector.shape_cast %108 : vector<1x1536xi1> to vector<1x1536xi1>
    %110 = vector.broadcast %109 : vector<1x1536xi1> to vector<2x1536xi1>
    %111 = vector.broadcast %cst_27 : f32 to vector<2x1536xf32>
    %112 = arith.select %110, %106, %111 : vector<2x1536xi1>, vector<2x1536xf32>
    %113 = arith.addf %105, %112 : vector<2x1536xf32>
    %c1408_i32 = arith.constant 1408 : i32
    %114 = tpu.dynamic_rotate %0 by %c1408_i32 dim 1 : vector<2x1536xf32>, i32 -> vector<2x1536xf32>
    %c1408_i32_28 = arith.constant 1408 : i32
    %115 = vector.broadcast %c1408_i32_28 : i32 to vector<1x1536xi32>
    %116 = arith.cmpi slt, %1, %115 : vector<1x1536xi32>
    %cst_29 = arith.constant 0.000000e+00 : f32
    %117 = vector.shape_cast %116 : vector<1x1536xi1> to vector<1x1536xi1>
    %118 = vector.broadcast %117 : vector<1x1536xi1> to vector<2x1536xi1>
    %119 = vector.broadcast %cst_29 : f32 to vector<2x1536xf32>
    %120 = arith.select %118, %114, %119 : vector<2x1536xi1>, vector<2x1536xf32>
    %121 = arith.addf %113, %120 : vector<2x1536xf32>
    %c128_i32 = arith.constant 128 : i32
    %122 = tpu.dynamic_rotate %0 by %c128_i32 dim 1 : vector<2x1536xf32>, i32 -> vector<2x1536xf32>
    %c128_i32_30 = arith.constant 128 : i32
    %123 = vector.broadcast %c128_i32_30 : i32 to vector<1x1536xi32>
    %124 = arith.cmpi sge, %1, %123 : vector<1x1536xi32>
    %cst_31 = arith.constant 0.000000e+00 : f32
    %125 = vector.shape_cast %124 : vector<1x1536xi1> to vector<1x1536xi1>
    %126 = vector.broadcast %125 : vector<1x1536xi1> to vector<2x1536xi1>
    %127 = vector.broadcast %cst_31 : f32 to vector<2x1536xf32>
    %128 = arith.select %126, %122, %127 : vector<2x1536xi1>, vector<2x1536xf32>
    %129 = arith.addf %121, %128 : vector<2x1536xf32>
    %c1392_i32 = arith.constant 1392 : i32
    %130 = tpu.dynamic_rotate %0 by %c1392_i32 dim 1 : vector<2x1536xf32>, i32 -> vector<2x1536xf32>
    %c1392_i32_32 = arith.constant 1392 : i32
    %131 = vector.broadcast %c1392_i32_32 : i32 to vector<1x1536xi32>
    %132 = arith.cmpi slt, %1, %131 : vector<1x1536xi32>
    %cst_33 = arith.constant 0.000000e+00 : f32
    %133 = vector.shape_cast %132 : vector<1x1536xi1> to vector<1x1536xi1>
    %134 = vector.broadcast %133 : vector<1x1536xi1> to vector<2x1536xi1>
    %135 = vector.broadcast %cst_33 : f32 to vector<2x1536xf32>
    %136 = arith.select %134, %130, %135 : vector<2x1536xi1>, vector<2x1536xf32>
    %137 = arith.addf %129, %136 : vector<2x1536xf32>
    %c144_i32 = arith.constant 144 : i32
    %138 = tpu.dynamic_rotate %0 by %c144_i32 dim 1 : vector<2x1536xf32>, i32 -> vector<2x1536xf32>
    %c144_i32_34 = arith.constant 144 : i32
    %139 = vector.broadcast %c144_i32_34 : i32 to vector<1x1536xi32>
    %140 = arith.cmpi sge, %1, %139 : vector<1x1536xi32>
    %cst_35 = arith.constant 0.000000e+00 : f32
    %141 = vector.shape_cast %140 : vector<1x1536xi1> to vector<1x1536xi1>
    %142 = vector.broadcast %141 : vector<1x1536xi1> to vector<2x1536xi1>
    %143 = vector.broadcast %cst_35 : f32 to vector<2x1536xf32>
    %144 = arith.select %142, %138, %143 : vector<2x1536xi1>, vector<2x1536xf32>
    %145 = arith.addf %137, %144 : vector<2x1536xf32>
    %c1376_i32 = arith.constant 1376 : i32
    %146 = tpu.dynamic_rotate %0 by %c1376_i32 dim 1 : vector<2x1536xf32>, i32 -> vector<2x1536xf32>
    %c1376_i32_36 = arith.constant 1376 : i32
    %147 = vector.broadcast %c1376_i32_36 : i32 to vector<1x1536xi32>
    %148 = arith.cmpi slt, %1, %147 : vector<1x1536xi32>
    %cst_37 = arith.constant 0.000000e+00 : f32
    %149 = vector.shape_cast %148 : vector<1x1536xi1> to vector<1x1536xi1>
    %150 = vector.broadcast %149 : vector<1x1536xi1> to vector<2x1536xi1>
    %151 = vector.broadcast %cst_37 : f32 to vector<2x1536xf32>
    %152 = arith.select %150, %146, %151 : vector<2x1536xi1>, vector<2x1536xf32>
    %153 = arith.addf %145, %152 : vector<2x1536xf32>
    %c160_i32 = arith.constant 160 : i32
    %154 = tpu.dynamic_rotate %0 by %c160_i32 dim 1 : vector<2x1536xf32>, i32 -> vector<2x1536xf32>
    %c160_i32_38 = arith.constant 160 : i32
    %155 = vector.broadcast %c160_i32_38 : i32 to vector<1x1536xi32>
    %156 = arith.cmpi sge, %1, %155 : vector<1x1536xi32>
    %cst_39 = arith.constant 0.000000e+00 : f32
    %157 = vector.shape_cast %156 : vector<1x1536xi1> to vector<1x1536xi1>
    %158 = vector.broadcast %157 : vector<1x1536xi1> to vector<2x1536xi1>
    %159 = vector.broadcast %cst_39 : f32 to vector<2x1536xf32>
    %160 = arith.select %158, %154, %159 : vector<2x1536xi1>, vector<2x1536xf32>
    %161 = arith.addf %153, %160 : vector<2x1536xf32>
    %c1360_i32 = arith.constant 1360 : i32
    %162 = tpu.dynamic_rotate %0 by %c1360_i32 dim 1 : vector<2x1536xf32>, i32 -> vector<2x1536xf32>
    %c1360_i32_40 = arith.constant 1360 : i32
    %163 = vector.broadcast %c1360_i32_40 : i32 to vector<1x1536xi32>
    %164 = arith.cmpi slt, %1, %163 : vector<1x1536xi32>
    %cst_41 = arith.constant 0.000000e+00 : f32
    %165 = vector.shape_cast %164 : vector<1x1536xi1> to vector<1x1536xi1>
    %166 = vector.broadcast %165 : vector<1x1536xi1> to vector<2x1536xi1>
    %167 = vector.broadcast %cst_41 : f32 to vector<2x1536xf32>
    %168 = arith.select %166, %162, %167 : vector<2x1536xi1>, vector<2x1536xf32>
    %169 = arith.addf %161, %168 : vector<2x1536xf32>
    %c176_i32 = arith.constant 176 : i32
    %170 = tpu.dynamic_rotate %0 by %c176_i32 dim 1 : vector<2x1536xf32>, i32 -> vector<2x1536xf32>
    %c176_i32_42 = arith.constant 176 : i32
    %171 = vector.broadcast %c176_i32_42 : i32 to vector<1x1536xi32>
    %172 = arith.cmpi sge, %1, %171 : vector<1x1536xi32>
    %cst_43 = arith.constant 0.000000e+00 : f32
    %173 = vector.shape_cast %172 : vector<1x1536xi1> to vector<1x1536xi1>
    %174 = vector.broadcast %173 : vector<1x1536xi1> to vector<2x1536xi1>
    %175 = vector.broadcast %cst_43 : f32 to vector<2x1536xf32>
    %176 = arith.select %174, %170, %175 : vector<2x1536xi1>, vector<2x1536xf32>
    %177 = arith.addf %169, %176 : vector<2x1536xf32>
    %c1344_i32 = arith.constant 1344 : i32
    %178 = tpu.dynamic_rotate %0 by %c1344_i32 dim 1 : vector<2x1536xf32>, i32 -> vector<2x1536xf32>
    %c1344_i32_44 = arith.constant 1344 : i32
    %179 = vector.broadcast %c1344_i32_44 : i32 to vector<1x1536xi32>
    %180 = arith.cmpi slt, %1, %179 : vector<1x1536xi32>
    %cst_45 = arith.constant 0.000000e+00 : f32
    %181 = vector.shape_cast %180 : vector<1x1536xi1> to vector<1x1536xi1>
    %182 = vector.broadcast %181 : vector<1x1536xi1> to vector<2x1536xi1>
    %183 = vector.broadcast %cst_45 : f32 to vector<2x1536xf32>
    %184 = arith.select %182, %178, %183 : vector<2x1536xi1>, vector<2x1536xf32>
    %185 = arith.addf %177, %184 : vector<2x1536xf32>
    %c192_i32 = arith.constant 192 : i32
    %186 = tpu.dynamic_rotate %0 by %c192_i32 dim 1 : vector<2x1536xf32>, i32 -> vector<2x1536xf32>
    %c192_i32_46 = arith.constant 192 : i32
    %187 = vector.broadcast %c192_i32_46 : i32 to vector<1x1536xi32>
    %188 = arith.cmpi sge, %1, %187 : vector<1x1536xi32>
    %cst_47 = arith.constant 0.000000e+00 : f32
    %189 = vector.shape_cast %188 : vector<1x1536xi1> to vector<1x1536xi1>
    %190 = vector.broadcast %189 : vector<1x1536xi1> to vector<2x1536xi1>
    %191 = vector.broadcast %cst_47 : f32 to vector<2x1536xf32>
    %192 = arith.select %190, %186, %191 : vector<2x1536xi1>, vector<2x1536xf32>
    %193 = arith.addf %185, %192 : vector<2x1536xf32>
    %c16_i32_48 = arith.constant 16 : i32
    %194 = vector.broadcast %c16_i32_48 : i32 to vector<1x1536xi32>
    %195 = arith.cmpi slt, %1, %194 : vector<1x1536xi32>
    %c16_i32_49 = arith.constant 16 : i32
    %196 = tpu.dynamic_rotate %0 by %c16_i32_49 dim 1 : vector<2x1536xf32>, i32 -> vector<2x1536xf32>
    %197 = vector.shape_cast %195 : vector<1x1536xi1> to vector<1x1536xi1>
    %198 = vector.broadcast %197 : vector<1x1536xi1> to vector<2x1536xi1>
    %199 = arith.select %198, %0, %196 : vector<2x1536xi1>, vector<2x1536xf32>
    %c1520_i32_50 = arith.constant 1520 : i32
    %200 = vector.broadcast %c1520_i32_50 : i32 to vector<1x1536xi32>
    %201 = arith.cmpi sge, %1, %200 : vector<1x1536xi32>
    %c1520_i32_51 = arith.constant 1520 : i32
    %202 = tpu.dynamic_rotate %0 by %c1520_i32_51 dim 1 : vector<2x1536xf32>, i32 -> vector<2x1536xf32>
    %203 = vector.shape_cast %201 : vector<1x1536xi1> to vector<1x1536xi1>
    %204 = vector.broadcast %203 : vector<1x1536xi1> to vector<2x1536xi1>
    %205 = arith.select %204, %0, %202 : vector<2x1536xi1>, vector<2x1536xf32>
    %c32_i32_52 = arith.constant 32 : i32
    %206 = vector.broadcast %c32_i32_52 : i32 to vector<1x1536xi32>
    %207 = arith.cmpi slt, %1, %206 : vector<1x1536xi32>
    %c32_i32_53 = arith.constant 32 : i32
    %208 = tpu.dynamic_rotate %199 by %c32_i32_53 dim 1 : vector<2x1536xf32>, i32 -> vector<2x1536xf32>
    %209 = vector.shape_cast %207 : vector<1x1536xi1> to vector<1x1536xi1>
    %210 = vector.broadcast %209 : vector<1x1536xi1> to vector<2x1536xi1>
    %211 = arith.select %210, %199, %208 : vector<2x1536xi1>, vector<2x1536xf32>
    %c1504_i32_54 = arith.constant 1504 : i32
    %212 = vector.broadcast %c1504_i32_54 : i32 to vector<1x1536xi32>
    %213 = arith.cmpi sge, %1, %212 : vector<1x1536xi32>
    %c1504_i32_55 = arith.constant 1504 : i32
    %214 = tpu.dynamic_rotate %205 by %c1504_i32_55 dim 1 : vector<2x1536xf32>, i32 -> vector<2x1536xf32>
    %215 = vector.shape_cast %213 : vector<1x1536xi1> to vector<1x1536xi1>
    %216 = vector.broadcast %215 : vector<1x1536xi1> to vector<2x1536xi1>
    %217 = arith.select %216, %205, %214 : vector<2x1536xi1>, vector<2x1536xf32>
    %c64_i32_56 = arith.constant 64 : i32
    %218 = vector.broadcast %c64_i32_56 : i32 to vector<1x1536xi32>
    %219 = arith.cmpi slt, %1, %218 : vector<1x1536xi32>
    %c64_i32_57 = arith.constant 64 : i32
    %220 = tpu.dynamic_rotate %211 by %c64_i32_57 dim 1 : vector<2x1536xf32>, i32 -> vector<2x1536xf32>
    %221 = vector.shape_cast %219 : vector<1x1536xi1> to vector<1x1536xi1>
    %222 = vector.broadcast %221 : vector<1x1536xi1> to vector<2x1536xi1>
    %223 = arith.select %222, %211, %220 : vector<2x1536xi1>, vector<2x1536xf32>
    %c1472_i32_58 = arith.constant 1472 : i32
    %224 = vector.broadcast %c1472_i32_58 : i32 to vector<1x1536xi32>
    %225 = arith.cmpi sge, %1, %224 : vector<1x1536xi32>
    %c1472_i32_59 = arith.constant 1472 : i32
    %226 = tpu.dynamic_rotate %217 by %c1472_i32_59 dim 1 : vector<2x1536xf32>, i32 -> vector<2x1536xf32>
    %227 = vector.shape_cast %225 : vector<1x1536xi1> to vector<1x1536xi1>
    %228 = vector.broadcast %227 : vector<1x1536xi1> to vector<2x1536xi1>
    %229 = arith.select %228, %217, %226 : vector<2x1536xi1>, vector<2x1536xf32>
    %c128_i32_60 = arith.constant 128 : i32
    %230 = vector.broadcast %c128_i32_60 : i32 to vector<1x1536xi32>
    %231 = arith.cmpi slt, %1, %230 : vector<1x1536xi32>
    %c128_i32_61 = arith.constant 128 : i32
    %232 = tpu.dynamic_rotate %223 by %c128_i32_61 dim 1 : vector<2x1536xf32>, i32 -> vector<2x1536xf32>
    %233 = vector.shape_cast %231 : vector<1x1536xi1> to vector<1x1536xi1>
    %234 = vector.broadcast %233 : vector<1x1536xi1> to vector<2x1536xi1>
    %235 = arith.select %234, %223, %232 : vector<2x1536xi1>, vector<2x1536xf32>
    %c1408_i32_62 = arith.constant 1408 : i32
    %236 = vector.broadcast %c1408_i32_62 : i32 to vector<1x1536xi32>
    %237 = arith.cmpi sge, %1, %236 : vector<1x1536xi32>
    %c1408_i32_63 = arith.constant 1408 : i32
    %238 = tpu.dynamic_rotate %229 by %c1408_i32_63 dim 1 : vector<2x1536xf32>, i32 -> vector<2x1536xf32>
    %239 = vector.shape_cast %237 : vector<1x1536xi1> to vector<1x1536xi1>
    %240 = vector.broadcast %239 : vector<1x1536xi1> to vector<2x1536xi1>
    %241 = arith.select %240, %229, %238 : vector<2x1536xi1>, vector<2x1536xf32>
    %cst_64 = arith.constant 0.000000e+00 : f32
    %242 = vector.broadcast %cst_64 : f32 to vector<1x1536xf32>
    %cst_65 = arith.constant 0.000000e+00 : f32
    %243 = vector.broadcast %cst_65 : f32 to vector<1x1536xf32>
    %c16_i32_66 = arith.constant 16 : i32
    %244 = vector.broadcast %c16_i32_66 : i32 to vector<1x1536xi32>
    %245 = arith.cmpi slt, %1, %244 : vector<1x1536xi32>
    %cst_67 = arith.constant 1.000000e+00 : f32
    %cst_68 = arith.constant 0.000000e+00 : f32
    %246 = vector.broadcast %cst_67 : f32 to vector<1x1536xf32>
    %247 = vector.broadcast %cst_68 : f32 to vector<1x1536xf32>
    %248 = arith.select %245, %246, %247 : vector<1x1536xi1>, vector<1x1536xf32>
    %249 = arith.addf %242, %248 : vector<1x1536xf32>
    %c1520_i32_69 = arith.constant 1520 : i32
    %250 = vector.broadcast %c1520_i32_69 : i32 to vector<1x1536xi32>
    %251 = arith.cmpi sge, %1, %250 : vector<1x1536xi32>
    %cst_70 = arith.constant 1.000000e+00 : f32
    %cst_71 = arith.constant 0.000000e+00 : f32
    %252 = vector.broadcast %cst_70 : f32 to vector<1x1536xf32>
    %253 = vector.broadcast %cst_71 : f32 to vector<1x1536xf32>
    %254 = arith.select %251, %252, %253 : vector<1x1536xi1>, vector<1x1536xf32>
    %255 = arith.addf %243, %254 : vector<1x1536xf32>
    %c32_i32_72 = arith.constant 32 : i32
    %256 = vector.broadcast %c32_i32_72 : i32 to vector<1x1536xi32>
    %257 = arith.cmpi slt, %1, %256 : vector<1x1536xi32>
    %cst_73 = arith.constant 1.000000e+00 : f32
    %cst_74 = arith.constant 0.000000e+00 : f32
    %258 = vector.broadcast %cst_73 : f32 to vector<1x1536xf32>
    %259 = vector.broadcast %cst_74 : f32 to vector<1x1536xf32>
    %260 = arith.select %257, %258, %259 : vector<1x1536xi1>, vector<1x1536xf32>
    %261 = arith.addf %249, %260 : vector<1x1536xf32>
    %c1504_i32_75 = arith.constant 1504 : i32
    %262 = vector.broadcast %c1504_i32_75 : i32 to vector<1x1536xi32>
    %263 = arith.cmpi sge, %1, %262 : vector<1x1536xi32>
    %cst_76 = arith.constant 1.000000e+00 : f32
    %cst_77 = arith.constant 0.000000e+00 : f32
    %264 = vector.broadcast %cst_76 : f32 to vector<1x1536xf32>
    %265 = vector.broadcast %cst_77 : f32 to vector<1x1536xf32>
    %266 = arith.select %263, %264, %265 : vector<1x1536xi1>, vector<1x1536xf32>
    %267 = arith.addf %255, %266 : vector<1x1536xf32>
    %c48_i32_78 = arith.constant 48 : i32
    %268 = vector.broadcast %c48_i32_78 : i32 to vector<1x1536xi32>
    %269 = arith.cmpi slt, %1, %268 : vector<1x1536xi32>
    %cst_79 = arith.constant 1.000000e+00 : f32
    %cst_80 = arith.constant 0.000000e+00 : f32
    %270 = vector.broadcast %cst_79 : f32 to vector<1x1536xf32>
    %271 = vector.broadcast %cst_80 : f32 to vector<1x1536xf32>
    %272 = arith.select %269, %270, %271 : vector<1x1536xi1>, vector<1x1536xf32>
    %273 = arith.addf %261, %272 : vector<1x1536xf32>
    %c1488_i32_81 = arith.constant 1488 : i32
    %274 = vector.broadcast %c1488_i32_81 : i32 to vector<1x1536xi32>
    %275 = arith.cmpi sge, %1, %274 : vector<1x1536xi32>
    %cst_82 = arith.constant 1.000000e+00 : f32
    %cst_83 = arith.constant 0.000000e+00 : f32
    %276 = vector.broadcast %cst_82 : f32 to vector<1x1536xf32>
    %277 = vector.broadcast %cst_83 : f32 to vector<1x1536xf32>
    %278 = arith.select %275, %276, %277 : vector<1x1536xi1>, vector<1x1536xf32>
    %279 = arith.addf %267, %278 : vector<1x1536xf32>
    %c64_i32_84 = arith.constant 64 : i32
    %280 = vector.broadcast %c64_i32_84 : i32 to vector<1x1536xi32>
    %281 = arith.cmpi slt, %1, %280 : vector<1x1536xi32>
    %cst_85 = arith.constant 1.000000e+00 : f32
    %cst_86 = arith.constant 0.000000e+00 : f32
    %282 = vector.broadcast %cst_85 : f32 to vector<1x1536xf32>
    %283 = vector.broadcast %cst_86 : f32 to vector<1x1536xf32>
    %284 = arith.select %281, %282, %283 : vector<1x1536xi1>, vector<1x1536xf32>
    %285 = arith.addf %273, %284 : vector<1x1536xf32>
    %c1472_i32_87 = arith.constant 1472 : i32
    %286 = vector.broadcast %c1472_i32_87 : i32 to vector<1x1536xi32>
    %287 = arith.cmpi sge, %1, %286 : vector<1x1536xi32>
    %cst_88 = arith.constant 1.000000e+00 : f32
    %cst_89 = arith.constant 0.000000e+00 : f32
    %288 = vector.broadcast %cst_88 : f32 to vector<1x1536xf32>
    %289 = vector.broadcast %cst_89 : f32 to vector<1x1536xf32>
    %290 = arith.select %287, %288, %289 : vector<1x1536xi1>, vector<1x1536xf32>
    %291 = arith.addf %279, %290 : vector<1x1536xf32>
    %c80_i32_90 = arith.constant 80 : i32
    %292 = vector.broadcast %c80_i32_90 : i32 to vector<1x1536xi32>
    %293 = arith.cmpi slt, %1, %292 : vector<1x1536xi32>
    %cst_91 = arith.constant 1.000000e+00 : f32
    %cst_92 = arith.constant 0.000000e+00 : f32
    %294 = vector.broadcast %cst_91 : f32 to vector<1x1536xf32>
    %295 = vector.broadcast %cst_92 : f32 to vector<1x1536xf32>
    %296 = arith.select %293, %294, %295 : vector<1x1536xi1>, vector<1x1536xf32>
    %297 = arith.addf %285, %296 : vector<1x1536xf32>
    %c1456_i32_93 = arith.constant 1456 : i32
    %298 = vector.broadcast %c1456_i32_93 : i32 to vector<1x1536xi32>
    %299 = arith.cmpi sge, %1, %298 : vector<1x1536xi32>
    %cst_94 = arith.constant 1.000000e+00 : f32
    %cst_95 = arith.constant 0.000000e+00 : f32
    %300 = vector.broadcast %cst_94 : f32 to vector<1x1536xf32>
    %301 = vector.broadcast %cst_95 : f32 to vector<1x1536xf32>
    %302 = arith.select %299, %300, %301 : vector<1x1536xi1>, vector<1x1536xf32>
    %303 = arith.addf %291, %302 : vector<1x1536xf32>
    %c96_i32_96 = arith.constant 96 : i32
    %304 = vector.broadcast %c96_i32_96 : i32 to vector<1x1536xi32>
    %305 = arith.cmpi slt, %1, %304 : vector<1x1536xi32>
    %cst_97 = arith.constant 1.000000e+00 : f32
    %cst_98 = arith.constant 0.000000e+00 : f32
    %306 = vector.broadcast %cst_97 : f32 to vector<1x1536xf32>
    %307 = vector.broadcast %cst_98 : f32 to vector<1x1536xf32>
    %308 = arith.select %305, %306, %307 : vector<1x1536xi1>, vector<1x1536xf32>
    %309 = arith.addf %297, %308 : vector<1x1536xf32>
    %c1440_i32_99 = arith.constant 1440 : i32
    %310 = vector.broadcast %c1440_i32_99 : i32 to vector<1x1536xi32>
    %311 = arith.cmpi sge, %1, %310 : vector<1x1536xi32>
    %cst_100 = arith.constant 1.000000e+00 : f32
    %cst_101 = arith.constant 0.000000e+00 : f32
    %312 = vector.broadcast %cst_100 : f32 to vector<1x1536xf32>
    %313 = vector.broadcast %cst_101 : f32 to vector<1x1536xf32>
    %314 = arith.select %311, %312, %313 : vector<1x1536xi1>, vector<1x1536xf32>
    %315 = arith.addf %303, %314 : vector<1x1536xf32>
    %c112_i32_102 = arith.constant 112 : i32
    %316 = vector.broadcast %c112_i32_102 : i32 to vector<1x1536xi32>
    %317 = arith.cmpi slt, %1, %316 : vector<1x1536xi32>
    %cst_103 = arith.constant 1.000000e+00 : f32
    %cst_104 = arith.constant 0.000000e+00 : f32
    %318 = vector.broadcast %cst_103 : f32 to vector<1x1536xf32>
    %319 = vector.broadcast %cst_104 : f32 to vector<1x1536xf32>
    %320 = arith.select %317, %318, %319 : vector<1x1536xi1>, vector<1x1536xf32>
    %321 = arith.addf %309, %320 : vector<1x1536xf32>
    %c1424_i32_105 = arith.constant 1424 : i32
    %322 = vector.broadcast %c1424_i32_105 : i32 to vector<1x1536xi32>
    %323 = arith.cmpi sge, %1, %322 : vector<1x1536xi32>
    %cst_106 = arith.constant 1.000000e+00 : f32
    %cst_107 = arith.constant 0.000000e+00 : f32
    %324 = vector.broadcast %cst_106 : f32 to vector<1x1536xf32>
    %325 = vector.broadcast %cst_107 : f32 to vector<1x1536xf32>
    %326 = arith.select %323, %324, %325 : vector<1x1536xi1>, vector<1x1536xf32>
    %327 = arith.addf %315, %326 : vector<1x1536xf32>
    %c128_i32_108 = arith.constant 128 : i32
    %328 = vector.broadcast %c128_i32_108 : i32 to vector<1x1536xi32>
    %329 = arith.cmpi slt, %1, %328 : vector<1x1536xi32>
    %cst_109 = arith.constant 1.000000e+00 : f32
    %cst_110 = arith.constant 0.000000e+00 : f32
    %330 = vector.broadcast %cst_109 : f32 to vector<1x1536xf32>
    %331 = vector.broadcast %cst_110 : f32 to vector<1x1536xf32>
    %332 = arith.select %329, %330, %331 : vector<1x1536xi1>, vector<1x1536xf32>
    %333 = arith.addf %321, %332 : vector<1x1536xf32>
    %c1408_i32_111 = arith.constant 1408 : i32
    %334 = vector.broadcast %c1408_i32_111 : i32 to vector<1x1536xi32>
    %335 = arith.cmpi sge, %1, %334 : vector<1x1536xi32>
    %cst_112 = arith.constant 1.000000e+00 : f32
    %cst_113 = arith.constant 0.000000e+00 : f32
    %336 = vector.broadcast %cst_112 : f32 to vector<1x1536xf32>
    %337 = vector.broadcast %cst_113 : f32 to vector<1x1536xf32>
    %338 = arith.select %335, %336, %337 : vector<1x1536xi1>, vector<1x1536xf32>
    %339 = arith.addf %327, %338 : vector<1x1536xf32>
    %c144_i32_114 = arith.constant 144 : i32
    %340 = vector.broadcast %c144_i32_114 : i32 to vector<1x1536xi32>
    %341 = arith.cmpi slt, %1, %340 : vector<1x1536xi32>
    %cst_115 = arith.constant 1.000000e+00 : f32
    %cst_116 = arith.constant 0.000000e+00 : f32
    %342 = vector.broadcast %cst_115 : f32 to vector<1x1536xf32>
    %343 = vector.broadcast %cst_116 : f32 to vector<1x1536xf32>
    %344 = arith.select %341, %342, %343 : vector<1x1536xi1>, vector<1x1536xf32>
    %345 = arith.addf %333, %344 : vector<1x1536xf32>
    %c1392_i32_117 = arith.constant 1392 : i32
    %346 = vector.broadcast %c1392_i32_117 : i32 to vector<1x1536xi32>
    %347 = arith.cmpi sge, %1, %346 : vector<1x1536xi32>
    %cst_118 = arith.constant 1.000000e+00 : f32
    %cst_119 = arith.constant 0.000000e+00 : f32
    %348 = vector.broadcast %cst_118 : f32 to vector<1x1536xf32>
    %349 = vector.broadcast %cst_119 : f32 to vector<1x1536xf32>
    %350 = arith.select %347, %348, %349 : vector<1x1536xi1>, vector<1x1536xf32>
    %351 = arith.addf %339, %350 : vector<1x1536xf32>
    %c160_i32_120 = arith.constant 160 : i32
    %352 = vector.broadcast %c160_i32_120 : i32 to vector<1x1536xi32>
    %353 = arith.cmpi slt, %1, %352 : vector<1x1536xi32>
    %cst_121 = arith.constant 1.000000e+00 : f32
    %cst_122 = arith.constant 0.000000e+00 : f32
    %354 = vector.broadcast %cst_121 : f32 to vector<1x1536xf32>
    %355 = vector.broadcast %cst_122 : f32 to vector<1x1536xf32>
    %356 = arith.select %353, %354, %355 : vector<1x1536xi1>, vector<1x1536xf32>
    %357 = arith.addf %345, %356 : vector<1x1536xf32>
    %c1376_i32_123 = arith.constant 1376 : i32
    %358 = vector.broadcast %c1376_i32_123 : i32 to vector<1x1536xi32>
    %359 = arith.cmpi sge, %1, %358 : vector<1x1536xi32>
    %cst_124 = arith.constant 1.000000e+00 : f32
    %cst_125 = arith.constant 0.000000e+00 : f32
    %360 = vector.broadcast %cst_124 : f32 to vector<1x1536xf32>
    %361 = vector.broadcast %cst_125 : f32 to vector<1x1536xf32>
    %362 = arith.select %359, %360, %361 : vector<1x1536xi1>, vector<1x1536xf32>
    %363 = arith.addf %351, %362 : vector<1x1536xf32>
    %c176_i32_126 = arith.constant 176 : i32
    %364 = vector.broadcast %c176_i32_126 : i32 to vector<1x1536xi32>
    %365 = arith.cmpi slt, %1, %364 : vector<1x1536xi32>
    %cst_127 = arith.constant 1.000000e+00 : f32
    %cst_128 = arith.constant 0.000000e+00 : f32
    %366 = vector.broadcast %cst_127 : f32 to vector<1x1536xf32>
    %367 = vector.broadcast %cst_128 : f32 to vector<1x1536xf32>
    %368 = arith.select %365, %366, %367 : vector<1x1536xi1>, vector<1x1536xf32>
    %369 = arith.addf %357, %368 : vector<1x1536xf32>
    %c1360_i32_129 = arith.constant 1360 : i32
    %370 = vector.broadcast %c1360_i32_129 : i32 to vector<1x1536xi32>
    %371 = arith.cmpi sge, %1, %370 : vector<1x1536xi32>
    %cst_130 = arith.constant 1.000000e+00 : f32
    %cst_131 = arith.constant 0.000000e+00 : f32
    %372 = vector.broadcast %cst_130 : f32 to vector<1x1536xf32>
    %373 = vector.broadcast %cst_131 : f32 to vector<1x1536xf32>
    %374 = arith.select %371, %372, %373 : vector<1x1536xi1>, vector<1x1536xf32>
    %375 = arith.addf %363, %374 : vector<1x1536xf32>
    %c192_i32_132 = arith.constant 192 : i32
    %376 = vector.broadcast %c192_i32_132 : i32 to vector<1x1536xi32>
    %377 = arith.cmpi slt, %1, %376 : vector<1x1536xi32>
    %cst_133 = arith.constant 1.000000e+00 : f32
    %cst_134 = arith.constant 0.000000e+00 : f32
    %378 = vector.broadcast %cst_133 : f32 to vector<1x1536xf32>
    %379 = vector.broadcast %cst_134 : f32 to vector<1x1536xf32>
    %380 = arith.select %377, %378, %379 : vector<1x1536xi1>, vector<1x1536xf32>
    %381 = arith.addf %369, %380 : vector<1x1536xf32>
    %c1344_i32_135 = arith.constant 1344 : i32
    %382 = vector.broadcast %c1344_i32_135 : i32 to vector<1x1536xi32>
    %383 = arith.cmpi sge, %1, %382 : vector<1x1536xi32>
    %cst_136 = arith.constant 1.000000e+00 : f32
    %cst_137 = arith.constant 0.000000e+00 : f32
    %384 = vector.broadcast %cst_136 : f32 to vector<1x1536xf32>
    %385 = vector.broadcast %cst_137 : f32 to vector<1x1536xf32>
    %386 = arith.select %383, %384, %385 : vector<1x1536xi1>, vector<1x1536xf32>
    %387 = arith.addf %375, %386 : vector<1x1536xf32>
    %388 = vector.broadcast %381 : vector<1x1536xf32> to vector<2x1536xf32>
    %389 = arith.mulf %388, %235 : vector<2x1536xf32>
    %390 = arith.addf %193, %389 : vector<2x1536xf32>
    %391 = vector.broadcast %387 : vector<1x1536xf32> to vector<2x1536xf32>
    %392 = arith.mulf %391, %241 : vector<2x1536xf32>
    %393 = arith.addf %390, %392 : vector<2x1536xf32>
    %cst_138 = arith.constant 4.000000e-02 : f32
    %394 = vector.broadcast %cst_138 : f32 to vector<2x1536xf32>
    %395 = arith.mulf %393, %394 : vector<2x1536xf32>
    %c0_139 = arith.constant 0 : index
    %c0_140 = arith.constant 0 : index
    %396 = vector.load %arg3[%c0_139, %c0_140] : memref<2x1536xf32, #tpu.memory_space<vmem>>, vector<2x1536xf32>
    tpu.vector_store %arg3[%c0_139, %c0_140], %395 {strides = array<i32>} : memref<2x1536xf32, #tpu.memory_space<vmem>>, vector<2x1536xf32>,
    %397 = arith.subf %0, %395 : vector<2x1536xf32>
    %c0_141 = arith.constant 0 : index
    %c0_142 = arith.constant 0 : index
    %398 = vector.load %arg2[%c0_141, %c0_142] : memref<2x1536xf32, #tpu.memory_space<vmem>>, vector<2x1536xf32>
    tpu.vector_store %arg2[%c0_141, %c0_142], %397 {strides = array<i32>} : memref<2x1536xf32, #tpu.memory_space<vmem>>, vector<2x1536xf32>,
    return
  }
  func.func @transform_0(%arg0: i32) -> (i32, i32) {
    %c0_i32 = arith.constant 0 : i32
    %c0_i32_0 = arith.constant 0 : i32
    return %arg0, %c0_i32 : i32, i32
  }
  func.func @transform_1(%arg0: i32) -> (i32, i32) {
    %c0_i32 = arith.constant 0 : i32
    %c0_i32_0 = arith.constant 0 : i32
    return %arg0, %c0_i32 : i32, i32
  }
  func.func @transform_2(%arg0: i32) -> (i32, i32) {
    %c0_i32 = arith.constant 0 : i32
    %c0_i32_0 = arith.constant 0 : i32
    return %arg0, %c0_i32 : i32, i32
  }
}

</mosaic_0001>

<llo_original>
// kernel: tpu_custom_call.1
$region0: #{tpu_custom_call.1}
  #allocation0 [shape = 'u32[]', space=smem, size = 0x4, offset = 0x4, fixed_abs, tag = 'smem constant byte address 0x4 - core index']
  #allocation1 [shape = 'u32[72,128]{1,0:T(1,128)}', space=vmem, size = 0x9000, scoped, tag = 'internal scratch']
  %s0 = inlined_call_operand.hbm [shape: f32[2,1536], index: 0, kind: input, shape index: {}]
  %s1 = inlined_call_operand.hbm [shape: f32[2,1536], index: 1, kind: output, shape index: {0}]
  %s2 = inlined_call_operand.hbm [shape: f32[2,1536], index: 2, kind: output, shape index: {1}]
  %3 = xla_tuple %s1, %s2
  %s4 = sld [smem:[#allocation0]]
  $region26: #{tpu_custom_call.1} parent=0
    _
  %s6 = ssub.s32 1, %s4
  %s7 = scalar_select 0, %s6, %s4
  $region1: #{tpu_custom_call.1} parent=0
    #allocation2 [shape = 'u8[12288]{0}', space=vmem, size = 0x3000, scoped, tag = 'input window, operand 0, single buffered']
    #allocation3 [shape = 's32[1]{0}', space=sflag, size = 0x4, scoped, tag = 'scoped memory for tpu_custom_call.1']
    #allocation4 [shape = 's32[1]{0}', space=sflag, size = 0x4, scoped, tag = 'scoped memory for tpu_custom_call.1']
    #allocation5 [shape = 'u8[12288]{0}', space=vmem, size = 0x3000, scoped, tag = 'output window, operand 0, single buffered']
    #allocation6 [shape = 'u8[12288]{0}', space=vmem, size = 0x3000, scoped, tag = 'output window, operand 1, single buffered']
    #allocation7 [shape = 's32[1]{0}', space=sflag, size = 0x4, scoped, tag = 'scoped memory for tpu_custom_call.1']
    %8 = vsyncpa [#allocation3], 0
    %9 = vsyncpa [#allocation4], 0
    %10 = vsyncpa [#allocation7], 0
    // Predicated region
    $region2: #{tpu_custom_call.1} parent=1 // pred_check
      _
    $region3: #{tpu_custom_call.1} parent=1 // pred_check_branch
      %12 = sbr.rel (0) target = $region5
    $region4: #{tpu_custom_call.1} parent=1 // pred_region
      %14 = vsyncadd [#allocation3], 0
      %s16 = sshll.u32 %s0, 4
      %s17 = int_to_ptr.hbm [resolvable:$true] %s16
      %s18 = sshll.u32 [#allocation2], 4
      %s19 = int_to_ptr.vmem [resolvable:$true] %s18
      %21 = dma.hbm_to_vmem [thread:$0]  %s17, 384, %s19, [#allocation3]
    $region5: #{tpu_custom_call.1} parent=1 // pred_fallthru
      _
    // Predicated region
    $region6: #{tpu_custom_call.1} parent=1 // pred_check
      _
    $region7: #{tpu_custom_call.1} parent=1 // pred_check_branch
      %23 = sbr.rel (0) target = $region9
    $region8: #{tpu_custom_call.1} parent=1 // pred_region
      %25 = dma.done [#allocation3], 384
    $region9: #{tpu_custom_call.1} parent=1 // pred_fallthru
      _
    %v26 = vld [vmem:[#allocation2] sm:$0xff]
    %v27 = vld [vmem:[#allocation2 + $0x8] sm:$0xff]
    %v28 = vld [vmem:[#allocation2 + $0x10] sm:$0xff]
    %v29 = vlaneseq
    %v30 = vand.u32 %v29, 127
    %v31 = vadd.s32 %v30, 128
    %v32 = vadd.s32 %v30, 256
    %v33 = vadd.s32 %v30, 384
    %v34 = vadd.s32 %v30, 512
    %v35 = vadd.s32 %v30, 640
    %v36 = vadd.s32 %v30, 768
    %v37 = vadd.s32 %v30, 896
    %v38 = vadd.s32 %v30, 1024
    %v39 = vadd.s32 %v30, 1152
    %v40 = vadd.s32 %v30, 1280
    %v41 = vadd.s32 %v30, 1408
    %45 = vst [vmem:[#allocation1] ss:$4 sm:$0xff] %v26
    %s46 = scalar_lea.vmem [#allocation1], 32
    %47 = vst [vmem:[%s46] ss:$4 sm:$0xff] %v27
    %v48 = vld.sshfl [vmem:[#allocation1] sm:$0xff pattern:$0x73625140]
    %v49 = vld.sshfl [vmem:[#allocation1 + $0x8] sm:$0xff pattern:$0x73625140]
    %v50 = vld.sshfl [vmem:[#allocation1 + $0x10] sm:$0xff pattern:$0x73625140]
    %v51 = vld.sshfl [vmem:[#allocation1 + $0x18] sm:$0xff pattern:$0x73625140]
    %v52 = vld.sshfl [vmem:[#allocation1 + $0x20] sm:$0xff pattern:$0x73625140]
    %v53 = vld.sshfl [vmem:[#allocation1 + $0x28] sm:$0xff pattern:$0x73625140]
    %v54 = vld.sshfl [vmem:[#allocation1 + $0x30] sm:$0xff pattern:$0x73625140]
    %v55 = vld.sshfl [vmem:[#allocation1 + $0x38] sm:$0xff pattern:$0x73625140]
    %56 = vst [vmem:[#allocation1] ss:$4 sm:$0xff] %v28
    %v57 = vld.sshfl [vmem:[#allocation1] sm:$0xff pattern:$0x73625140]
    %v58 = vld.sshfl [vmem:[#allocation1 + $0x8] sm:$0xff pattern:$0x73625140]
    %v59 = vld.sshfl [vmem:[#allocation1 + $0x10] sm:$0xff pattern:$0x73625140]
    %v60 = vld.sshfl [vmem:[#allocation1 + $0x18] sm:$0xff pattern:$0x73625140]
    %73 = vrot.lane.b32.xlu0 %v48, 112
    %v74 = vpop.permute.xlu0 %73
    %75 = vrot.lane.b32.xlu0 %v49, 112
    %v76 = vpop.permute.xlu0 %75
    %77 = vrot.lane.b32.xlu0 %v50, 112
    %v78 = vpop.permute.xlu0 %77
    %79 = vrot.lane.b32.xlu0 %v51, 112
    %v80 = vpop.permute.xlu0 %79
    %81 = vrot.lane.b32.xlu0 %v52, 112
    %v82 = vpop.permute.xlu0 %81
    %83 = vrot.lane.b32.xlu0 %v53, 112
    %v84 = vpop.permute.xlu0 %83
    %85 = vrot.lane.b32.xlu0 %v54, 112
    %v86 = vpop.permute.xlu0 %85
    %87 = vrot.lane.b32.xlu0 %v55, 112
    %v88 = vpop.permute.xlu0 %87
    %89 = vrot.lane.b32.xlu0 %v57, 112
    %v90 = vpop.permute.xlu0 %89
    %91 = vrot.lane.b32.xlu0 %v58, 112
    %v92 = vpop.permute.xlu0 %91
    %93 = vrot.lane.b32.xlu0 %v59, 112
    %v94 = vpop.permute.xlu0 %93
    %95 = vrot.lane.b32.xlu0 %v60, 112
    %v96 = vpop.permute.xlu0 %95
    %vm97 = vcmp.lt.s32.totalorder %v30, 112
    %v98 = vsel %vm97, %v94, %v96
    %v99 = vsel %vm97, %v92, %v94
    %v100 = vsel %vm97, %v90, %v92
    %v101 = vsel %vm97, %v88, %v90
    %v102 = vsel %vm97, %v86, %v88
    %v103 = vsel %vm97, %v84, %v86
    %v104 = vsel %vm97, %v82, %v84
    %v105 = vsel %vm97, %v80, %v82
    %v106 = vsel %vm97, %v78, %v80
    %v107 = vsel %vm97, %v76, %v78
    %v108 = vsel %vm97, %v74, %v76
    %v109 = vsel %vm97, %v96, %v74
    %vm110 = vcmp.lt.s32.totalorder %v30, 1520
    %vm111 = vcmp.lt.s32.totalorder %v31, 1520
    %vm112 = vcmp.lt.s32.totalorder %v32, 1520
    %vm113 = vcmp.lt.s32.totalorder %v33, 1520
    %vm114 = vcmp.lt.s32.totalorder %v34, 1520
    %vm115 = vcmp.lt.s32.totalorder %v35, 1520
    %vm116 = vcmp.lt.s32.totalorder %v36, 1520
    %vm117 = vcmp.lt.s32.totalorder %v37, 1520
    %vm118 = vcmp.lt.s32.totalorder %v38, 1520
    %vm119 = vcmp.lt.s32.totalorder %v39, 1520
    %vm120 = vcmp.lt.s32.totalorder %v40, 1520
    %vm121 = vcmp.lt.s32.totalorder %v41, 1520
    %v122 = vsel %vm110, 1, 0
    %v123 = vsel %vm111, 1, 0
    %v124 = vsel %vm112, 1, 0
    %v125 = vsel %vm113, 1, 0
    %v126 = vsel %vm114, 1, 0
    %v127 = vsel %vm115, 1, 0
    %v128 = vsel %vm116, 1, 0
    %v129 = vsel %vm117, 1, 0
    %v130 = vsel %vm118, 1, 0
    %v131 = vsel %vm119, 1, 0
    %v132 = vsel %vm120, 1, 0
    %v133 = vsel %vm121, 1, 0
    %vm134 = vcmp.eq.s32.totalorder %v122, 1
    %vm135 = vcmp.eq.s32.totalorder %v123, 1
    %vm136 = vcmp.eq.s32.totalorder %v124, 1
    %vm137 = vcmp.eq.s32.totalorder %v125, 1
    %vm138 = vcmp.eq.s32.totalorder %v126, 1
    %vm139 = vcmp.eq.s32.totalorder %v127, 1
    %vm140 = vcmp.eq.s32.totalorder %v128, 1
    %vm141 = vcmp.eq.s32.totalorder %v129, 1
    %vm142 = vcmp.eq.s32.totalorder %v130, 1
    %vm143 = vcmp.eq.s32.totalorder %v131, 1
    %vm144 = vcmp.eq.s32.totalorder %v132, 1
    %vm145 = vcmp.eq.s32.totalorder %v133, 1
    %v146 = vsel %vm134, %v108, 0.0
    %v147 = vsel %vm135, %v107, 0.0
    %v148 = vsel %vm136, %v106, 0.0
    %v149 = vsel %vm137, %v105, 0.0
    %v150 = vsel %vm138, %v104, 0.0
    %v151 = vsel %vm139, %v103, 0.0
    %v152 = vsel %vm140, %v102, 0.0
    %v153 = vsel %vm141, %v101, 0.0
    %v154 = vsel %vm142, %v100, 0.0
    %v155 = vsel %vm143, %v99, 0.0
    %v156 = vsel %vm144, %v98, 0.0
    %v157 = vsel %vm145, %v109, 0.0
    %v170 = vrot.slane %v147, 6
    %v171 = vrot.slane %v148, 4
    %v172 = vrot.slane %v149, 2
    %v173 = vrot.slane %v151, 6
    %v174 = vrot.slane %v152, 4
    %v175 = vrot.slane %v153, 2
    %v176 = vrot.slane %v155, 6
    %v177 = vrot.slane %v156, 4
    %v178 = vrot.slane %v157, 2
    %vm179 = vcmask 1041408
    %v180 = vsel %vm179, %v146, %v170
    %vm181 = vcmask 1045508
    %v182 = vsel %vm181, %v171, %v172
    %vm183 = vcmask 1043456
    %v184 = vsel %vm183, %v180, %v182
    %v185 = vsel %vm179, %v150, %v173
    %v186 = vsel %vm181, %v174, %v175
    %v187 = vsel %vm183, %v185, %v186
    %v188 = vsel %vm179, %v154, %v176
    %v189 = vsel %vm181, %v177, %v178
    %v190 = vsel %vm183, %v188, %v189
    %v194 = vadd.f32 %v26, %v184
    %v195 = vadd.f32 %v27, %v187
    %v196 = vadd.f32 %v28, %v190
    %197 = vst [vmem:[#allocation1] ss:$4 sm:$0xff] %v26
    %s198 = scalar_lea.vmem [#allocation1], 32
    %199 = vst [vmem:[%s198] ss:$4 sm:$0xff] %v27
    %v200 = vld.sshfl [vmem:[#allocation1] sm:$0xff pattern:$0x73625140]
    %v201 = vld.sshfl [vmem:[#allocation1 + $0x8] sm:$0xff pattern:$0x73625140]
    %v202 = vld.sshfl [vmem:[#allocation1 + $0x10] sm:$0xff pattern:$0x73625140]
    %v203 = vld.sshfl [vmem:[#allocation1 + $0x18] sm:$0xff pattern:$0x73625140]
    %v204 = vld.sshfl [vmem:[#allocation1 + $0x20] sm:$0xff pattern:$0x73625140]
    %v205 = vld.sshfl [vmem:[#allocation1 + $0x28] sm:$0xff pattern:$0x73625140]
    %v206 = vld.sshfl [vmem:[#allocation1 + $0x30] sm:$0xff pattern:$0x73625140]
    %v207 = vld.sshfl [vmem:[#allocation1 + $0x38] sm:$0xff pattern:$0x73625140]
    %208 = vst [vmem:[#allocation1] ss:$4 sm:$0xff] %v28
    %v209 = vld.sshfl [vmem:[#allocation1] sm:$0xff pattern:$0x73625140]
    %v210 = vld.sshfl [vmem:[#allocation1 + $0x8] sm:$0xff pattern:$0x73625140]
    %v211 = vld.sshfl [vmem:[#allocation1 + $0x10] sm:$0xff pattern:$0x73625140]
    %v212 = vld.sshfl [vmem:[#allocation1 + $0x18] sm:$0xff pattern:$0x73625140]
    %225 = vrot.lane.b32.xlu0 %v200, 16
    %v226 = vpop.permute.xlu0 %225
    %227 = vrot.lane.b32.xlu0 %v201, 16
    %v228 = vpop.permute.xlu0 %227
    %229 = vrot.lane.b32.xlu0 %v202, 16
    %v230 = vpop.permute.xlu0 %229
    %231 = vrot.lane.b32.xlu0 %v203, 16
    %v232 = vpop.permute.xlu0 %231
    %233 = vrot.lane.b32.xlu0 %v204, 16
    %v234 = vpop.permute.xlu0 %233
    %235 = vrot.lane.b32.xlu0 %v205, 16
    %v236 = vpop.permute.xlu0 %235
    %237 = vrot.lane.b32.xlu0 %v206, 16
    %v238 = vpop.permute.xlu0 %237
    %239 = vrot.lane.b32.xlu0 %v207, 16
    %v240 = vpop.permute.xlu0 %239
    %241 = vrot.lane.b32.xlu0 %v209, 16
    %v242 = vpop.permute.xlu0 %241
    %243 = vrot.lane.b32.xlu0 %v210, 16
    %v244 = vpop.permute.xlu0 %243
    %245 = vrot.lane.b32.xlu0 %v211, 16
    %v246 = vpop.permute.xlu0 %245
    %247 = vrot.lane.b32.xlu0 %v212, 16
    %v248 = vpop.permute.xlu0 %247
    %vm249 = vcmp.lt.s32.totalorder %v30, 16
    %v250 = vsel %vm249, %v246, %v248
    %v251 = vsel %vm249, %v244, %v246
    %v252 = vsel %vm249, %v242, %v244
    %v253 = vsel %vm249, %v240, %v242
    %v254 = vsel %vm249, %v238, %v240
    %v255 = vsel %vm249, %v236, %v238
    %v256 = vsel %vm249, %v234, %v236
    %v257 = vsel %vm249, %v232, %v234
    %v258 = vsel %vm249, %v230, %v232
    %v259 = vsel %vm249, %v228, %v230
    %v260 = vsel %vm249, %v226, %v228
    %v261 = vsel %vm249, %v248, %v226
    %vm262 = vcmp.ge.s32.totalorder %v30, 16
    %vm263 = vcmp.ge.s32.totalorder %v31, 16
    %vm264 = vcmp.ge.s32.totalorder %v32, 16
    %vm265 = vcmp.ge.s32.totalorder %v33, 16
    %vm266 = vcmp.ge.s32.totalorder %v34, 16
    %vm267 = vcmp.ge.s32.totalorder %v35, 16
    %vm268 = vcmp.ge.s32.totalorder %v36, 16
    %vm269 = vcmp.ge.s32.totalorder %v37, 16
    %vm270 = vcmp.ge.s32.totalorder %v38, 16
    %vm271 = vcmp.ge.s32.totalorder %v39, 16
    %vm272 = vcmp.ge.s32.totalorder %v40, 16
    %vm273 = vcmp.ge.s32.totalorder %v41, 16
    %v274 = vsel %vm262, 1, 0
    %v275 = vsel %vm263, 1, 0
    %v276 = vsel %vm264, 1, 0
    %v277 = vsel %vm265, 1, 0
    %v278 = vsel %vm266, 1, 0
    %v279 = vsel %vm267, 1, 0
    %v280 = vsel %vm268, 1, 0
    %v281 = vsel %vm269, 1, 0
    %v282 = vsel %vm270, 1, 0
    %v283 = vsel %vm271, 1, 0
    %v284 = vsel %vm272, 1, 0
    %v285 = vsel %vm273, 1, 0
    %vm286 = vcmp.eq.s32.totalorder %v274, 1
    %vm287 = vcmp.eq.s32.totalorder %v275, 1
    %vm288 = vcmp.eq.s32.totalorder %v276, 1
    %vm289 = vcmp.eq.s32.totalorder %v277, 1
    %vm290 = vcmp.eq.s32.totalorder %v278, 1
    %vm291 = vcmp.eq.s32.totalorder %v279, 1
    %vm292 = vcmp.eq.s32.totalorder %v280, 1
    %vm293 = vcmp.eq.s32.totalorder %v281, 1
    %vm294 = vcmp.eq.s32.totalorder %v282, 1
    %vm295 = vcmp.eq.s32.totalorder %v283, 1
    %vm296 = vcmp.eq.s32.totalorder %v284, 1
    %vm297 = vcmp.eq.s32.totalorder %v285, 1
    %v298 = vsel %vm286, %v261, 0.0
    %v299 = vsel %vm287, %v260, 0.0
    %v300 = vsel %vm288, %v259, 0.0
    %v301 = vsel %vm289, %v258, 0.0
    %v302 = vsel %vm290, %v257, 0.0
    %v303 = vsel %vm291, %v256, 0.0
    %v304 = vsel %vm292, %v255, 0.0
    %v305 = vsel %vm293, %v254, 0.0
    %v306 = vsel %vm294, %v253, 0.0
    %v307 = vsel %vm295, %v252, 0.0
    %v308 = vsel %vm296, %v251, 0.0
    %v309 = vsel %vm297, %v250, 0.0
    %v322 = vrot.slane %v299, 6
    %v323 = vrot.slane %v300, 4
    %v324 = vrot.slane %v301, 2
    %v325 = vrot.slane %v303, 6
    %v326 = vrot.slane %v304, 4
    %v327 = vrot.slane %v305, 2
    %v328 = vrot.slane %v307, 6
    %v329 = vrot.slane %v308, 4
    %v330 = vrot.slane %v309, 2
    %v331 = vsel %vm179, %v298, %v322
    %v332 = vsel %vm181, %v323, %v324
    %v333 = vsel %vm183, %v331, %v332
    %v334 = vsel %vm179, %v302, %v325
    %v335 = vsel %vm181, %v326, %v327
    %v336 = vsel %vm183, %v334, %v335
    %v337 = vsel %vm179, %v306, %v328
    %v338 = vsel %vm181, %v329, %v330
    %v339 = vsel %vm183, %v337, %v338
    %v343 = vadd.f32 %v194, %v333
    %v344 = vadd.f32 %v195, %v336
    %v345 = vadd.f32 %v196, %v339
    %346 = vst [vmem:[#allocation1] ss:$4 sm:$0xff] %v26
    %s347 = scalar_lea.vmem [#allocation1], 32
    %348 = vst [vmem:[%s347] ss:$4 sm:$0xff] %v27
    %v349 = vld.sshfl [vmem:[#allocation1] sm:$0xff pattern:$0x73625140]
    %v350 = vld.sshfl [vmem:[#allocation1 + $0x8] sm:$0xff pattern:$0x73625140]
    %v351 = vld.sshfl [vmem:[#allocation1 + $0x10] sm:$0xff pattern:$0x73625140]
    %v352 = vld.sshfl [vmem:[#allocation1 + $0x18] sm:$0xff pattern:$0x73625140]
    %v353 = vld.sshfl [vmem:[#allocation1 + $0x20] sm:$0xff pattern:$0x73625140]
    %v354 = vld.sshfl [vmem:[#allocation1 + $0x28] sm:$0xff pattern:$0x73625140]
    %v355 = vld.sshfl [vmem:[#allocation1 + $0x30] sm:$0xff pattern:$0x73625140]
    %v356 = vld.sshfl [vmem:[#allocation1 + $0x38] sm:$0xff pattern:$0x73625140]
    %357 = vst [vmem:[#allocation1] ss:$4 sm:$0xff] %v28
    %v358 = vld.sshfl [vmem:[#allocation1] sm:$0xff pattern:$0x73625140]
    %v359 = vld.sshfl [vmem:[#allocation1 + $0x8] sm:$0xff pattern:$0x73625140]
    %v360 = vld.sshfl [vmem:[#allocation1 + $0x10] sm:$0xff pattern:$0x73625140]
    %v361 = vld.sshfl [vmem:[#allocation1 + $0x18] sm:$0xff pattern:$0x73625140]
    %374 = vrot.lane.b32.xlu0 %v349, 96
    %v375 = vpop.permute.xlu0 %374
    %376 = vrot.lane.b32.xlu0 %v350, 96
    %v377 = vpop.permute.xlu0 %376
    %378 = vrot.lane.b32.xlu0 %v351, 96
    %v379 = vpop.permute.xlu0 %378
    %380 = vrot.lane.b32.xlu0 %v352, 96
    %v381 = vpop.permute.xlu0 %380
    %382 = vrot.lane.b32.xlu0 %v353, 96
    %v383 = vpop.permute.xlu0 %382
    %384 = vrot.lane.b32.xlu0 %v354, 96
    %v385 = vpop.permute.xlu0 %384
    %386 = vrot.lane.b32.xlu0 %v355, 96
    %v387 = vpop.permute.xlu0 %386
    %388 = vrot.lane.b32.xlu0 %v356, 96
    %v389 = vpop.permute.xlu0 %388
    %390 = vrot.lane.b32.xlu0 %v358, 96
    %v391 = vpop.permute.xlu0 %390
    %392 = vrot.lane.b32.xlu0 %v359, 96
    %v393 = vpop.permute.xlu0 %392
    %394 = vrot.lane.b32.xlu0 %v360, 96
    %v395 = vpop.permute.xlu0 %394
    %396 = vrot.lane.b32.xlu0 %v361, 96
    %v397 = vpop.permute.xlu0 %396
    %vm398 = vcmp.lt.s32.totalorder %v30, 96
    %v399 = vsel %vm398, %v395, %v397
    %v400 = vsel %vm398, %v393, %v395
    %v401 = vsel %vm398, %v391, %v393
    %v402 = vsel %vm398, %v389, %v391
    %v403 = vsel %vm398, %v387, %v389
    %v404 = vsel %vm398, %v385, %v387
    %v405 = vsel %vm398, %v383, %v385
    %v406 = vsel %vm398, %v381, %v383
    %v407 = vsel %vm398, %v379, %v381
    %v408 = vsel %vm398, %v377, %v379
    %v409 = vsel %vm398, %v375, %v377
    %v410 = vsel %vm398, %v397, %v375
    %vm411 = vcmp.lt.s32.totalorder %v30, 1504
    %vm412 = vcmp.lt.s32.totalorder %v31, 1504
    %vm413 = vcmp.lt.s32.totalorder %v32, 1504
    %vm414 = vcmp.lt.s32.totalorder %v33, 1504
    %vm415 = vcmp.lt.s32.totalorder %v34, 1504
    %vm416 = vcmp.lt.s32.totalorder %v35, 1504
    %vm417 = vcmp.lt.s32.totalorder %v36, 1504
    %vm418 = vcmp.lt.s32.totalorder %v37, 1504
    %vm419 = vcmp.lt.s32.totalorder %v38, 1504
    %vm420 = vcmp.lt.s32.totalorder %v39, 1504
    %vm421 = vcmp.lt.s32.totalorder %v40, 1504
    %vm422 = vcmp.lt.s32.totalorder %v41, 1504
    %v423 = vsel %vm411, 1, 0
    %v424 = vsel %vm412, 1, 0
    %v425 = vsel %vm413, 1, 0
    %v426 = vsel %vm414, 1, 0
    %v427 = vsel %vm415, 1, 0
    %v428 = vsel %vm416, 1, 0
    %v429 = vsel %vm417, 1, 0
    %v430 = vsel %vm418, 1, 0
    %v431 = vsel %vm419, 1, 0
    %v432 = vsel %vm420, 1, 0
    %v433 = vsel %vm421, 1, 0
    %v434 = vsel %vm422, 1, 0
    %vm435 = vcmp.eq.s32.totalorder %v423, 1
    %vm436 = vcmp.eq.s32.totalorder %v424, 1
    %vm437 = vcmp.eq.s32.totalorder %v425, 1
    %vm438 = vcmp.eq.s32.totalorder %v426, 1
    %vm439 = vcmp.eq.s32.totalorder %v427, 1
    %vm440 = vcmp.eq.s32.totalorder %v428, 1
    %vm441 = vcmp.eq.s32.totalorder %v429, 1
    %vm442 = vcmp.eq.s32.totalorder %v430, 1
    %vm443 = vcmp.eq.s32.totalorder %v431, 1
    %vm444 = vcmp.eq.s32.totalorder %v432, 1
    %vm445 = vcmp.eq.s32.totalorder %v433, 1
    %vm446 = vcmp.eq.s32.totalorder %v434, 1
    %v447 = vsel %vm435, %v409, 0.0
    %v448 = vsel %vm436, %v408, 0.0
    %v449 = vsel %vm437, %v407, 0.0
    %v450 = vsel %vm438, %v406, 0.0
    %v451 = vsel %vm439, %v405, 0.0
    %v452 = vsel %vm440, %v404, 0.0
    %v453 = vsel %vm441, %v403, 0.0
    %v454 = vsel %vm442, %v402, 0.0
    %v455 = vsel %vm443, %v401, 0.0
    %v456 = vsel %vm444, %v400, 0.0
    %v457 = vsel %vm445, %v399, 0.0
    %v458 = vsel %vm446, %v410, 0.0
    %v471 = vrot.slane %v448, 6
    %v472 = vrot.slane %v449, 4
    %v473 = vrot.slane %v450, 2
    %v474 = vrot.slane %v452, 6
    %v475 = vrot.slane %v453, 4
    %v476 = vrot.slane %v454, 2
    %v477 = vrot.slane %v456, 6
    %v478 = vrot.slane %v457, 4
    %v479 = vrot.slane %v458, 2
    %v480 = vsel %vm179, %v447, %v471
    %v481 = vsel %vm181, %v472, %v473
    %v482 = vsel %vm183, %v480, %v481
    %v483 = vsel %vm179, %v451, %v474
    %v484 = vsel %vm181, %v475, %v476
    %v485 = vsel %vm183, %v483, %v484
    %v486 = vsel %vm179, %v455, %v477
    %v487 = vsel %vm181, %v478, %v479
    %v488 = vsel %vm183, %v486, %v487
    %v492 = vadd.f32 %v343, %v482
    %v493 = vadd.f32 %v344, %v485
    %v494 = vadd.f32 %v345, %v488
    %495 = vst [vmem:[#allocation1] ss:$4 sm:$0xff] %v26
    %s496 = scalar_lea.vmem [#allocation1], 32
    %497 = vst [vmem:[%s496] ss:$4 sm:$0xff] %v27
    %v498 = vld.sshfl [vmem:[#allocation1] sm:$0xff pattern:$0x73625140]
    %v499 = vld.sshfl [vmem:[#allocation1 + $0x8] sm:$0xff pattern:$0x73625140]
    %v500 = vld.sshfl [vmem:[#allocation1 + $0x10] sm:$0xff pattern:$0x73625140]
    %v501 = vld.sshfl [vmem:[#allocation1 + $0x18] sm:$0xff pattern:$0x73625140]
    %v502 = vld.sshfl [vmem:[#allocation1 + $0x20] sm:$0xff pattern:$0x73625140]
    %v503 = vld.sshfl [vmem:[#allocation1 + $0x28] sm:$0xff pattern:$0x73625140]
    %v504 = vld.sshfl [vmem:[#allocation1 + $0x30] sm:$0xff pattern:$0x73625140]
    %v505 = vld.sshfl [vmem:[#allocation1 + $0x38] sm:$0xff pattern:$0x73625140]
    %506 = vst [vmem:[#allocation1] ss:$4 sm:$0xff] %v28
    %v507 = vld.sshfl [vmem:[#allocation1] sm:$0xff pattern:$0x73625140]
    %v508 = vld.sshfl [vmem:[#allocation1 + $0x8] sm:$0xff pattern:$0x73625140]
    %v509 = vld.sshfl [vmem:[#allocation1 + $0x10] sm:$0xff pattern:$0x73625140]
    %v510 = vld.sshfl [vmem:[#allocation1 + $0x18] sm:$0xff pattern:$0x73625140]
    %523 = vrot.lane.b32.xlu0 %v498, 32
    %v524 = vpop.permute.xlu0 %523
    %525 = vrot.lane.b32.xlu0 %v499, 32
    %v526 = vpop.permute.xlu0 %525
    %527 = vrot.lane.b32.xlu0 %v500, 32
    %v528 = vpop.permute.xlu0 %527
    %529 = vrot.lane.b32.xlu0 %v501, 32
    %v530 = vpop.permute.xlu0 %529
    %531 = vrot.lane.b32.xlu0 %v502, 32
    %v532 = vpop.permute.xlu0 %531
    %533 = vrot.lane.b32.xlu0 %v503, 32
    %v534 = vpop.permute.xlu0 %533
    %535 = vrot.lane.b32.xlu0 %v504, 32
    %v536 = vpop.permute.xlu0 %535
    %537 = vrot.lane.b32.xlu0 %v505, 32
    %v538 = vpop.permute.xlu0 %537
    %539 = vrot.lane.b32.xlu0 %v507, 32
    %v540 = vpop.permute.xlu0 %539
    %541 = vrot.lane.b32.xlu0 %v508, 32
    %v542 = vpop.permute.xlu0 %541
    %543 = vrot.lane.b32.xlu0 %v509, 32
    %v544 = vpop.permute.xlu0 %543
    %545 = vrot.lane.b32.xlu0 %v510, 32
    %v546 = vpop.permute.xlu0 %545
    %vm547 = vcmp.lt.s32.totalorder %v30, 32
    %v548 = vsel %vm547, %v544, %v546
    %v549 = vsel %vm547, %v542, %v544
    %v550 = vsel %vm547, %v540, %v542
    %v551 = vsel %vm547, %v538, %v540
    %v552 = vsel %vm547, %v536, %v538
    %v553 = vsel %vm547, %v534, %v536
    %v554 = vsel %vm547, %v532, %v534
    %v555 = vsel %vm547, %v530, %v532
    %v556 = vsel %vm547, %v528, %v530
    %v557 = vsel %vm547, %v526, %v528
    %v558 = vsel %vm547, %v524, %v526
    %v559 = vsel %vm547, %v546, %v524
    %vm560 = vcmp.ge.s32.totalorder %v30, 32
    %vm561 = vcmp.ge.s32.totalorder %v31, 32
    %vm562 = vcmp.ge.s32.totalorder %v32, 32
    %vm563 = vcmp.ge.s32.totalorder %v33, 32
    %vm564 = vcmp.ge.s32.totalorder %v34, 32
    %vm565 = vcmp.ge.s32.totalorder %v35, 32
    %vm566 = vcmp.ge.s32.totalorder %v36, 32
    %vm567 = vcmp.ge.s32.totalorder %v37, 32
    %vm568 = vcmp.ge.s32.totalorder %v38, 32
    %vm569 = vcmp.ge.s32.totalorder %v39, 32
    %vm570 = vcmp.ge.s32.totalorder %v40, 32
    %vm571 = vcmp.ge.s32.totalorder %v41, 32
    %v572 = vsel %vm560, 1, 0
    %v573 = vsel %vm561, 1, 0
    %v574 = vsel %vm562, 1, 0
    %v575 = vsel %vm563, 1, 0
    %v576 = vsel %vm564, 1, 0
    %v577 = vsel %vm565, 1, 0
    %v578 = vsel %vm566, 1, 0
    %v579 = vsel %vm567, 1, 0
    %v580 = vsel %vm568, 1, 0
    %v581 = vsel %vm569, 1, 0
    %v582 = vsel %vm570, 1, 0
    %v583 = vsel %vm571, 1, 0
    %vm584 = vcmp.eq.s32.totalorder %v572, 1
    %vm585 = vcmp.eq.s32.totalorder %v573, 1
    %vm586 = vcmp.eq.s32.totalorder %v574, 1
    %vm587 = vcmp.eq.s32.totalorder %v575, 1
    %vm588 = vcmp.eq.s32.totalorder %v576, 1
    %vm589 = vcmp.eq.s32.totalorder %v577, 1
    %vm590 = vcmp.eq.s32.totalorder %v578, 1
    %vm591 = vcmp.eq.s32.totalorder %v579, 1
    %vm592 = vcmp.eq.s32.totalorder %v580, 1
    %vm593 = vcmp.eq.s32.totalorder %v581, 1
    %vm594 = vcmp.eq.s32.totalorder %v582, 1
    %vm595 = vcmp.eq.s32.totalorder %v583, 1
    %v596 = vsel %vm584, %v559, 0.0
    %v597 = vsel %vm585, %v558, 0.0
    %v598 = vsel %vm586, %v557, 0.0
    %v599 = vsel %vm587, %v556, 0.0
    %v600 = vsel %vm588, %v555, 0.0
    %v601 = vsel %vm589, %v554, 0.0
    %v602 = vsel %vm590, %v553, 0.0
    %v603 = vsel %vm591, %v552, 0.0
    %v604 = vsel %vm592, %v551, 0.0
    %v605 = vsel %vm593, %v550, 0.0
    %v606 = vsel %vm594, %v549, 0.0
    %v607 = vsel %vm595, %v548, 0.0
    %v620 = vrot.slane %v597, 6
    %v621 = vrot.slane %v598, 4
    %v622 = vrot.slane %v599, 2
    %v623 = vrot.slane %v601, 6
    %v624 = vrot.slane %v602, 4
    %v625 = vrot.slane %v603, 2
    %v626 = vrot.slane %v605, 6
    %v627 = vrot.slane %v606, 4
    %v628 = vrot.slane %v607, 2
    %v629 = vsel %vm179, %v596, %v620
    %v630 = vsel %vm181, %v621, %v622
    %v631 = vsel %vm183, %v629, %v630
    %v632 = vsel %vm179, %v600, %v623
    %v633 = vsel %vm181, %v624, %v625
    %v634 = vsel %vm183, %v632, %v633
    %v635 = vsel %vm179, %v604, %v626
    %v636 = vsel %vm181, %v627, %v628
    %v637 = vsel %vm183, %v635, %v636
    %v641 = vadd.f32 %v492, %v631
    %v642 = vadd.f32 %v493, %v634
    %v643 = vadd.f32 %v494, %v637
    %644 = vst [vmem:[#allocation1] ss:$4 sm:$0xff] %v26
    %s645 = scalar_lea.vmem [#allocation1], 32
    %646 = vst [vmem:[%s645] ss:$4 sm:$0xff] %v27
    %v647 = vld.sshfl [vmem:[#allocation1] sm:$0xff pattern:$0x73625140]
    %v648 = vld.sshfl [vmem:[#allocation1 + $0x8] sm:$0xff pattern:$0x73625140]
    %v649 = vld.sshfl [vmem:[#allocation1 + $0x10] sm:$0xff pattern:$0x73625140]
    %v650 = vld.sshfl [vmem:[#allocation1 + $0x18] sm:$0xff pattern:$0x73625140]
    %v651 = vld.sshfl [vmem:[#allocation1 + $0x20] sm:$0xff pattern:$0x73625140]
    %v652 = vld.sshfl [vmem:[#allocation1 + $0x28] sm:$0xff pattern:$0x73625140]
    %v653 = vld.sshfl [vmem:[#allocation1 + $0x30] sm:$0xff pattern:$0x73625140]
    %v654 = vld.sshfl [vmem:[#allocation1 + $0x38] sm:$0xff pattern:$0x73625140]
    %655 = vst [vmem:[#allocation1] ss:$4 sm:$0xff] %v28
    %v656 = vld.sshfl [vmem:[#allocation1] sm:$0xff pattern:$0x73625140]
    %v657 = vld.sshfl [vmem:[#allocation1 + $0x8] sm:$0xff pattern:$0x73625140]
    %v658 = vld.sshfl [vmem:[#allocation1 + $0x10] sm:$0xff pattern:$0x73625140]
    %v659 = vld.sshfl [vmem:[#allocation1 + $0x18] sm:$0xff pattern:$0x73625140]
    %672 = vrot.lane.b32.xlu0 %v647, 80
    %v673 = vpop.permute.xlu0 %672
    %674 = vrot.lane.b32.xlu0 %v648, 80
    %v675 = vpop.permute.xlu0 %674
    %676 = vrot.lane.b32.xlu0 %v649, 80
    %v677 = vpop.permute.xlu0 %676
    %678 = vrot.lane.b32.xlu0 %v650, 80
    %v679 = vpop.permute.xlu0 %678
    %680 = vrot.lane.b32.xlu0 %v651, 80
    %v681 = vpop.permute.xlu0 %680
    %682 = vrot.lane.b32.xlu0 %v652, 80
    %v683 = vpop.permute.xlu0 %682
    %684 = vrot.lane.b32.xlu0 %v653, 80
    %v685 = vpop.permute.xlu0 %684
    %686 = vrot.lane.b32.xlu0 %v654, 80
    %v687 = vpop.permute.xlu0 %686
    %688 = vrot.lane.b32.xlu0 %v656, 80
    %v689 = vpop.permute.xlu0 %688
    %690 = vrot.lane.b32.xlu0 %v657, 80
    %v691 = vpop.permute.xlu0 %690
    %692 = vrot.lane.b32.xlu0 %v658, 80
    %v693 = vpop.permute.xlu0 %692
    %694 = vrot.lane.b32.xlu0 %v659, 80
    %v695 = vpop.permute.xlu0 %694
    %vm696 = vcmp.lt.s32.totalorder %v30, 80
    %v697 = vsel %vm696, %v693, %v695
    %v698 = vsel %vm696, %v691, %v693
    %v699 = vsel %vm696, %v689, %v691
    %v700 = vsel %vm696, %v687, %v689
    %v701 = vsel %vm696, %v685, %v687
    %v702 = vsel %vm696, %v683, %v685
    %v703 = vsel %vm696, %v681, %v683
    %v704 = vsel %vm696, %v679, %v681
    %v705 = vsel %vm696, %v677, %v679
    %v706 = vsel %vm696, %v675, %v677
    %v707 = vsel %vm696, %v673, %v675
    %v708 = vsel %vm696, %v695, %v673
    %vm709 = vcmp.lt.s32.totalorder %v30, 1488
    %vm710 = vcmp.lt.s32.totalorder %v31, 1488
    %vm711 = vcmp.lt.s32.totalorder %v32, 1488
    %vm712 = vcmp.lt.s32.totalorder %v33, 1488
    %vm713 = vcmp.lt.s32.totalorder %v34, 1488
    %vm714 = vcmp.lt.s32.totalorder %v35, 1488
    %vm715 = vcmp.lt.s32.totalorder %v36, 1488
    %vm716 = vcmp.lt.s32.totalorder %v37, 1488
    %vm717 = vcmp.lt.s32.totalorder %v38, 1488
    %vm718 = vcmp.lt.s32.totalorder %v39, 1488
    %vm719 = vcmp.lt.s32.totalorder %v40, 1488
    %vm720 = vcmp.lt.s32.totalorder %v41, 1488
    %v721 = vsel %vm709, 1, 0
    %v722 = vsel %vm710, 1, 0
    %v723 = vsel %vm711, 1, 0
    %v724 = vsel %vm712, 1, 0
    %v725 = vsel %vm713, 1, 0
    %v726 = vsel %vm714, 1, 0
    %v727 = vsel %vm715, 1, 0
    %v728 = vsel %vm716, 1, 0
    %v729 = vsel %vm717, 1, 0
    %v730 = vsel %vm718, 1, 0
    %v731 = vsel %vm719, 1, 0
    %v732 = vsel %vm720, 1, 0
    %vm733 = vcmp.eq.s32.totalorder %v721, 1
    %vm734 = vcmp.eq.s32.totalorder %v722, 1
    %vm735 = vcmp.eq.s32.totalorder %v723, 1
    %vm736 = vcmp.eq.s32.totalorder %v724, 1
    %vm737 = vcmp.eq.s32.totalorder %v725, 1
    %vm738 = vcmp.eq.s32.totalorder %v726, 1
    %vm739 = vcmp.eq.s32.totalorder %v727, 1
    %vm740 = vcmp.eq.s32.totalorder %v728, 1
    %vm741 = vcmp.eq.s32.totalorder %v729, 1
    %vm742 = vcmp.eq.s32.totalorder %v730, 1
    %vm743 = vcmp.eq.s32.totalorder %v731, 1
    %vm744 = vcmp.eq.s32.totalorder %v732, 1
    %v745 = vsel %vm733, %v707, 0.0
    %v746 = vsel %vm734, %v706, 0.0
    %v747 = vsel %vm735, %v705, 0.0
    %v748 = vsel %vm736, %v704, 0.0
    %v749 = vsel %vm737, %v703, 0.0
    %v750 = vsel %vm738, %v702, 0.0
    %v751 = vsel %vm739, %v701, 0.0
    %v752 = vsel %vm740, %v700, 0.0
    %v753 = vsel %vm741, %v699, 0.0
    %v754 = vsel %vm742, %v698, 0.0
    %v755 = vsel %vm743, %v697, 0.0
    %v756 = vsel %vm744, %v708, 0.0
    %v769 = vrot.slane %v746, 6
    %v770 = vrot.slane %v747, 4
    %v771 = vrot.slane %v748, 2
    %v772 = vrot.slane %v750, 6
    %v773 = vrot.slane %v751, 4
    %v774 = vrot.slane %v752, 2
    %v775 = vrot.slane %v754, 6
    %v776 = vrot.slane %v755, 4
    %v777 = vrot.slane %v756, 2
    %v778 = vsel %vm179, %v745, %v769
    %v779 = vsel %vm181, %v770, %v771
    %v780 = vsel %vm183, %v778, %v779
    %v781 = vsel %vm179, %v749, %v772
    %v782 = vsel %vm181, %v773, %v774
    %v783 = vsel %vm183, %v781, %v782
    %v784 = vsel %vm179, %v753, %v775
    %v785 = vsel %vm181, %v776, %v777
    %v786 = vsel %vm183, %v784, %v785
    %v790 = vadd.f32 %v641, %v780
    %v791 = vadd.f32 %v642, %v783
    %v792 = vadd.f32 %v643, %v786
    %793 = vst [vmem:[#allocation1] ss:$4 sm:$0xff] %v26
    %s794 = scalar_lea.vmem [#allocation1], 32
    %795 = vst [vmem:[%s794] ss:$4 sm:$0xff] %v27
    %v796 = vld.sshfl [vmem:[#allocation1] sm:$0xff pattern:$0x73625140]
    %v797 = vld.sshfl [vmem:[#allocation1 + $0x8] sm:$0xff pattern:$0x73625140]
    %v798 = vld.sshfl [vmem:[#allocation1 + $0x10] sm:$0xff pattern:$0x73625140]
    %v799 = vld.sshfl [vmem:[#allocation1 + $0x18] sm:$0xff pattern:$0x73625140]
    %v800 = vld.sshfl [vmem:[#allocation1 + $0x20] sm:$0xff pattern:$0x73625140]
    %v801 = vld.sshfl [vmem:[#allocation1 + $0x28] sm:$0xff pattern:$0x73625140]
    %v802 = vld.sshfl [vmem:[#allocation1 + $0x30] sm:$0xff pattern:$0x73625140]
    %v803 = vld.sshfl [vmem:[#allocation1 + $0x38] sm:$0xff pattern:$0x73625140]
    %804 = vst [vmem:[#allocation1] ss:$4 sm:$0xff] %v28
    %v805 = vld.sshfl [vmem:[#allocation1] sm:$0xff pattern:$0x73625140]
    %v806 = vld.sshfl [vmem:[#allocation1 + $0x8] sm:$0xff pattern:$0x73625140]
    %v807 = vld.sshfl [vmem:[#allocation1 + $0x10] sm:$0xff pattern:$0x73625140]
    %v808 = vld.sshfl [vmem:[#allocation1 + $0x18] sm:$0xff pattern:$0x73625140]
    %821 = vrot.lane.b32.xlu0 %v796, 48
    %v822 = vpop.permute.xlu0 %821
    %823 = vrot.lane.b32.xlu0 %v797, 48
    %v824 = vpop.permute.xlu0 %823
    %825 = vrot.lane.b32.xlu0 %v798, 48
    %v826 = vpop.permute.xlu0 %825
    %827 = vrot.lane.b32.xlu0 %v799, 48
    %v828 = vpop.permute.xlu0 %827
    %829 = vrot.lane.b32.xlu0 %v800, 48
    %v830 = vpop.permute.xlu0 %829
    %831 = vrot.lane.b32.xlu0 %v801, 48
    %v832 = vpop.permute.xlu0 %831
    %833 = vrot.lane.b32.xlu0 %v802, 48
    %v834 = vpop.permute.xlu0 %833
    %835 = vrot.lane.b32.xlu0 %v803, 48
    %v836 = vpop.permute.xlu0 %835
    %837 = vrot.lane.b32.xlu0 %v805, 48
    %v838 = vpop.permute.xlu0 %837
    %839 = vrot.lane.b32.xlu0 %v806, 48
    %v840 = vpop.permute.xlu0 %839
    %841 = vrot.lane.b32.xlu0 %v807, 48
    %v842 = vpop.permute.xlu0 %841
    %843 = vrot.lane.b32.xlu0 %v808, 48
    %v844 = vpop.permute.xlu0 %843
    %vm845 = vcmp.lt.s32.totalorder %v30, 48
    %v846 = vsel %vm845, %v842, %v844
    %v847 = vsel %vm845, %v840, %v842
    %v848 = vsel %vm845, %v838, %v840
    %v849 = vsel %vm845, %v836, %v838
    %v850 = vsel %vm845, %v834, %v836
    %v851 = vsel %vm845, %v832, %v834
    %v852 = vsel %vm845, %v830, %v832
    %v853 = vsel %vm845, %v828, %v830
    %v854 = vsel %vm845, %v826, %v828
    %v855 = vsel %vm845, %v824, %v826
    %v856 = vsel %vm845, %v822, %v824
    %v857 = vsel %vm845, %v844, %v822
    %vm858 = vcmp.ge.s32.totalorder %v30, 48
    %vm859 = vcmp.ge.s32.totalorder %v31, 48
    %vm860 = vcmp.ge.s32.totalorder %v32, 48
    %vm861 = vcmp.ge.s32.totalorder %v33, 48
    %vm862 = vcmp.ge.s32.totalorder %v34, 48
    %vm863 = vcmp.ge.s32.totalorder %v35, 48
    %vm864 = vcmp.ge.s32.totalorder %v36, 48
    %vm865 = vcmp.ge.s32.totalorder %v37, 48
    %vm866 = vcmp.ge.s32.totalorder %v38, 48
    %vm867 = vcmp.ge.s32.totalorder %v39, 48
    %vm868 = vcmp.ge.s32.totalorder %v40, 48
    %vm869 = vcmp.ge.s32.totalorder %v41, 48
    %v870 = vsel %vm858, 1, 0
    %v871 = vsel %vm859, 1, 0
    %v872 = vsel %vm860, 1, 0
    %v873 = vsel %vm861, 1, 0
    %v874 = vsel %vm862, 1, 0
    %v875 = vsel %vm863, 1, 0
    %v876 = vsel %vm864, 1, 0
    %v877 = vsel %vm865, 1, 0
    %v878 = vsel %vm866, 1, 0
    %v879 = vsel %vm867, 1, 0
    %v880 = vsel %vm868, 1, 0
    %v881 = vsel %vm869, 1, 0
    %vm882 = vcmp.eq.s32.totalorder %v870, 1
    %vm883 = vcmp.eq.s32.totalorder %v871, 1
    %vm884 = vcmp.eq.s32.totalorder %v872, 1
    %vm885 = vcmp.eq.s32.totalorder %v873, 1
    %vm886 = vcmp.eq.s32.totalorder %v874, 1
    %vm887 = vcmp.eq.s32.totalorder %v875, 1
    %vm888 = vcmp.eq.s32.totalorder %v876, 1
    %vm889 = vcmp.eq.s32.totalorder %v877, 1
    %vm890 = vcmp.eq.s32.totalorder %v878, 1
    %vm891 = vcmp.eq.s32.totalorder %v879, 1
    %vm892 = vcmp.eq.s32.totalorder %v880, 1
    %vm893 = vcmp.eq.s32.totalorder %v881, 1
    %v894 = vsel %vm882, %v857, 0.0
    %v895 = vsel %vm883, %v856, 0.0
    %v896 = vsel %vm884, %v855, 0.0
    %v897 = vsel %vm885, %v854, 0.0
    %v898 = vsel %vm886, %v853, 0.0
    %v899 = vsel %vm887, %v852, 0.0
    %v900 = vsel %vm888, %v851, 0.0
    %v901 = vsel %vm889, %v850, 0.0
    %v902 = vsel %vm890, %v849, 0.0
    %v903 = vsel %vm891, %v848, 0.0
    %v904 = vsel %vm892, %v847, 0.0
    %v905 = vsel %vm893, %v846, 0.0
    %v918 = vrot.slane %v895, 6
    %v919 = vrot.slane %v896, 4
    %v920 = vrot.slane %v897, 2
    %v921 = vrot.slane %v899, 6
    %v922 = vrot.slane %v900, 4
    %v923 = vrot.slane %v901, 2
    %v924 = vrot.slane %v903, 6
    %v925 = vrot.slane %v904, 4
    %v926 = vrot.slane %v905, 2
    %v927 = vsel %vm179, %v894, %v918
    %v928 = vsel %vm181, %v919, %v920
    %v929 = vsel %vm183, %v927, %v928
    %v930 = vsel %vm179, %v898, %v921
    %v931 = vsel %vm181, %v922, %v923
    %v932 = vsel %vm183, %v930, %v931
    %v933 = vsel %vm179, %v902, %v924
    %v934 = vsel %vm181, %v925, %v926
    %v935 = vsel %vm183, %v933, %v934
    %v939 = vadd.f32 %v790, %v929
    %v940 = vadd.f32 %v791, %v932
    %v941 = vadd.f32 %v792, %v935
    %942 = vst [vmem:[#allocation1] ss:$4 sm:$0xff] %v26
    %s943 = scalar_lea.vmem [#allocation1], 32
    %944 = vst [vmem:[%s943] ss:$4 sm:$0xff] %v27
    %v945 = vld.sshfl [vmem:[#allocation1] sm:$0xff pattern:$0x73625140]
    %v946 = vld.sshfl [vmem:[#allocation1 + $0x8] sm:$0xff pattern:$0x73625140]
    %v947 = vld.sshfl [vmem:[#allocation1 + $0x10] sm:$0xff pattern:$0x73625140]
    %v948 = vld.sshfl [vmem:[#allocation1 + $0x18] sm:$0xff pattern:$0x73625140]
    %v949 = vld.sshfl [vmem:[#allocation1 + $0x20] sm:$0xff pattern:$0x73625140]
    %v950 = vld.sshfl [vmem:[#allocation1 + $0x28] sm:$0xff pattern:$0x73625140]
    %v951 = vld.sshfl [vmem:[#allocation1 + $0x30] sm:$0xff pattern:$0x73625140]
    %v952 = vld.sshfl [vmem:[#allocation1 + $0x38] sm:$0xff pattern:$0x73625140]
    %953 = vst [vmem:[#allocation1] ss:$4 sm:$0xff] %v28
    %v954 = vld.sshfl [vmem:[#allocation1] sm:$0xff pattern:$0x73625140]
    %v955 = vld.sshfl [vmem:[#allocation1 + $0x8] sm:$0xff pattern:$0x73625140]
    %v956 = vld.sshfl [vmem:[#allocation1 + $0x10] sm:$0xff pattern:$0x73625140]
    %v957 = vld.sshfl [vmem:[#allocation1 + $0x18] sm:$0xff pattern:$0x73625140]
    %970 = vrot.lane.b32.xlu0 %v945, 64
    %v971 = vpop.permute.xlu0 %970
    %972 = vrot.lane.b32.xlu0 %v946, 64
    %v973 = vpop.permute.xlu0 %972
    %974 = vrot.lane.b32.xlu0 %v947, 64
    %v975 = vpop.permute.xlu0 %974
    %976 = vrot.lane.b32.xlu0 %v948, 64
    %v977 = vpop.permute.xlu0 %976
    %978 = vrot.lane.b32.xlu0 %v949, 64
    %v979 = vpop.permute.xlu0 %978
    %980 = vrot.lane.b32.xlu0 %v950, 64
    %v981 = vpop.permute.xlu0 %980
    %982 = vrot.lane.b32.xlu0 %v951, 64
    %v983 = vpop.permute.xlu0 %982
    %984 = vrot.lane.b32.xlu0 %v952, 64
    %v985 = vpop.permute.xlu0 %984
    %986 = vrot.lane.b32.xlu0 %v954, 64
    %v987 = vpop.permute.xlu0 %986
    %988 = vrot.lane.b32.xlu0 %v955, 64
    %v989 = vpop.permute.xlu0 %988
    %990 = vrot.lane.b32.xlu0 %v956, 64
    %v991 = vpop.permute.xlu0 %990
    %992 = vrot.lane.b32.xlu0 %v957, 64
    %v993 = vpop.permute.xlu0 %992
    %vm994 = vcmp.lt.s32.totalorder %v30, 64
    %v995 = vsel %vm994, %v991, %v993
    %v996 = vsel %vm994, %v989, %v991
    %v997 = vsel %vm994, %v987, %v989
    %v998 = vsel %vm994, %v985, %v987
    %v999 = vsel %vm994, %v983, %v985
    %v1000 = vsel %vm994, %v981, %v983
    %v1001 = vsel %vm994, %v979, %v981
    %v1002 = vsel %vm994, %v977, %v979
    %v1003 = vsel %vm994, %v975, %v977
    %v1004 = vsel %vm994, %v973, %v975
    %v1005 = vsel %vm994, %v971, %v973
    %v1006 = vsel %vm994, %v993, %v971
    %vm1007 = vcmp.lt.s32.totalorder %v30, 1472
    %vm1008 = vcmp.lt.s32.totalorder %v31, 1472
    %vm1009 = vcmp.lt.s32.totalorder %v32, 1472
    %vm1010 = vcmp.lt.s32.totalorder %v33, 1472
    %vm1011 = vcmp.lt.s32.totalorder %v34, 1472
    %vm1012 = vcmp.lt.s32.totalorder %v35, 1472
    %vm1013 = vcmp.lt.s32.totalorder %v36, 1472
    %vm1014 = vcmp.lt.s32.totalorder %v37, 1472
    %vm1015 = vcmp.lt.s32.totalorder %v38, 1472
    %vm1016 = vcmp.lt.s32.totalorder %v39, 1472
    %vm1017 = vcmp.lt.s32.totalorder %v40, 1472
    %vm1018 = vcmp.lt.s32.totalorder %v41, 1472
    %v1019 = vsel %vm1007, 1, 0
    %v1020 = vsel %vm1008, 1, 0
    %v1021 = vsel %vm1009, 1, 0
    %v1022 = vsel %vm1010, 1, 0
    %v1023 = vsel %vm1011, 1, 0
    %v1024 = vsel %vm1012, 1, 0
    %v1025 = vsel %vm1013, 1, 0
    %v1026 = vsel %vm1014, 1, 0
    %v1027 = vsel %vm1015, 1, 0
    %v1028 = vsel %vm1016, 1, 0
    %v1029 = vsel %vm1017, 1, 0
    %v1030 = vsel %vm1018, 1, 0
    %vm1031 = vcmp.eq.s32.totalorder %v1019, 1
    %vm1032 = vcmp.eq.s32.totalorder %v1020, 1
    %vm1033 = vcmp.eq.s32.totalorder %v1021, 1
    %vm1034 = vcmp.eq.s32.totalorder %v1022, 1
    %vm1035 = vcmp.eq.s32.totalorder %v1023, 1
    %vm1036 = vcmp.eq.s32.totalorder %v1024, 1
    %vm1037 = vcmp.eq.s32.totalorder %v1025, 1
    %vm1038 = vcmp.eq.s32.totalorder %v1026, 1
    %vm1039 = vcmp.eq.s32.totalorder %v1027, 1
    %vm1040 = vcmp.eq.s32.totalorder %v1028, 1
    %vm1041 = vcmp.eq.s32.totalorder %v1029, 1
    %vm1042 = vcmp.eq.s32.totalorder %v1030, 1
    %v1043 = vsel %vm1031, %v1005, 0.0
    %v1044 = vsel %vm1032, %v1004, 0.0
    %v1045 = vsel %vm1033, %v1003, 0.0
    %v1046 = vsel %vm1034, %v1002, 0.0
    %v1047 = vsel %vm1035, %v1001, 0.0
    %v1048 = vsel %vm1036, %v1000, 0.0
    %v1049 = vsel %vm1037, %v999, 0.0
    %v1050 = vsel %vm1038, %v998, 0.0
    %v1051 = vsel %vm1039, %v997, 0.0
    %v1052 = vsel %vm1040, %v996, 0.0
    %v1053 = vsel %vm1041, %v995, 0.0
    %v1054 = vsel %vm1042, %v1006, 0.0
    %v1067 = vrot.slane %v1044, 6
    %v1068 = vrot.slane %v1045, 4
    %v1069 = vrot.slane %v1046, 2
    %v1070 = vrot.slane %v1048, 6
    %v1071 = vrot.slane %v1049, 4
    %v1072 = vrot.slane %v1050, 2
    %v1073 = vrot.slane %v1052, 6
    %v1074 = vrot.slane %v1053, 4
    %v1075 = vrot.slane %v1054, 2
    %v1076 = vsel %vm179, %v1043, %v1067
    %v1077 = vsel %vm181, %v1068, %v1069
    %v1078 = vsel %vm183, %v1076, %v1077
    %v1079 = vsel %vm179, %v1047, %v1070
    %v1080 = vsel %vm181, %v1071, %v1072
    %v1081 = vsel %vm183, %v1079, %v1080
    %v1082 = vsel %vm179, %v1051, %v1073
    %v1083 = vsel %vm181, %v1074, %v1075
    %v1084 = vsel %vm183, %v1082, %v1083
    %v1088 = vadd.f32 %v939, %v1078
    %v1089 = vadd.f32 %v940, %v1081
    %v1090 = vadd.f32 %v941, %v1084
    %1091 = vst [vmem:[#allocation1] ss:$4 sm:$0xff] %v26
    %s1092 = scalar_lea.vmem [#allocation1], 32
    %1093 = vst [vmem:[%s1092] ss:$4 sm:$0xff] %v27
    %v1094 = vld.sshfl [vmem:[#allocation1] sm:$0xff pattern:$0x73625140]
    %v1095 = vld.sshfl [vmem:[#allocation1 + $0x8] sm:$0xff pattern:$0x73625140]
    %v1096 = vld.sshfl [vmem:[#allocation1 + $0x10] sm:$0xff pattern:$0x73625140]
    %v1097 = vld.sshfl [vmem:[#allocation1 + $0x18] sm:$0xff pattern:$0x73625140]
    %v1098 = vld.sshfl [vmem:[#allocation1 + $0x20] sm:$0xff pattern:$0x73625140]
    %v1099 = vld.sshfl [vmem:[#allocation1 + $0x28] sm:$0xff pattern:$0x73625140]
    %v1100 = vld.sshfl [vmem:[#allocation1 + $0x30] sm:$0xff pattern:$0x73625140]
    %v1101 = vld.sshfl [vmem:[#allocation1 + $0x38] sm:$0xff pattern:$0x73625140]
    %1102 = vst [vmem:[#allocation1] ss:$4 sm:$0xff] %v28
    %v1103 = vld.sshfl [vmem:[#allocation1] sm:$0xff pattern:$0x73625140]
    %v1104 = vld.sshfl [vmem:[#allocation1 + $0x8] sm:$0xff pattern:$0x73625140]
    %v1105 = vld.sshfl [vmem:[#allocation1 + $0x10] sm:$0xff pattern:$0x73625140]
    %v1106 = vld.sshfl [vmem:[#allocation1 + $0x18] sm:$0xff pattern:$0x73625140]
    %1119 = vrot.lane.b32.xlu0 %v1094, 64
    %v1120 = vpop.permute.xlu0 %1119
    %1121 = vrot.lane.b32.xlu0 %v1095, 64
    %v1122 = vpop.permute.xlu0 %1121
    %1123 = vrot.lane.b32.xlu0 %v1096, 64
    %v1124 = vpop.permute.xlu0 %1123
    %1125 = vrot.lane.b32.xlu0 %v1097, 64
    %v1126 = vpop.permute.xlu0 %1125
    %1127 = vrot.lane.b32.xlu0 %v1098, 64
    %v1128 = vpop.permute.xlu0 %1127
    %1129 = vrot.lane.b32.xlu0 %v1099, 64
    %v1130 = vpop.permute.xlu0 %1129
    %1131 = vrot.lane.b32.xlu0 %v1100, 64
    %v1132 = vpop.permute.xlu0 %1131
    %1133 = vrot.lane.b32.xlu0 %v1101, 64
    %v1134 = vpop.permute.xlu0 %1133
    %1135 = vrot.lane.b32.xlu0 %v1103, 64
    %v1136 = vpop.permute.xlu0 %1135
    %1137 = vrot.lane.b32.xlu0 %v1104, 64
    %v1138 = vpop.permute.xlu0 %1137
    %1139 = vrot.lane.b32.xlu0 %v1105, 64
    %v1140 = vpop.permute.xlu0 %1139
    %1141 = vrot.lane.b32.xlu0 %v1106, 64
    %v1142 = vpop.permute.xlu0 %1141
    %v1143 = vsel %vm994, %v1140, %v1142
    %v1144 = vsel %vm994, %v1138, %v1140
    %v1145 = vsel %vm994, %v1136, %v1138
    %v1146 = vsel %vm994, %v1134, %v1136
    %v1147 = vsel %vm994, %v1132, %v1134
    %v1148 = vsel %vm994, %v1130, %v1132
    %v1149 = vsel %vm994, %v1128, %v1130
    %v1150 = vsel %vm994, %v1126, %v1128
    %v1151 = vsel %vm994, %v1124, %v1126
    %v1152 = vsel %vm994, %v1122, %v1124
    %v1153 = vsel %vm994, %v1120, %v1122
    %v1154 = vsel %vm994, %v1142, %v1120
    %vm1155 = vcmp.ge.s32.totalorder %v30, 64
    %vm1156 = vcmp.ge.s32.totalorder %v31, 64
    %vm1157 = vcmp.ge.s32.totalorder %v32, 64
    %vm1158 = vcmp.ge.s32.totalorder %v33, 64
    %vm1159 = vcmp.ge.s32.totalorder %v34, 64
    %vm1160 = vcmp.ge.s32.totalorder %v35, 64
    %vm1161 = vcmp.ge.s32.totalorder %v36, 64
    %vm1162 = vcmp.ge.s32.totalorder %v37, 64
    %vm1163 = vcmp.ge.s32.totalorder %v38, 64
    %vm1164 = vcmp.ge.s32.totalorder %v39, 64
    %vm1165 = vcmp.ge.s32.totalorder %v40, 64
    %vm1166 = vcmp.ge.s32.totalorder %v41, 64
    %v1167 = vsel %vm1155, 1, 0
    %v1168 = vsel %vm1156, 1, 0
    %v1169 = vsel %vm1157, 1, 0
    %v1170 = vsel %vm1158, 1, 0
    %v1171 = vsel %vm1159, 1, 0
    %v1172 = vsel %vm1160, 1, 0
    %v1173 = vsel %vm1161, 1, 0
    %v1174 = vsel %vm1162, 1, 0
    %v1175 = vsel %vm1163, 1, 0
    %v1176 = vsel %vm1164, 1, 0
    %v1177 = vsel %vm1165, 1, 0
    %v1178 = vsel %vm1166, 1, 0
    %vm1179 = vcmp.eq.s32.totalorder %v1167, 1
    %vm1180 = vcmp.eq.s32.totalorder %v1168, 1
    %vm1181 = vcmp.eq.s32.totalorder %v1169, 1
    %vm1182 = vcmp.eq.s32.totalorder %v1170, 1
    %vm1183 = vcmp.eq.s32.totalorder %v1171, 1
    %vm1184 = vcmp.eq.s32.totalorder %v1172, 1
    %vm1185 = vcmp.eq.s32.totalorder %v1173, 1
    %vm1186 = vcmp.eq.s32.totalorder %v1174, 1
    %vm1187 = vcmp.eq.s32.totalorder %v1175, 1
    %vm1188 = vcmp.eq.s32.totalorder %v1176, 1
    %vm1189 = vcmp.eq.s32.totalorder %v1177, 1
    %vm1190 = vcmp.eq.s32.totalorder %v1178, 1
    %v1191 = vsel %vm1179, %v1154, 0.0
    %v1192 = vsel %vm1180, %v1153, 0.0
    %v1193 = vsel %vm1181, %v1152, 0.0
    %v1194 = vsel %vm1182, %v1151, 0.0
    %v1195 = vsel %vm1183, %v1150, 0.0
    %v1196 = vsel %vm1184, %v1149, 0.0
    %v1197 = vsel %vm1185, %v1148, 0.0
    %v1198 = vsel %vm1186, %v1147, 0.0
    %v1199 = vsel %vm1187, %v1146, 0.0
    %v1200 = vsel %vm1188, %v1145, 0.0
    %v1201 = vsel %vm1189, %v1144, 0.0
    %v1202 = vsel %vm1190, %v1143, 0.0
    %v1215 = vrot.slane %v1192, 6
    %v1216 = vrot.slane %v1193, 4
    %v1217 = vrot.slane %v1194, 2
    %v1218 = vrot.slane %v1196, 6
    %v1219 = vrot.slane %v1197, 4
    %v1220 = vrot.slane %v1198, 2
    %v1221 = vrot.slane %v1200, 6
    %v1222 = vrot.slane %v1201, 4
    %v1223 = vrot.slane %v1202, 2
    %v1224 = vsel %vm179, %v1191, %v1215
    %v1225 = vsel %vm181, %v1216, %v1217
    %v1226 = vsel %vm183, %v1224, %v1225
    %v1227 = vsel %vm179, %v1195, %v1218
    %v1228 = vsel %vm181, %v1219, %v1220
    %v1229 = vsel %vm183, %v1227, %v1228
    %v1230 = vsel %vm179, %v1199, %v1221
    %v1231 = vsel %vm181, %v1222, %v1223
    %v1232 = vsel %vm183, %v1230, %v1231
    %v1236 = vadd.f32 %v1088, %v1226
    %v1237 = vadd.f32 %v1089, %v1229
    %v1238 = vadd.f32 %v1090, %v1232
    %1239 = vst [vmem:[#allocation1] ss:$4 sm:$0xff] %v26
    %s1240 = scalar_lea.vmem [#allocation1], 32
    %1241 = vst [vmem:[%s1240] ss:$4 sm:$0xff] %v27
    %v1242 = vld.sshfl [vmem:[#allocation1] sm:$0xff pattern:$0x73625140]
    %v1243 = vld.sshfl [vmem:[#allocation1 + $0x8] sm:$0xff pattern:$0x73625140]
    %v1244 = vld.sshfl [vmem:[#allocation1 + $0x10] sm:$0xff pattern:$0x73625140]
    %v1245 = vld.sshfl [vmem:[#allocation1 + $0x18] sm:$0xff pattern:$0x73625140]
    %v1246 = vld.sshfl [vmem:[#allocation1 + $0x20] sm:$0xff pattern:$0x73625140]
    %v1247 = vld.sshfl [vmem:[#allocation1 + $0x28] sm:$0xff pattern:$0x73625140]
    %v1248 = vld.sshfl [vmem:[#allocation1 + $0x30] sm:$0xff pattern:$0x73625140]
    %v1249 = vld.sshfl [vmem:[#allocation1 + $0x38] sm:$0xff pattern:$0x73625140]
    %1250 = vst [vmem:[#allocation1] ss:$4 sm:$0xff] %v28
    %v1251 = vld.sshfl [vmem:[#allocation1] sm:$0xff pattern:$0x73625140]
    %v1252 = vld.sshfl [vmem:[#allocation1 + $0x8] sm:$0xff pattern:$0x73625140]
    %v1253 = vld.sshfl [vmem:[#allocation1 + $0x10] sm:$0xff pattern:$0x73625140]
    %v1254 = vld.sshfl [vmem:[#allocation1 + $0x18] sm:$0xff pattern:$0x73625140]
    %1267 = vrot.lane.b32.xlu0 %v1242, 48
    %v1268 = vpop.permute.xlu0 %1267
    %1269 = vrot.lane.b32.xlu0 %v1243, 48
    %v1270 = vpop.permute.xlu0 %1269
    %1271 = vrot.lane.b32.xlu0 %v1244, 48
    %v1272 = vpop.permute.xlu0 %1271
    %1273 = vrot.lane.b32.xlu0 %v1245, 48
    %v1274 = vpop.permute.xlu0 %1273
    %1275 = vrot.lane.b32.xlu0 %v1246, 48
    %v1276 = vpop.permute.xlu0 %1275
    %1277 = vrot.lane.b32.xlu0 %v1247, 48
    %v1278 = vpop.permute.xlu0 %1277
    %1279 = vrot.lane.b32.xlu0 %v1248, 48
    %v1280 = vpop.permute.xlu0 %1279
    %1281 = vrot.lane.b32.xlu0 %v1249, 48
    %v1282 = vpop.permute.xlu0 %1281
    %1283 = vrot.lane.b32.xlu0 %v1251, 48
    %v1284 = vpop.permute.xlu0 %1283
    %1285 = vrot.lane.b32.xlu0 %v1252, 48
    %v1286 = vpop.permute.xlu0 %1285
    %1287 = vrot.lane.b32.xlu0 %v1253, 48
    %v1288 = vpop.permute.xlu0 %1287
    %1289 = vrot.lane.b32.xlu0 %v1254, 48
    %v1290 = vpop.permute.xlu0 %1289
    %v1291 = vsel %vm845, %v1288, %v1290
    %v1292 = vsel %vm845, %v1286, %v1288
    %v1293 = vsel %vm845, %v1284, %v1286
    %v1294 = vsel %vm845, %v1282, %v1284
    %v1295 = vsel %vm845, %v1280, %v1282
    %v1296 = vsel %vm845, %v1278, %v1280
    %v1297 = vsel %vm845, %v1276, %v1278
    %v1298 = vsel %vm845, %v1274, %v1276
    %v1299 = vsel %vm845, %v1272, %v1274
    %v1300 = vsel %vm845, %v1270, %v1272
    %v1301 = vsel %vm845, %v1268, %v1270
    %v1302 = vsel %vm845, %v1290, %v1268
    %vm1303 = vcmp.lt.s32.totalorder %v30, 1456
    %vm1304 = vcmp.lt.s32.totalorder %v31, 1456
    %vm1305 = vcmp.lt.s32.totalorder %v32, 1456
    %vm1306 = vcmp.lt.s32.totalorder %v33, 1456
    %vm1307 = vcmp.lt.s32.totalorder %v34, 1456
    %vm1308 = vcmp.lt.s32.totalorder %v35, 1456
    %vm1309 = vcmp.lt.s32.totalorder %v36, 1456
    %vm1310 = vcmp.lt.s32.totalorder %v37, 1456
    %vm1311 = vcmp.lt.s32.totalorder %v38, 1456
    %vm1312 = vcmp.lt.s32.totalorder %v39, 1456
    %vm1313 = vcmp.lt.s32.totalorder %v40, 1456
    %vm1314 = vcmp.lt.s32.totalorder %v41, 1456
    %v1315 = vsel %vm1303, 1, 0
    %v1316 = vsel %vm1304, 1, 0
    %v1317 = vsel %vm1305, 1, 0
    %v1318 = vsel %vm1306, 1, 0
    %v1319 = vsel %vm1307, 1, 0
    %v1320 = vsel %vm1308, 1, 0
    %v1321 = vsel %vm1309, 1, 0
    %v1322 = vsel %vm1310, 1, 0
    %v1323 = vsel %vm1311, 1, 0
    %v1324 = vsel %vm1312, 1, 0
    %v1325 = vsel %vm1313, 1, 0
    %v1326 = vsel %vm1314, 1, 0
    %vm1327 = vcmp.eq.s32.totalorder %v1315, 1
    %vm1328 = vcmp.eq.s32.totalorder %v1316, 1
    %vm1329 = vcmp.eq.s32.totalorder %v1317, 1
    %vm1330 = vcmp.eq.s32.totalorder %v1318, 1
    %vm1331 = vcmp.eq.s32.totalorder %v1319, 1
    %vm1332 = vcmp.eq.s32.totalorder %v1320, 1
    %vm1333 = vcmp.eq.s32.totalorder %v1321, 1
    %vm1334 = vcmp.eq.s32.totalorder %v1322, 1
    %vm1335 = vcmp.eq.s32.totalorder %v1323, 1
    %vm1336 = vcmp.eq.s32.totalorder %v1324, 1
    %vm1337 = vcmp.eq.s32.totalorder %v1325, 1
    %vm1338 = vcmp.eq.s32.totalorder %v1326, 1
    %v1339 = vsel %vm1327, %v1301, 0.0
    %v1340 = vsel %vm1328, %v1300, 0.0
    %v1341 = vsel %vm1329, %v1299, 0.0
    %v1342 = vsel %vm1330, %v1298, 0.0
    %v1343 = vsel %vm1331, %v1297, 0.0
    %v1344 = vsel %vm1332, %v1296, 0.0
    %v1345 = vsel %vm1333, %v1295, 0.0
    %v1346 = vsel %vm1334, %v1294, 0.0
    %v1347 = vsel %vm1335, %v1293, 0.0
    %v1348 = vsel %vm1336, %v1292, 0.0
    %v1349 = vsel %vm1337, %v1291, 0.0
    %v1350 = vsel %vm1338, %v1302, 0.0
    %v1363 = vrot.slane %v1340, 6
    %v1364 = vrot.slane %v1341, 4
    %v1365 = vrot.slane %v1342, 2
    %v1366 = vrot.slane %v1344, 6
    %v1367 = vrot.slane %v1345, 4
    %v1368 = vrot.slane %v1346, 2
    %v1369 = vrot.slane %v1348, 6
    %v1370 = vrot.slane %v1349, 4
    %v1371 = vrot.slane %v1350, 2
    %v1372 = vsel %vm179, %v1339, %v1363
    %v1373 = vsel %vm181, %v1364, %v1365
    %v1374 = vsel %vm183, %v1372, %v1373
    %v1375 = vsel %vm179, %v1343, %v1366
    %v1376 = vsel %vm181, %v1367, %v1368
    %v1377 = vsel %vm183, %v1375, %v1376
    %v1378 = vsel %vm179, %v1347, %v1369
    %v1379 = vsel %vm181, %v1370, %v1371
    %v1380 = vsel %vm183, %v1378, %v1379
    %v1384 = vadd.f32 %v1236, %v1374
    %v1385 = vadd.f32 %v1237, %v1377
    %v1386 = vadd.f32 %v1238, %v1380
    %1387 = vst [vmem:[#allocation1] ss:$4 sm:$0xff] %v26
    %s1388 = scalar_lea.vmem [#allocation1], 32
    %1389 = vst [vmem:[%s1388] ss:$4 sm:$0xff] %v27
    %v1390 = vld.sshfl [vmem:[#allocation1] sm:$0xff pattern:$0x73625140]
    %v1391 = vld.sshfl [vmem:[#allocation1 + $0x8] sm:$0xff pattern:$0x73625140]
    %v1392 = vld.sshfl [vmem:[#allocation1 + $0x10] sm:$0xff pattern:$0x73625140]
    %v1393 = vld.sshfl [vmem:[#allocation1 + $0x18] sm:$0xff pattern:$0x73625140]
    %v1394 = vld.sshfl [vmem:[#allocation1 + $0x20] sm:$0xff pattern:$0x73625140]
    %v1395 = vld.sshfl [vmem:[#allocation1 + $0x28] sm:$0xff pattern:$0x73625140]
    %v1396 = vld.sshfl [vmem:[#allocation1 + $0x30] sm:$0xff pattern:$0x73625140]
    %v1397 = vld.sshfl [vmem:[#allocation1 + $0x38] sm:$0xff pattern:$0x73625140]
    %1398 = vst [vmem:[#allocation1] ss:$4 sm:$0xff] %v28
    %v1399 = vld.sshfl [vmem:[#allocation1] sm:$0xff pattern:$0x73625140]
    %v1400 = vld.sshfl [vmem:[#allocation1 + $0x8] sm:$0xff pattern:$0x73625140]
    %v1401 = vld.sshfl [vmem:[#allocation1 + $0x10] sm:$0xff pattern:$0x73625140]
    %v1402 = vld.sshfl [vmem:[#allocation1 + $0x18] sm:$0xff pattern:$0x73625140]
    %1415 = vrot.lane.b32.xlu0 %v1390, 80
    %v1416 = vpop.permute.xlu0 %1415
    %1417 = vrot.lane.b32.xlu0 %v1391, 80
    %v1418 = vpop.permute.xlu0 %1417
    %1419 = vrot.lane.b32.xlu0 %v1392, 80
    %v1420 = vpop.permute.xlu0 %1419
    %1421 = vrot.lane.b32.xlu0 %v1393, 80
    %v1422 = vpop.permute.xlu0 %1421
    %1423 = vrot.lane.b32.xlu0 %v1394, 80
    %v1424 = vpop.permute.xlu0 %1423
    %1425 = vrot.lane.b32.xlu0 %v1395, 80
    %v1426 = vpop.permute.xlu0 %1425
    %1427 = vrot.lane.b32.xlu0 %v1396, 80
    %v1428 = vpop.permute.xlu0 %1427
    %1429 = vrot.lane.b32.xlu0 %v1397, 80
    %v1430 = vpop.permute.xlu0 %1429
    %1431 = vrot.lane.b32.xlu0 %v1399, 80
    %v1432 = vpop.permute.xlu0 %1431
    %1433 = vrot.lane.b32.xlu0 %v1400, 80
    %v1434 = vpop.permute.xlu0 %1433
    %1435 = vrot.lane.b32.xlu0 %v1401, 80
    %v1436 = vpop.permute.xlu0 %1435
    %1437 = vrot.lane.b32.xlu0 %v1402, 80
    %v1438 = vpop.permute.xlu0 %1437
    %v1439 = vsel %vm696, %v1436, %v1438
    %v1440 = vsel %vm696, %v1434, %v1436
    %v1441 = vsel %vm696, %v1432, %v1434
    %v1442 = vsel %vm696, %v1430, %v1432
    %v1443 = vsel %vm696, %v1428, %v1430
    %v1444 = vsel %vm696, %v1426, %v1428
    %v1445 = vsel %vm696, %v1424, %v1426
    %v1446 = vsel %vm696, %v1422, %v1424
    %v1447 = vsel %vm696, %v1420, %v1422
    %v1448 = vsel %vm696, %v1418, %v1420
    %v1449 = vsel %vm696, %v1416, %v1418
    %v1450 = vsel %vm696, %v1438, %v1416
    %vm1451 = vcmp.ge.s32.totalorder %v30, 80
    %vm1452 = vcmp.ge.s32.totalorder %v31, 80
    %vm1453 = vcmp.ge.s32.totalorder %v32, 80
    %vm1454 = vcmp.ge.s32.totalorder %v33, 80
    %vm1455 = vcmp.ge.s32.totalorder %v34, 80
    %vm1456 = vcmp.ge.s32.totalorder %v35, 80
    %vm1457 = vcmp.ge.s32.totalorder %v36, 80
    %vm1458 = vcmp.ge.s32.totalorder %v37, 80
    %vm1459 = vcmp.ge.s32.totalorder %v38, 80
    %vm1460 = vcmp.ge.s32.totalorder %v39, 80
    %vm1461 = vcmp.ge.s32.totalorder %v40, 80
    %vm1462 = vcmp.ge.s32.totalorder %v41, 80
    %v1463 = vsel %vm1451, 1, 0
    %v1464 = vsel %vm1452, 1, 0
    %v1465 = vsel %vm1453, 1, 0
    %v1466 = vsel %vm1454, 1, 0
    %v1467 = vsel %vm1455, 1, 0
    %v1468 = vsel %vm1456, 1, 0
    %v1469 = vsel %vm1457, 1, 0
    %v1470 = vsel %vm1458, 1, 0
    %v1471 = vsel %vm1459, 1, 0
    %v1472 = vsel %vm1460, 1, 0
    %v1473 = vsel %vm1461, 1, 0
    %v1474 = vsel %vm1462, 1, 0
    %vm1475 = vcmp.eq.s32.totalorder %v1463, 1
    %vm1476 = vcmp.eq.s32.totalorder %v1464, 1
    %vm1477 = vcmp.eq.s32.totalorder %v1465, 1
    %vm1478 = vcmp.eq.s32.totalorder %v1466, 1
    %vm1479 = vcmp.eq.s32.totalorder %v1467, 1
    %vm1480 = vcmp.eq.s32.totalorder %v1468, 1
    %vm1481 = vcmp.eq.s32.totalorder %v1469, 1
    %vm1482 = vcmp.eq.s32.totalorder %v1470, 1
    %vm1483 = vcmp.eq.s32.totalorder %v1471, 1
    %vm1484 = vcmp.eq.s32.totalorder %v1472, 1
    %vm1485 = vcmp.eq.s32.totalorder %v1473, 1
    %vm1486 = vcmp.eq.s32.totalorder %v1474, 1
    %v1487 = vsel %vm1475, %v1450, 0.0
    %v1488 = vsel %vm1476, %v1449, 0.0
    %v1489 = vsel %vm1477, %v1448, 0.0
    %v1490 = vsel %vm1478, %v1447, 0.0
    %v1491 = vsel %vm1479, %v1446, 0.0
    %v1492 = vsel %vm1480, %v1445, 0.0
    %v1493 = vsel %vm1481, %v1444, 0.0
    %v1494 = vsel %vm1482, %v1443, 0.0
    %v1495 = vsel %vm1483, %v1442, 0.0
    %v1496 = vsel %vm1484, %v1441, 0.0
    %v1497 = vsel %vm1485, %v1440, 0.0
    %v1498 = vsel %vm1486, %v1439, 0.0
    %v1511 = vrot.slane %v1488, 6
    %v1512 = vrot.slane %v1489, 4
    %v1513 = vrot.slane %v1490, 2
    %v1514 = vrot.slane %v1492, 6
    %v1515 = vrot.slane %v1493, 4
    %v1516 = vrot.slane %v1494, 2
    %v1517 = vrot.slane %v1496, 6
    %v1518 = vrot.slane %v1497, 4
    %v1519 = vrot.slane %v1498, 2
    %v1520 = vsel %vm179, %v1487, %v1511
    %v1521 = vsel %vm181, %v1512, %v1513
    %v1522 = vsel %vm183, %v1520, %v1521
    %v1523 = vsel %vm179, %v1491, %v1514
    %v1524 = vsel %vm181, %v1515, %v1516
    %v1525 = vsel %vm183, %v1523, %v1524
    %v1526 = vsel %vm179, %v1495, %v1517
    %v1527 = vsel %vm181, %v1518, %v1519
    %v1528 = vsel %vm183, %v1526, %v1527
    %v1532 = vadd.f32 %v1384, %v1522
    %v1533 = vadd.f32 %v1385, %v1525
    %v1534 = vadd.f32 %v1386, %v1528
    %1535 = vst [vmem:[#allocation1] ss:$4 sm:$0xff] %v26
    %s1536 = scalar_lea.vmem [#allocation1], 32
    %1537 = vst [vmem:[%s1536] ss:$4 sm:$0xff] %v27
    %v1538 = vld.sshfl [vmem:[#allocation1] sm:$0xff pattern:$0x73625140]
    %v1539 = vld.sshfl [vmem:[#allocation1 + $0x8] sm:$0xff pattern:$0x73625140]
    %v1540 = vld.sshfl [vmem:[#allocation1 + $0x10] sm:$0xff pattern:$0x73625140]
    %v1541 = vld.sshfl [vmem:[#allocation1 + $0x18] sm:$0xff pattern:$0x73625140]
    %v1542 = vld.sshfl [vmem:[#allocation1 + $0x20] sm:$0xff pattern:$0x73625140]
    %v1543 = vld.sshfl [vmem:[#allocation1 + $0x28] sm:$0xff pattern:$0x73625140]
    %v1544 = vld.sshfl [vmem:[#allocation1 + $0x30] sm:$0xff pattern:$0x73625140]
    %v1545 = vld.sshfl [vmem:[#allocation1 + $0x38] sm:$0xff pattern:$0x73625140]
    %1546 = vst [vmem:[#allocation1] ss:$4 sm:$0xff] %v28
    %v1547 = vld.sshfl [vmem:[#allocation1] sm:$0xff pattern:$0x73625140]
    %v1548 = vld.sshfl [vmem:[#allocation1 + $0x8] sm:$0xff pattern:$0x73625140]
    %v1549 = vld.sshfl [vmem:[#allocation1 + $0x10] sm:$0xff pattern:$0x73625140]
    %v1550 = vld.sshfl [vmem:[#allocation1 + $0x18] sm:$0xff pattern:$0x73625140]
    %1563 = vrot.lane.b32.xlu0 %v1538, 32
    %v1564 = vpop.permute.xlu0 %1563
    %1565 = vrot.lane.b32.xlu0 %v1539, 32
    %v1566 = vpop.permute.xlu0 %1565
    %1567 = vrot.lane.b32.xlu0 %v1540, 32
    %v1568 = vpop.permute.xlu0 %1567
    %1569 = vrot.lane.b32.xlu0 %v1541, 32
    %v1570 = vpop.permute.xlu0 %1569
    %1571 = vrot.lane.b32.xlu0 %v1542, 32
    %v1572 = vpop.permute.xlu0 %1571
    %1573 = vrot.lane.b32.xlu0 %v1543, 32
    %v1574 = vpop.permute.xlu0 %1573
    %1575 = vrot.lane.b32.xlu0 %v1544, 32
    %v1576 = vpop.permute.xlu0 %1575
    %1577 = vrot.lane.b32.xlu0 %v1545, 32
    %v1578 = vpop.permute.xlu0 %1577
    %1579 = vrot.lane.b32.xlu0 %v1547, 32
    %v1580 = vpop.permute.xlu0 %1579
    %1581 = vrot.lane.b32.xlu0 %v1548, 32
    %v1582 = vpop.permute.xlu0 %1581
    %1583 = vrot.lane.b32.xlu0 %v1549, 32
    %v1584 = vpop.permute.xlu0 %1583
    %1585 = vrot.lane.b32.xlu0 %v1550, 32
    %v1586 = vpop.permute.xlu0 %1585
    %v1587 = vsel %vm547, %v1584, %v1586
    %v1588 = vsel %vm547, %v1582, %v1584
    %v1589 = vsel %vm547, %v1580, %v1582
    %v1590 = vsel %vm547, %v1578, %v1580
    %v1591 = vsel %vm547, %v1576, %v1578
    %v1592 = vsel %vm547, %v1574, %v1576
    %v1593 = vsel %vm547, %v1572, %v1574
    %v1594 = vsel %vm547, %v1570, %v1572
    %v1595 = vsel %vm547, %v1568, %v1570
    %v1596 = vsel %vm547, %v1566, %v1568
    %v1597 = vsel %vm547, %v1564, %v1566
    %v1598 = vsel %vm547, %v1586, %v1564
    %vm1599 = vcmp.lt.s32.totalorder %v30, 1440
    %vm1600 = vcmp.lt.s32.totalorder %v31, 1440
    %vm1601 = vcmp.lt.s32.totalorder %v32, 1440
    %vm1602 = vcmp.lt.s32.totalorder %v33, 1440
    %vm1603 = vcmp.lt.s32.totalorder %v34, 1440
    %vm1604 = vcmp.lt.s32.totalorder %v35, 1440
    %vm1605 = vcmp.lt.s32.totalorder %v36, 1440
    %vm1606 = vcmp.lt.s32.totalorder %v37, 1440
    %vm1607 = vcmp.lt.s32.totalorder %v38, 1440
    %vm1608 = vcmp.lt.s32.totalorder %v39, 1440
    %vm1609 = vcmp.lt.s32.totalorder %v40, 1440
    %vm1610 = vcmp.lt.s32.totalorder %v41, 1440
    %v1611 = vsel %vm1599, 1, 0
    %v1612 = vsel %vm1600, 1, 0
    %v1613 = vsel %vm1601, 1, 0
    %v1614 = vsel %vm1602, 1, 0
    %v1615 = vsel %vm1603, 1, 0
    %v1616 = vsel %vm1604, 1, 0
    %v1617 = vsel %vm1605, 1, 0
    %v1618 = vsel %vm1606, 1, 0
    %v1619 = vsel %vm1607, 1, 0
    %v1620 = vsel %vm1608, 1, 0
    %v1621 = vsel %vm1609, 1, 0
    %v1622 = vsel %vm1610, 1, 0
    %vm1623 = vcmp.eq.s32.totalorder %v1611, 1
    %vm1624 = vcmp.eq.s32.totalorder %v1612, 1
    %vm1625 = vcmp.eq.s32.totalorder %v1613, 1
    %vm1626 = vcmp.eq.s32.totalorder %v1614, 1
    %vm1627 = vcmp.eq.s32.totalorder %v1615, 1
    %vm1628 = vcmp.eq.s32.totalorder %v1616, 1
    %vm1629 = vcmp.eq.s32.totalorder %v1617, 1
    %vm1630 = vcmp.eq.s32.totalorder %v1618, 1
    %vm1631 = vcmp.eq.s32.totalorder %v1619, 1
    %vm1632 = vcmp.eq.s32.totalorder %v1620, 1
    %vm1633 = vcmp.eq.s32.totalorder %v1621, 1
    %vm1634 = vcmp.eq.s32.totalorder %v1622, 1
    %v1635 = vsel %vm1623, %v1597, 0.0
    %v1636 = vsel %vm1624, %v1596, 0.0
    %v1637 = vsel %vm1625, %v1595, 0.0
    %v1638 = vsel %vm1626, %v1594, 0.0
    %v1639 = vsel %vm1627, %v1593, 0.0
    %v1640 = vsel %vm1628, %v1592, 0.0
    %v1641 = vsel %vm1629, %v1591, 0.0
    %v1642 = vsel %vm1630, %v1590, 0.0
    %v1643 = vsel %vm1631, %v1589, 0.0
    %v1644 = vsel %vm1632, %v1588, 0.0
    %v1645 = vsel %vm1633, %v1587, 0.0
    %v1646 = vsel %vm1634, %v1598, 0.0
    %v1659 = vrot.slane %v1636, 6
    %v1660 = vrot.slane %v1637, 4
    %v1661 = vrot.slane %v1638, 2
    %v1662 = vrot.slane %v1640, 6
    %v1663 = vrot.slane %v1641, 4
    %v1664 = vrot.slane %v1642, 2
    %v1665 = vrot.slane %v1644, 6
    %v1666 = vrot.slane %v1645, 4
    %v1667 = vrot.slane %v1646, 2
    %v1668 = vsel %vm179, %v1635, %v1659
    %v1669 = vsel %vm181, %v1660, %v1661
    %v1670 = vsel %vm183, %v1668, %v1669
    %v1671 = vsel %vm179, %v1639, %v1662
    %v1672 = vsel %vm181, %v1663, %v1664
    %v1673 = vsel %vm183, %v1671, %v1672
    %v1674 = vsel %vm179, %v1643, %v1665
    %v1675 = vsel %vm181, %v1666, %v1667
    %v1676 = vsel %vm183, %v1674, %v1675
    %v1680 = vadd.f32 %v1532, %v1670
    %v1681 = vadd.f32 %v1533, %v1673
    %v1682 = vadd.f32 %v1534, %v1676
    %1683 = vst [vmem:[#allocation1] ss:$4 sm:$0xff] %v26
    %s1684 = scalar_lea.vmem [#allocation1], 32
    %1685 = vst [vmem:[%s1684] ss:$4 sm:$0xff] %v27
    %v1686 = vld.sshfl [vmem:[#allocation1] sm:$0xff pattern:$0x73625140]
    %v1687 = vld.sshfl [vmem:[#allocation1 + $0x8] sm:$0xff pattern:$0x73625140]
    %v1688 = vld.sshfl [vmem:[#allocation1 + $0x10] sm:$0xff pattern:$0x73625140]
    %v1689 = vld.sshfl [vmem:[#allocation1 + $0x18] sm:$0xff pattern:$0x73625140]
    %v1690 = vld.sshfl [vmem:[#allocation1 + $0x20] sm:$0xff pattern:$0x73625140]
    %v1691 = vld.sshfl [vmem:[#allocation1 + $0x28] sm:$0xff pattern:$0x73625140]
    %v1692 = vld.sshfl [vmem:[#allocation1 + $0x30] sm:$0xff pattern:$0x73625140]
    %v1693 = vld.sshfl [vmem:[#allocation1 + $0x38] sm:$0xff pattern:$0x73625140]
    %1694 = vst [vmem:[#allocation1] ss:$4 sm:$0xff] %v28
    %v1695 = vld.sshfl [vmem:[#allocation1] sm:$0xff pattern:$0x73625140]
    %v1696 = vld.sshfl [vmem:[#allocation1 + $0x8] sm:$0xff pattern:$0x73625140]
    %v1697 = vld.sshfl [vmem:[#allocation1 + $0x10] sm:$0xff pattern:$0x73625140]
    %v1698 = vld.sshfl [vmem:[#allocation1 + $0x18] sm:$0xff pattern:$0x73625140]
    %1711 = vrot.lane.b32.xlu0 %v1686, 96
    %v1712 = vpop.permute.xlu0 %1711
    %1713 = vrot.lane.b32.xlu0 %v1687, 96
    %v1714 = vpop.permute.xlu0 %1713
    %1715 = vrot.lane.b32.xlu0 %v1688, 96
    %v1716 = vpop.permute.xlu0 %1715
    %1717 = vrot.lane.b32.xlu0 %v1689, 96
    %v1718 = vpop.permute.xlu0 %1717
    %1719 = vrot.lane.b32.xlu0 %v1690, 96
    %v1720 = vpop.permute.xlu0 %1719
    %1721 = vrot.lane.b32.xlu0 %v1691, 96
    %v1722 = vpop.permute.xlu0 %1721
    %1723 = vrot.lane.b32.xlu0 %v1692, 96
    %v1724 = vpop.permute.xlu0 %1723
    %1725 = vrot.lane.b32.xlu0 %v1693, 96
    %v1726 = vpop.permute.xlu0 %1725
    %1727 = vrot.lane.b32.xlu0 %v1695, 96
    %v1728 = vpop.permute.xlu0 %1727
    %1729 = vrot.lane.b32.xlu0 %v1696, 96
    %v1730 = vpop.permute.xlu0 %1729
    %1731 = vrot.lane.b32.xlu0 %v1697, 96
    %v1732 = vpop.permute.xlu0 %1731
    %1733 = vrot.lane.b32.xlu0 %v1698, 96
    %v1734 = vpop.permute.xlu0 %1733
    %v1735 = vsel %vm398, %v1732, %v1734
    %v1736 = vsel %vm398, %v1730, %v1732
    %v1737 = vsel %vm398, %v1728, %v1730
    %v1738 = vsel %vm398, %v1726, %v1728
    %v1739 = vsel %vm398, %v1724, %v1726
    %v1740 = vsel %vm398, %v1722, %v1724
    %v1741 = vsel %vm398, %v1720, %v1722
    %v1742 = vsel %vm398, %v1718, %v1720
    %v1743 = vsel %vm398, %v1716, %v1718
    %v1744 = vsel %vm398, %v1714, %v1716
    %v1745 = vsel %vm398, %v1712, %v1714
    %v1746 = vsel %vm398, %v1734, %v1712
    %vm1747 = vcmp.ge.s32.totalorder %v30, 96
    %vm1748 = vcmp.ge.s32.totalorder %v31, 96
    %vm1749 = vcmp.ge.s32.totalorder %v32, 96
    %vm1750 = vcmp.ge.s32.totalorder %v33, 96
    %vm1751 = vcmp.ge.s32.totalorder %v34, 96
    %vm1752 = vcmp.ge.s32.totalorder %v35, 96
    %vm1753 = vcmp.ge.s32.totalorder %v36, 96
    %vm1754 = vcmp.ge.s32.totalorder %v37, 96
    %vm1755 = vcmp.ge.s32.totalorder %v38, 96
    %vm1756 = vcmp.ge.s32.totalorder %v39, 96
    %vm1757 = vcmp.ge.s32.totalorder %v40, 96
    %vm1758 = vcmp.ge.s32.totalorder %v41, 96
    %v1759 = vsel %vm1747, 1, 0
    %v1760 = vsel %vm1748, 1, 0
    %v1761 = vsel %vm1749, 1, 0
    %v1762 = vsel %vm1750, 1, 0
    %v1763 = vsel %vm1751, 1, 0
    %v1764 = vsel %vm1752, 1, 0
    %v1765 = vsel %vm1753, 1, 0
    %v1766 = vsel %vm1754, 1, 0
    %v1767 = vsel %vm1755, 1, 0
    %v1768 = vsel %vm1756, 1, 0
    %v1769 = vsel %vm1757, 1, 0
    %v1770 = vsel %vm1758, 1, 0
    %vm1771 = vcmp.eq.s32.totalorder %v1759, 1
    %vm1772 = vcmp.eq.s32.totalorder %v1760, 1
    %vm1773 = vcmp.eq.s32.totalorder %v1761, 1
    %vm1774 = vcmp.eq.s32.totalorder %v1762, 1
    %vm1775 = vcmp.eq.s32.totalorder %v1763, 1
    %vm1776 = vcmp.eq.s32.totalorder %v1764, 1
    %vm1777 = vcmp.eq.s32.totalorder %v1765, 1
    %vm1778 = vcmp.eq.s32.totalorder %v1766, 1
    %vm1779 = vcmp.eq.s32.totalorder %v1767, 1
    %vm1780 = vcmp.eq.s32.totalorder %v1768, 1
    %vm1781 = vcmp.eq.s32.totalorder %v1769, 1
    %vm1782 = vcmp.eq.s32.totalorder %v1770, 1
    %v1783 = vsel %vm1771, %v1746, 0.0
    %v1784 = vsel %vm1772, %v1745, 0.0
    %v1785 = vsel %vm1773, %v1744, 0.0
    %v1786 = vsel %vm1774, %v1743, 0.0
    %v1787 = vsel %vm1775, %v1742, 0.0
    %v1788 = vsel %vm1776, %v1741, 0.0
    %v1789 = vsel %vm1777, %v1740, 0.0
    %v1790 = vsel %vm1778, %v1739, 0.0
    %v1791 = vsel %vm1779, %v1738, 0.0
    %v1792 = vsel %vm1780, %v1737, 0.0
    %v1793 = vsel %vm1781, %v1736, 0.0
    %v1794 = vsel %vm1782, %v1735, 0.0
    %v1807 = vrot.slane %v1784, 6
    %v1808 = vrot.slane %v1785, 4
    %v1809 = vrot.slane %v1786, 2
    %v1810 = vrot.slane %v1788, 6
    %v1811 = vrot.slane %v1789, 4
    %v1812 = vrot.slane %v1790, 2
    %v1813 = vrot.slane %v1792, 6
    %v1814 = vrot.slane %v1793, 4
    %v1815 = vrot.slane %v1794, 2
    %v1816 = vsel %vm179, %v1783, %v1807
    %v1817 = vsel %vm181, %v1808, %v1809
    %v1818 = vsel %vm183, %v1816, %v1817
    %v1819 = vsel %vm179, %v1787, %v1810
    %v1820 = vsel %vm181, %v1811, %v1812
    %v1821 = vsel %vm183, %v1819, %v1820
    %v1822 = vsel %vm179, %v1791, %v1813
    %v1823 = vsel %vm181, %v1814, %v1815
    %v1824 = vsel %vm183, %v1822, %v1823
    %v1828 = vadd.f32 %v1680, %v1818
    %v1829 = vadd.f32 %v1681, %v1821
    %v1830 = vadd.f32 %v1682, %v1824
    %1831 = vst [vmem:[#allocation1] ss:$4 sm:$0xff] %v26
    %s1832 = scalar_lea.vmem [#allocation1], 32
    %1833 = vst [vmem:[%s1832] ss:$4 sm:$0xff] %v27
    %v1834 = vld.sshfl [vmem:[#allocation1] sm:$0xff pattern:$0x73625140]
    %v1835 = vld.sshfl [vmem:[#allocation1 + $0x8] sm:$0xff pattern:$0x73625140]
    %v1836 = vld.sshfl [vmem:[#allocation1 + $0x10] sm:$0xff pattern:$0x73625140]
    %v1837 = vld.sshfl [vmem:[#allocation1 + $0x18] sm:$0xff pattern:$0x73625140]
    %v1838 = vld.sshfl [vmem:[#allocation1 + $0x20] sm:$0xff pattern:$0x73625140]
    %v1839 = vld.sshfl [vmem:[#allocation1 + $0x28] sm:$0xff pattern:$0x73625140]
    %v1840 = vld.sshfl [vmem:[#allocation1 + $0x30] sm:$0xff pattern:$0x73625140]
    %v1841 = vld.sshfl [vmem:[#allocation1 + $0x38] sm:$0xff pattern:$0x73625140]
    %1842 = vst [vmem:[#allocation1] ss:$4 sm:$0xff] %v28
    %v1843 = vld.sshfl [vmem:[#allocation1] sm:$0xff pattern:$0x73625140]
    %v1844 = vld.sshfl [vmem:[#allocation1 + $0x8] sm:$0xff pattern:$0x73625140]
    %v1845 = vld.sshfl [vmem:[#allocation1 + $0x10] sm:$0xff pattern:$0x73625140]
    %v1846 = vld.sshfl [vmem:[#allocation1 + $0x18] sm:$0xff pattern:$0x73625140]
    %1859 = vrot.lane.b32.xlu0 %v1834, 16
    %v1860 = vpop.permute.xlu0 %1859
    %1861 = vrot.lane.b32.xlu0 %v1835, 16
    %v1862 = vpop.permute.xlu0 %1861
    %1863 = vrot.lane.b32.xlu0 %v1836, 16
    %v1864 = vpop.permute.xlu0 %1863
    %1865 = vrot.lane.b32.xlu0 %v1837, 16
    %v1866 = vpop.permute.xlu0 %1865
    %1867 = vrot.lane.b32.xlu0 %v1838, 16
    %v1868 = vpop.permute.xlu0 %1867
    %1869 = vrot.lane.b32.xlu0 %v1839, 16
    %v1870 = vpop.permute.xlu0 %1869
    %1871 = vrot.lane.b32.xlu0 %v1840, 16
    %v1872 = vpop.permute.xlu0 %1871
    %1873 = vrot.lane.b32.xlu0 %v1841, 16
    %v1874 = vpop.permute.xlu0 %1873
    %1875 = vrot.lane.b32.xlu0 %v1843, 16
    %v1876 = vpop.permute.xlu0 %1875
    %1877 = vrot.lane.b32.xlu0 %v1844, 16
    %v1878 = vpop.permute.xlu0 %1877
    %1879 = vrot.lane.b32.xlu0 %v1845, 16
    %v1880 = vpop.permute.xlu0 %1879
    %1881 = vrot.lane.b32.xlu0 %v1846, 16
    %v1882 = vpop.permute.xlu0 %1881
    %v1883 = vsel %vm249, %v1880, %v1882
    %v1884 = vsel %vm249, %v1878, %v1880
    %v1885 = vsel %vm249, %v1876, %v1878
    %v1886 = vsel %vm249, %v1874, %v1876
    %v1887 = vsel %vm249, %v1872, %v1874
    %v1888 = vsel %vm249, %v1870, %v1872
    %v1889 = vsel %vm249, %v1868, %v1870
    %v1890 = vsel %vm249, %v1866, %v1868
    %v1891 = vsel %vm249, %v1864, %v1866
    %v1892 = vsel %vm249, %v1862, %v1864
    %v1893 = vsel %vm249, %v1860, %v1862
    %v1894 = vsel %vm249, %v1882, %v1860
    %vm1895 = vcmp.lt.s32.totalorder %v30, 1424
    %vm1896 = vcmp.lt.s32.totalorder %v31, 1424
    %vm1897 = vcmp.lt.s32.totalorder %v32, 1424
    %vm1898 = vcmp.lt.s32.totalorder %v33, 1424
    %vm1899 = vcmp.lt.s32.totalorder %v34, 1424
    %vm1900 = vcmp.lt.s32.totalorder %v35, 1424
    %vm1901 = vcmp.lt.s32.totalorder %v36, 1424
    %vm1902 = vcmp.lt.s32.totalorder %v37, 1424
    %vm1903 = vcmp.lt.s32.totalorder %v38, 1424
    %vm1904 = vcmp.lt.s32.totalorder %v39, 1424
    %vm1905 = vcmp.lt.s32.totalorder %v40, 1424
    %vm1906 = vcmp.lt.s32.totalorder %v41, 1424
    %v1907 = vsel %vm1895, 1, 0
    %v1908 = vsel %vm1896, 1, 0
    %v1909 = vsel %vm1897, 1, 0
    %v1910 = vsel %vm1898, 1, 0
    %v1911 = vsel %vm1899, 1, 0
    %v1912 = vsel %vm1900, 1, 0
    %v1913 = vsel %vm1901, 1, 0
    %v1914 = vsel %vm1902, 1, 0
    %v1915 = vsel %vm1903, 1, 0
    %v1916 = vsel %vm1904, 1, 0
    %v1917 = vsel %vm1905, 1, 0
    %v1918 = vsel %vm1906, 1, 0
    %vm1919 = vcmp.eq.s32.totalorder %v1907, 1
    %vm1920 = vcmp.eq.s32.totalorder %v1908, 1
    %vm1921 = vcmp.eq.s32.totalorder %v1909, 1
    %vm1922 = vcmp.eq.s32.totalorder %v1910, 1
    %vm1923 = vcmp.eq.s32.totalorder %v1911, 1
    %vm1924 = vcmp.eq.s32.totalorder %v1912, 1
    %vm1925 = vcmp.eq.s32.totalorder %v1913, 1
    %vm1926 = vcmp.eq.s32.totalorder %v1914, 1
    %vm1927 = vcmp.eq.s32.totalorder %v1915, 1
    %vm1928 = vcmp.eq.s32.totalorder %v1916, 1
    %vm1929 = vcmp.eq.s32.totalorder %v1917, 1
    %vm1930 = vcmp.eq.s32.totalorder %v1918, 1
    %v1931 = vsel %vm1919, %v1893, 0.0
    %v1932 = vsel %vm1920, %v1892, 0.0
    %v1933 = vsel %vm1921, %v1891, 0.0
    %v1934 = vsel %vm1922, %v1890, 0.0
    %v1935 = vsel %vm1923, %v1889, 0.0
    %v1936 = vsel %vm1924, %v1888, 0.0
    %v1937 = vsel %vm1925, %v1887, 0.0
    %v1938 = vsel %vm1926, %v1886, 0.0
    %v1939 = vsel %vm1927, %v1885, 0.0
    %v1940 = vsel %vm1928, %v1884, 0.0
    %v1941 = vsel %vm1929, %v1883, 0.0
    %v1942 = vsel %vm1930, %v1894, 0.0
    %v1955 = vrot.slane %v1932, 6
    %v1956 = vrot.slane %v1933, 4
    %v1957 = vrot.slane %v1934, 2
    %v1958 = vrot.slane %v1936, 6
    %v1959 = vrot.slane %v1937, 4
    %v1960 = vrot.slane %v1938, 2
    %v1961 = vrot.slane %v1940, 6
    %v1962 = vrot.slane %v1941, 4
    %v1963 = vrot.slane %v1942, 2
    %v1964 = vsel %vm179, %v1931, %v1955
    %v1965 = vsel %vm181, %v1956, %v1957
    %v1966 = vsel %vm183, %v1964, %v1965
    %v1967 = vsel %vm179, %v1935, %v1958
    %v1968 = vsel %vm181, %v1959, %v1960
    %v1969 = vsel %vm183, %v1967, %v1968
    %v1970 = vsel %vm179, %v1939, %v1961
    %v1971 = vsel %vm181, %v1962, %v1963
    %v1972 = vsel %vm183, %v1970, %v1971
    %v1976 = vadd.f32 %v1828, %v1966
    %v1977 = vadd.f32 %v1829, %v1969
    %v1978 = vadd.f32 %v1830, %v1972
    %1979 = vst [vmem:[#allocation1] ss:$4 sm:$0xff] %v26
    %s1980 = scalar_lea.vmem [#allocation1], 32
    %1981 = vst [vmem:[%s1980] ss:$4 sm:$0xff] %v27
    %v1982 = vld.sshfl [vmem:[#allocation1] sm:$0xff pattern:$0x73625140]
    %v1983 = vld.sshfl [vmem:[#allocation1 + $0x8] sm:$0xff pattern:$0x73625140]
    %v1984 = vld.sshfl [vmem:[#allocation1 + $0x10] sm:$0xff pattern:$0x73625140]
    %v1985 = vld.sshfl [vmem:[#allocation1 + $0x18] sm:$0xff pattern:$0x73625140]
    %v1986 = vld.sshfl [vmem:[#allocation1 + $0x20] sm:$0xff pattern:$0x73625140]
    %v1987 = vld.sshfl [vmem:[#allocation1 + $0x28] sm:$0xff pattern:$0x73625140]
    %v1988 = vld.sshfl [vmem:[#allocation1 + $0x30] sm:$0xff pattern:$0x73625140]
    %v1989 = vld.sshfl [vmem:[#allocation1 + $0x38] sm:$0xff pattern:$0x73625140]
    %1990 = vst [vmem:[#allocation1] ss:$4 sm:$0xff] %v28
    %v1991 = vld.sshfl [vmem:[#allocation1] sm:$0xff pattern:$0x73625140]
    %v1992 = vld.sshfl [vmem:[#allocation1 + $0x8] sm:$0xff pattern:$0x73625140]
    %v1993 = vld.sshfl [vmem:[#allocation1 + $0x10] sm:$0xff pattern:$0x73625140]
    %v1994 = vld.sshfl [vmem:[#allocation1 + $0x18] sm:$0xff pattern:$0x73625140]
    %2007 = vrot.lane.b32.xlu0 %v1982, 112
    %v2008 = vpop.permute.xlu0 %2007
    %2009 = vrot.lane.b32.xlu0 %v1983, 112
    %v2010 = vpop.permute.xlu0 %2009
    %2011 = vrot.lane.b32.xlu0 %v1984, 112
    %v2012 = vpop.permute.xlu0 %2011
    %2013 = vrot.lane.b32.xlu0 %v1985, 112
    %v2014 = vpop.permute.xlu0 %2013
    %2015 = vrot.lane.b32.xlu0 %v1986, 112
    %v2016 = vpop.permute.xlu0 %2015
    %2017 = vrot.lane.b32.xlu0 %v1987, 112
    %v2018 = vpop.permute.xlu0 %2017
    %2019 = vrot.lane.b32.xlu0 %v1988, 112
    %v2020 = vpop.permute.xlu0 %2019
    %2021 = vrot.lane.b32.xlu0 %v1989, 112
    %v2022 = vpop.permute.xlu0 %2021
    %2023 = vrot.lane.b32.xlu0 %v1991, 112
    %v2024 = vpop.permute.xlu0 %2023
    %2025 = vrot.lane.b32.xlu0 %v1992, 112
    %v2026 = vpop.permute.xlu0 %2025
    %2027 = vrot.lane.b32.xlu0 %v1993, 112
    %v2028 = vpop.permute.xlu0 %2027
    %2029 = vrot.lane.b32.xlu0 %v1994, 112
    %v2030 = vpop.permute.xlu0 %2029
    %v2031 = vsel %vm97, %v2028, %v2030
    %v2032 = vsel %vm97, %v2026, %v2028
    %v2033 = vsel %vm97, %v2024, %v2026
    %v2034 = vsel %vm97, %v2022, %v2024
    %v2035 = vsel %vm97, %v2020, %v2022
    %v2036 = vsel %vm97, %v2018, %v2020
    %v2037 = vsel %vm97, %v2016, %v2018
    %v2038 = vsel %vm97, %v2014, %v2016
    %v2039 = vsel %vm97, %v2012, %v2014
    %v2040 = vsel %vm97, %v2010, %v2012
    %v2041 = vsel %vm97, %v2008, %v2010
    %v2042 = vsel %vm97, %v2030, %v2008
    %vm2043 = vcmp.ge.s32.totalorder %v30, 112
    %vm2044 = vcmp.ge.s32.totalorder %v31, 112
    %vm2045 = vcmp.ge.s32.totalorder %v32, 112
    %vm2046 = vcmp.ge.s32.totalorder %v33, 112
    %vm2047 = vcmp.ge.s32.totalorder %v34, 112
    %vm2048 = vcmp.ge.s32.totalorder %v35, 112
    %vm2049 = vcmp.ge.s32.totalorder %v36, 112
    %vm2050 = vcmp.ge.s32.totalorder %v37, 112
    %vm2051 = vcmp.ge.s32.totalorder %v38, 112
    %vm2052 = vcmp.ge.s32.totalorder %v39, 112
    %vm2053 = vcmp.ge.s32.totalorder %v40, 112
    %vm2054 = vcmp.ge.s32.totalorder %v41, 112
    %v2055 = vsel %vm2043, 1, 0
    %v2056 = vsel %vm2044, 1, 0
    %v2057 = vsel %vm2045, 1, 0
    %v2058 = vsel %vm2046, 1, 0
    %v2059 = vsel %vm2047, 1, 0
    %v2060 = vsel %vm2048, 1, 0
    %v2061 = vsel %vm2049, 1, 0
    %v2062 = vsel %vm2050, 1, 0
    %v2063 = vsel %vm2051, 1, 0
    %v2064 = vsel %vm2052, 1, 0
    %v2065 = vsel %vm2053, 1, 0
    %v2066 = vsel %vm2054, 1, 0
    %vm2067 = vcmp.eq.s32.totalorder %v2055, 1
    %vm2068 = vcmp.eq.s32.totalorder %v2056, 1
    %vm2069 = vcmp.eq.s32.totalorder %v2057, 1
    %vm2070 = vcmp.eq.s32.totalorder %v2058, 1
    %vm2071 = vcmp.eq.s32.totalorder %v2059, 1
    %vm2072 = vcmp.eq.s32.totalorder %v2060, 1
    %vm2073 = vcmp.eq.s32.totalorder %v2061, 1
    %vm2074 = vcmp.eq.s32.totalorder %v2062, 1
    %vm2075 = vcmp.eq.s32.totalorder %v2063, 1
    %vm2076 = vcmp.eq.s32.totalorder %v2064, 1
    %vm2077 = vcmp.eq.s32.totalorder %v2065, 1
    %vm2078 = vcmp.eq.s32.totalorder %v2066, 1
    %v2079 = vsel %vm2067, %v2042, 0.0
    %v2080 = vsel %vm2068, %v2041, 0.0
    %v2081 = vsel %vm2069, %v2040, 0.0
    %v2082 = vsel %vm2070, %v2039, 0.0
    %v2083 = vsel %vm2071, %v2038, 0.0
    %v2084 = vsel %vm2072, %v2037, 0.0
    %v2085 = vsel %vm2073, %v2036, 0.0
    %v2086 = vsel %vm2074, %v2035, 0.0
    %v2087 = vsel %vm2075, %v2034, 0.0
    %v2088 = vsel %vm2076, %v2033, 0.0
    %v2089 = vsel %vm2077, %v2032, 0.0
    %v2090 = vsel %vm2078, %v2031, 0.0
    %v2103 = vrot.slane %v2080, 6
    %v2104 = vrot.slane %v2081, 4
    %v2105 = vrot.slane %v2082, 2
    %v2106 = vrot.slane %v2084, 6
    %v2107 = vrot.slane %v2085, 4
    %v2108 = vrot.slane %v2086, 2
    %v2109 = vrot.slane %v2088, 6
    %v2110 = vrot.slane %v2089, 4
    %v2111 = vrot.slane %v2090, 2
    %v2112 = vsel %vm179, %v2079, %v2103
    %v2113 = vsel %vm181, %v2104, %v2105
    %v2114 = vsel %vm183, %v2112, %v2113
    %v2115 = vsel %vm179, %v2083, %v2106
    %v2116 = vsel %vm181, %v2107, %v2108
    %v2117 = vsel %vm183, %v2115, %v2116
    %v2118 = vsel %vm179, %v2087, %v2109
    %v2119 = vsel %vm181, %v2110, %v2111
    %v2120 = vsel %vm183, %v2118, %v2119
    %v2124 = vadd.f32 %v1976, %v2114
    %v2125 = vadd.f32 %v1977, %v2117
    %v2126 = vadd.f32 %v1978, %v2120
    %2127 = vst [vmem:[#allocation1] ss:$4 sm:$0xff] %v26
    %s2128 = scalar_lea.vmem [#allocation1], 32
    %2129 = vst [vmem:[%s2128] ss:$4 sm:$0xff] %v27
    %v2130 = vld.sshfl [vmem:[#allocation1] sm:$0xff pattern:$0x73625140]
    %v2131 = vld.sshfl [vmem:[#allocation1 + $0x8] sm:$0xff pattern:$0x73625140]
    %v2132 = vld.sshfl [vmem:[#allocation1 + $0x10] sm:$0xff pattern:$0x73625140]
    %v2133 = vld.sshfl [vmem:[#allocation1 + $0x18] sm:$0xff pattern:$0x73625140]
    %v2134 = vld.sshfl [vmem:[#allocation1 + $0x20] sm:$0xff pattern:$0x73625140]
    %v2135 = vld.sshfl [vmem:[#allocation1 + $0x28] sm:$0xff pattern:$0x73625140]
    %v2136 = vld.sshfl [vmem:[#allocation1 + $0x30] sm:$0xff pattern:$0x73625140]
    %v2137 = vld.sshfl [vmem:[#allocation1 + $0x38] sm:$0xff pattern:$0x73625140]
    %2138 = vst [vmem:[#allocation1] ss:$4 sm:$0xff] %v28
    %v2139 = vld.sshfl [vmem:[#allocation1] sm:$0xff pattern:$0x73625140]
    %v2140 = vld.sshfl [vmem:[#allocation1 + $0x8] sm:$0xff pattern:$0x73625140]
    %v2141 = vld.sshfl [vmem:[#allocation1 + $0x10] sm:$0xff pattern:$0x73625140]
    %v2142 = vld.sshfl [vmem:[#allocation1 + $0x18] sm:$0xff pattern:$0x73625140]
    %vm2155 = vcmp.lt.s32.totalorder %v30, 1408
    %vm2156 = vcmp.lt.s32.totalorder %v31, 1408
    %vm2157 = vcmp.lt.s32.totalorder %v32, 1408
    %vm2158 = vcmp.lt.s32.totalorder %v33, 1408
    %vm2159 = vcmp.lt.s32.totalorder %v34, 1408
    %vm2160 = vcmp.lt.s32.totalorder %v35, 1408
    %vm2161 = vcmp.lt.s32.totalorder %v36, 1408
    %vm2162 = vcmp.lt.s32.totalorder %v37, 1408
    %vm2163 = vcmp.lt.s32.totalorder %v38, 1408
    %vm2164 = vcmp.lt.s32.totalorder %v39, 1408
    %vm2165 = vcmp.lt.s32.totalorder %v40, 1408
    %vm2166 = vcmp.lt.s32.totalorder %v41, 1408
    %v2167 = vsel %vm2155, 1, 0
    %v2168 = vsel %vm2156, 1, 0
    %v2169 = vsel %vm2157, 1, 0
    %v2170 = vsel %vm2158, 1, 0
    %v2171 = vsel %vm2159, 1, 0
    %v2172 = vsel %vm2160, 1, 0
    %v2173 = vsel %vm2161, 1, 0
    %v2174 = vsel %vm2162, 1, 0
    %v2175 = vsel %vm2163, 1, 0
    %v2176 = vsel %vm2164, 1, 0
    %v2177 = vsel %vm2165, 1, 0
    %v2178 = vsel %vm2166, 1, 0
    %vm2179 = vcmp.eq.s32.totalorder %v2167, 1
    %vm2180 = vcmp.eq.s32.totalorder %v2168, 1
    %vm2181 = vcmp.eq.s32.totalorder %v2169, 1
    %vm2182 = vcmp.eq.s32.totalorder %v2170, 1
    %vm2183 = vcmp.eq.s32.totalorder %v2171, 1
    %vm2184 = vcmp.eq.s32.totalorder %v2172, 1
    %vm2185 = vcmp.eq.s32.totalorder %v2173, 1
    %vm2186 = vcmp.eq.s32.totalorder %v2174, 1
    %vm2187 = vcmp.eq.s32.totalorder %v2175, 1
    %vm2188 = vcmp.eq.s32.totalorder %v2176, 1
    %vm2189 = vcmp.eq.s32.totalorder %v2177, 1
    %vm2190 = vcmp.eq.s32.totalorder %v2178, 1
    %v2191 = vsel %vm2179, %v2131, 0.0
    %v2192 = vsel %vm2180, %v2132, 0.0
    %v2193 = vsel %vm2181, %v2133, 0.0
    %v2194 = vsel %vm2182, %v2134, 0.0
    %v2195 = vsel %vm2183, %v2135, 0.0
    %v2196 = vsel %vm2184, %v2136, 0.0
    %v2197 = vsel %vm2185, %v2137, 0.0
    %v2198 = vsel %vm2186, %v2139, 0.0
    %v2199 = vsel %vm2187, %v2140, 0.0
    %v2200 = vsel %vm2188, %v2141, 0.0
    %v2201 = vsel %vm2189, %v2142, 0.0
    %v2202 = vsel %vm2190, %v2130, 0.0
    %v2215 = vrot.slane %v2192, 6
    %v2216 = vrot.slane %v2193, 4
    %v2217 = vrot.slane %v2194, 2
    %v2218 = vrot.slane %v2196, 6
    %v2219 = vrot.slane %v2197, 4
    %v2220 = vrot.slane %v2198, 2
    %v2221 = vrot.slane %v2200, 6
    %v2222 = vrot.slane %v2201, 4
    %v2223 = vrot.slane %v2202, 2
    %v2224 = vsel %vm179, %v2191, %v2215
    %v2225 = vsel %vm181, %v2216, %v2217
    %v2226 = vsel %vm183, %v2224, %v2225
    %v2227 = vsel %vm179, %v2195, %v2218
    %v2228 = vsel %vm181, %v2219, %v2220
    %v2229 = vsel %vm183, %v2227, %v2228
    %v2230 = vsel %vm179, %v2199, %v2221
    %v2231 = vsel %vm181, %v2222, %v2223
    %v2232 = vsel %vm183, %v2230, %v2231
    %v2236 = vadd.f32 %v2124, %v2226
    %v2237 = vadd.f32 %v2125, %v2229
    %v2238 = vadd.f32 %v2126, %v2232
    %2239 = vst [vmem:[#allocation1] ss:$4 sm:$0xff] %v26
    %s2240 = scalar_lea.vmem [#allocation1], 32
    %2241 = vst [vmem:[%s2240] ss:$4 sm:$0xff] %v27
    %v2242 = vld.sshfl [vmem:[#allocation1] sm:$0xff pattern:$0x73625140]
    %v2243 = vld.sshfl [vmem:[#allocation1 + $0x8] sm:$0xff pattern:$0x73625140]
    %v2244 = vld.sshfl [vmem:[#allocation1 + $0x10] sm:$0xff pattern:$0x73625140]
    %v2245 = vld.sshfl [vmem:[#allocation1 + $0x18] sm:$0xff pattern:$0x73625140]
    %v2246 = vld.sshfl [vmem:[#allocation1 + $0x20] sm:$0xff pattern:$0x73625140]
    %v2247 = vld.sshfl [vmem:[#allocation1 + $0x28] sm:$0xff pattern:$0x73625140]
    %v2248 = vld.sshfl [vmem:[#allocation1 + $0x30] sm:$0xff pattern:$0x73625140]
    %v2249 = vld.sshfl [vmem:[#allocation1 + $0x38] sm:$0xff pattern:$0x73625140]
    %2250 = vst [vmem:[#allocation1] ss:$4 sm:$0xff] %v28
    %v2251 = vld.sshfl [vmem:[#allocation1] sm:$0xff pattern:$0x73625140]
    %v2252 = vld.sshfl [vmem:[#allocation1 + $0x8] sm:$0xff pattern:$0x73625140]
    %v2253 = vld.sshfl [vmem:[#allocation1 + $0x10] sm:$0xff pattern:$0x73625140]
    %v2254 = vld.sshfl [vmem:[#allocation1 + $0x18] sm:$0xff pattern:$0x73625140]
    %vm2267 = vcmp.ge.s32.totalorder %v30, 128
    %vm2268 = vcmp.ge.s32.totalorder %v31, 128
    %vm2269 = vcmp.ge.s32.totalorder %v32, 128
    %vm2270 = vcmp.ge.s32.totalorder %v33, 128
    %vm2271 = vcmp.ge.s32.totalorder %v34, 128
    %vm2272 = vcmp.ge.s32.totalorder %v35, 128
    %vm2273 = vcmp.ge.s32.totalorder %v36, 128
    %vm2274 = vcmp.ge.s32.totalorder %v37, 128
    %vm2275 = vcmp.ge.s32.totalorder %v38, 128
    %vm2276 = vcmp.ge.s32.totalorder %v39, 128
    %vm2277 = vcmp.ge.s32.totalorder %v40, 128
    %vm2278 = vcmp.ge.s32.totalorder %v41, 128
    %v2279 = vsel %vm2267, 1, 0
    %v2280 = vsel %vm2268, 1, 0
    %v2281 = vsel %vm2269, 1, 0
    %v2282 = vsel %vm2270, 1, 0
    %v2283 = vsel %vm2271, 1, 0
    %v2284 = vsel %vm2272, 1, 0
    %v2285 = vsel %vm2273, 1, 0
    %v2286 = vsel %vm2274, 1, 0
    %v2287 = vsel %vm2275, 1, 0
    %v2288 = vsel %vm2276, 1, 0
    %v2289 = vsel %vm2277, 1, 0
    %v2290 = vsel %vm2278, 1, 0
    %vm2291 = vcmp.eq.s32.totalorder %v2279, 1
    %vm2292 = vcmp.eq.s32.totalorder %v2280, 1
    %vm2293 = vcmp.eq.s32.totalorder %v2281, 1
    %vm2294 = vcmp.eq.s32.totalorder %v2282, 1
    %vm2295 = vcmp.eq.s32.totalorder %v2283, 1
    %vm2296 = vcmp.eq.s32.totalorder %v2284, 1
    %vm2297 = vcmp.eq.s32.totalorder %v2285, 1
    %vm2298 = vcmp.eq.s32.totalorder %v2286, 1
    %vm2299 = vcmp.eq.s32.totalorder %v2287, 1
    %vm2300 = vcmp.eq.s32.totalorder %v2288, 1
    %vm2301 = vcmp.eq.s32.totalorder %v2289, 1
    %vm2302 = vcmp.eq.s32.totalorder %v2290, 1
    %v2303 = vsel %vm2291, %v2254, 0.0
    %v2304 = vsel %vm2292, %v2242, 0.0
    %v2305 = vsel %vm2293, %v2243, 0.0
    %v2306 = vsel %vm2294, %v2244, 0.0
    %v2307 = vsel %vm2295, %v2245, 0.0
    %v2308 = vsel %vm2296, %v2246, 0.0
    %v2309 = vsel %vm2297, %v2247, 0.0
    %v2310 = vsel %vm2298, %v2248, 0.0
    %v2311 = vsel %vm2299, %v2249, 0.0
    %v2312 = vsel %vm2300, %v2251, 0.0
    %v2313 = vsel %vm2301, %v2252, 0.0
    %v2314 = vsel %vm2302, %v2253, 0.0
    %v2327 = vrot.slane %v2304, 6
    %v2328 = vrot.slane %v2305, 4
    %v2329 = vrot.slane %v2306, 2
    %v2330 = vrot.slane %v2308, 6
    %v2331 = vrot.slane %v2309, 4
    %v2332 = vrot.slane %v2310, 2
    %v2333 = vrot.slane %v2312, 6
    %v2334 = vrot.slane %v2313, 4
    %v2335 = vrot.slane %v2314, 2
    %v2336 = vsel %vm179, %v2303, %v2327
    %v2337 = vsel %vm181, %v2328, %v2329
    %v2338 = vsel %vm183, %v2336, %v2337
    %v2339 = vsel %vm179, %v2307, %v2330
    %v2340 = vsel %vm181, %v2331, %v2332
    %v2341 = vsel %vm183, %v2339, %v2340
    %v2342 = vsel %vm179, %v2311, %v2333
    %v2343 = vsel %vm181, %v2334, %v2335
    %v2344 = vsel %vm183, %v2342, %v2343
    %v2348 = vadd.f32 %v2236, %v2338
    %v2349 = vadd.f32 %v2237, %v2341
    %v2350 = vadd.f32 %v2238, %v2344
    %2351 = vst [vmem:[#allocation1] ss:$4 sm:$0xff] %v26
    %s2352 = scalar_lea.vmem [#allocation1], 32
    %2353 = vst [vmem:[%s2352] ss:$4 sm:$0xff] %v27
    %v2354 = vld.sshfl [vmem:[#allocation1] sm:$0xff pattern:$0x73625140]
    %v2355 = vld.sshfl [vmem:[#allocation1 + $0x8] sm:$0xff pattern:$0x73625140]
    %v2356 = vld.sshfl [vmem:[#allocation1 + $0x10] sm:$0xff pattern:$0x73625140]
    %v2357 = vld.sshfl [vmem:[#allocation1 + $0x18] sm:$0xff pattern:$0x73625140]
    %v2358 = vld.sshfl [vmem:[#allocation1 + $0x20] sm:$0xff pattern:$0x73625140]
    %v2359 = vld.sshfl [vmem:[#allocation1 + $0x28] sm:$0xff pattern:$0x73625140]
    %v2360 = vld.sshfl [vmem:[#allocation1 + $0x30] sm:$0xff pattern:$0x73625140]
    %v2361 = vld.sshfl [vmem:[#allocation1 + $0x38] sm:$0xff pattern:$0x73625140]
    %2362 = vst [vmem:[#allocation1] ss:$4 sm:$0xff] %v28
    %v2363 = vld.sshfl [vmem:[#allocation1] sm:$0xff pattern:$0x73625140]
    %v2364 = vld.sshfl [vmem:[#allocation1 + $0x8] sm:$0xff pattern:$0x73625140]
    %v2365 = vld.sshfl [vmem:[#allocation1 + $0x10] sm:$0xff pattern:$0x73625140]
    %v2366 = vld.sshfl [vmem:[#allocation1 + $0x18] sm:$0xff pattern:$0x73625140]
    %2379 = vrot.lane.b32.xlu0 %v2354, 112
    %v2380 = vpop.permute.xlu0 %2379
    %2381 = vrot.lane.b32.xlu0 %v2355, 112
    %v2382 = vpop.permute.xlu0 %2381
    %2383 = vrot.lane.b32.xlu0 %v2356, 112
    %v2384 = vpop.permute.xlu0 %2383
    %2385 = vrot.lane.b32.xlu0 %v2357, 112
    %v2386 = vpop.permute.xlu0 %2385
    %2387 = vrot.lane.b32.xlu0 %v2358, 112
    %v2388 = vpop.permute.xlu0 %2387
    %2389 = vrot.lane.b32.xlu0 %v2359, 112
    %v2390 = vpop.permute.xlu0 %2389
    %2391 = vrot.lane.b32.xlu0 %v2360, 112
    %v2392 = vpop.permute.xlu0 %2391
    %2393 = vrot.lane.b32.xlu0 %v2361, 112
    %v2394 = vpop.permute.xlu0 %2393
    %2395 = vrot.lane.b32.xlu0 %v2363, 112
    %v2396 = vpop.permute.xlu0 %2395
    %2397 = vrot.lane.b32.xlu0 %v2364, 112
    %v2398 = vpop.permute.xlu0 %2397
    %2399 = vrot.lane.b32.xlu0 %v2365, 112
    %v2400 = vpop.permute.xlu0 %2399
    %2401 = vrot.lane.b32.xlu0 %v2366, 112
    %v2402 = vpop.permute.xlu0 %2401
    %v2403 = vsel %vm97, %v2400, %v2402
    %v2404 = vsel %vm97, %v2398, %v2400
    %v2405 = vsel %vm97, %v2396, %v2398
    %v2406 = vsel %vm97, %v2394, %v2396
    %v2407 = vsel %vm97, %v2392, %v2394
    %v2408 = vsel %vm97, %v2390, %v2392
    %v2409 = vsel %vm97, %v2388, %v2390
    %v2410 = vsel %vm97, %v2386, %v2388
    %v2411 = vsel %vm97, %v2384, %v2386
    %v2412 = vsel %vm97, %v2382, %v2384
    %v2413 = vsel %vm97, %v2380, %v2382
    %v2414 = vsel %vm97, %v2402, %v2380
    %vm2415 = vcmp.lt.s32.totalorder %v30, 1392
    %vm2416 = vcmp.lt.s32.totalorder %v31, 1392
    %vm2417 = vcmp.lt.s32.totalorder %v32, 1392
    %vm2418 = vcmp.lt.s32.totalorder %v33, 1392
    %vm2419 = vcmp.lt.s32.totalorder %v34, 1392
    %vm2420 = vcmp.lt.s32.totalorder %v35, 1392
    %vm2421 = vcmp.lt.s32.totalorder %v36, 1392
    %vm2422 = vcmp.lt.s32.totalorder %v37, 1392
    %vm2423 = vcmp.lt.s32.totalorder %v38, 1392
    %vm2424 = vcmp.lt.s32.totalorder %v39, 1392
    %vm2425 = vcmp.lt.s32.totalorder %v40, 1392
    %vm2426 = vcmp.lt.s32.totalorder %v41, 1392
    %v2427 = vsel %vm2415, 1, 0
    %v2428 = vsel %vm2416, 1, 0
    %v2429 = vsel %vm2417, 1, 0
    %v2430 = vsel %vm2418, 1, 0
    %v2431 = vsel %vm2419, 1, 0
    %v2432 = vsel %vm2420, 1, 0
    %v2433 = vsel %vm2421, 1, 0
    %v2434 = vsel %vm2422, 1, 0
    %v2435 = vsel %vm2423, 1, 0
    %v2436 = vsel %vm2424, 1, 0
    %v2437 = vsel %vm2425, 1, 0
    %v2438 = vsel %vm2426, 1, 0
    %vm2439 = vcmp.eq.s32.totalorder %v2427, 1
    %vm2440 = vcmp.eq.s32.totalorder %v2428, 1
    %vm2441 = vcmp.eq.s32.totalorder %v2429, 1
    %vm2442 = vcmp.eq.s32.totalorder %v2430, 1
    %vm2443 = vcmp.eq.s32.totalorder %v2431, 1
    %vm2444 = vcmp.eq.s32.totalorder %v2432, 1
    %vm2445 = vcmp.eq.s32.totalorder %v2433, 1
    %vm2446 = vcmp.eq.s32.totalorder %v2434, 1
    %vm2447 = vcmp.eq.s32.totalorder %v2435, 1
    %vm2448 = vcmp.eq.s32.totalorder %v2436, 1
    %vm2449 = vcmp.eq.s32.totalorder %v2437, 1
    %vm2450 = vcmp.eq.s32.totalorder %v2438, 1
    %v2451 = vsel %vm2439, %v2412, 0.0
    %v2452 = vsel %vm2440, %v2411, 0.0
    %v2453 = vsel %vm2441, %v2410, 0.0
    %v2454 = vsel %vm2442, %v2409, 0.0
    %v2455 = vsel %vm2443, %v2408, 0.0
    %v2456 = vsel %vm2444, %v2407, 0.0
    %v2457 = vsel %vm2445, %v2406, 0.0
    %v2458 = vsel %vm2446, %v2405, 0.0
    %v2459 = vsel %vm2447, %v2404, 0.0
    %v2460 = vsel %vm2448, %v2403, 0.0
    %v2461 = vsel %vm2449, %v2414, 0.0
    %v2462 = vsel %vm2450, %v2413, 0.0
    %v2475 = vrot.slane %v2452, 6
    %v2476 = vrot.slane %v2453, 4
    %v2477 = vrot.slane %v2454, 2
    %v2478 = vrot.slane %v2456, 6
    %v2479 = vrot.slane %v2457, 4
    %v2480 = vrot.slane %v2458, 2
    %v2481 = vrot.slane %v2460, 6
    %v2482 = vrot.slane %v2461, 4
    %v2483 = vrot.slane %v2462, 2
    %v2484 = vsel %vm179, %v2451, %v2475
    %v2485 = vsel %vm181, %v2476, %v2477
    %v2486 = vsel %vm183, %v2484, %v2485
    %v2487 = vsel %vm179, %v2455, %v2478
    %v2488 = vsel %vm181, %v2479, %v2480
    %v2489 = vsel %vm183, %v2487, %v2488
    %v2490 = vsel %vm179, %v2459, %v2481
    %v2491 = vsel %vm181, %v2482, %v2483
    %v2492 = vsel %vm183, %v2490, %v2491
    %v2496 = vadd.f32 %v2348, %v2486
    %v2497 = vadd.f32 %v2349, %v2489
    %v2498 = vadd.f32 %v2350, %v2492
    %2499 = vst [vmem:[#allocation1] ss:$4 sm:$0xff] %v26
    %s2500 = scalar_lea.vmem [#allocation1], 32
    %2501 = vst [vmem:[%s2500] ss:$4 sm:$0xff] %v27
    %v2502 = vld.sshfl [vmem:[#allocation1] sm:$0xff pattern:$0x73625140]
    %v2503 = vld.sshfl [vmem:[#allocation1 + $0x8] sm:$0xff pattern:$0x73625140]
    %v2504 = vld.sshfl [vmem:[#allocation1 + $0x10] sm:$0xff pattern:$0x73625140]
    %v2505 = vld.sshfl [vmem:[#allocation1 + $0x18] sm:$0xff pattern:$0x73625140]
    %v2506 = vld.sshfl [vmem:[#allocation1 + $0x20] sm:$0xff pattern:$0x73625140]
    %v2507 = vld.sshfl [vmem:[#allocation1 + $0x28] sm:$0xff pattern:$0x73625140]
    %v2508 = vld.sshfl [vmem:[#allocation1 + $0x30] sm:$0xff pattern:$0x73625140]
    %v2509 = vld.sshfl [vmem:[#allocation1 + $0x38] sm:$0xff pattern:$0x73625140]
    %2510 = vst [vmem:[#allocation1] ss:$4 sm:$0xff] %v28
    %v2511 = vld.sshfl [vmem:[#allocation1] sm:$0xff pattern:$0x73625140]
    %v2512 = vld.sshfl [vmem:[#allocation1 + $0x8] sm:$0xff pattern:$0x73625140]
    %v2513 = vld.sshfl [vmem:[#allocation1 + $0x10] sm:$0xff pattern:$0x73625140]
    %v2514 = vld.sshfl [vmem:[#allocation1 + $0x18] sm:$0xff pattern:$0x73625140]
    %2527 = vrot.lane.b32.xlu0 %v2502, 16
    %v2528 = vpop.permute.xlu0 %2527
    %2529 = vrot.lane.b32.xlu0 %v2503, 16
    %v2530 = vpop.permute.xlu0 %2529
    %2531 = vrot.lane.b32.xlu0 %v2504, 16
    %v2532 = vpop.permute.xlu0 %2531
    %2533 = vrot.lane.b32.xlu0 %v2505, 16
    %v2534 = vpop.permute.xlu0 %2533
    %2535 = vrot.lane.b32.xlu0 %v2506, 16
    %v2536 = vpop.permute.xlu0 %2535
    %2537 = vrot.lane.b32.xlu0 %v2507, 16
    %v2538 = vpop.permute.xlu0 %2537
    %2539 = vrot.lane.b32.xlu0 %v2508, 16
    %v2540 = vpop.permute.xlu0 %2539
    %2541 = vrot.lane.b32.xlu0 %v2509, 16
    %v2542 = vpop.permute.xlu0 %2541
    %2543 = vrot.lane.b32.xlu0 %v2511, 16
    %v2544 = vpop.permute.xlu0 %2543
    %2545 = vrot.lane.b32.xlu0 %v2512, 16
    %v2546 = vpop.permute.xlu0 %2545
    %2547 = vrot.lane.b32.xlu0 %v2513, 16
    %v2548 = vpop.permute.xlu0 %2547
    %2549 = vrot.lane.b32.xlu0 %v2514, 16
    %v2550 = vpop.permute.xlu0 %2549
    %v2551 = vsel %vm249, %v2548, %v2550
    %v2552 = vsel %vm249, %v2546, %v2548
    %v2553 = vsel %vm249, %v2544, %v2546
    %v2554 = vsel %vm249, %v2542, %v2544
    %v2555 = vsel %vm249, %v2540, %v2542
    %v2556 = vsel %vm249, %v2538, %v2540
    %v2557 = vsel %vm249, %v2536, %v2538
    %v2558 = vsel %vm249, %v2534, %v2536
    %v2559 = vsel %vm249, %v2532, %v2534
    %v2560 = vsel %vm249, %v2530, %v2532
    %v2561 = vsel %vm249, %v2528, %v2530
    %v2562 = vsel %vm249, %v2550, %v2528
    %vm2563 = vcmp.ge.s32.totalorder %v30, 144
    %vm2564 = vcmp.ge.s32.totalorder %v31, 144
    %vm2565 = vcmp.ge.s32.totalorder %v32, 144
    %vm2566 = vcmp.ge.s32.totalorder %v33, 144
    %vm2567 = vcmp.ge.s32.totalorder %v34, 144
    %vm2568 = vcmp.ge.s32.totalorder %v35, 144
    %vm2569 = vcmp.ge.s32.totalorder %v36, 144
    %vm2570 = vcmp.ge.s32.totalorder %v37, 144
    %vm2571 = vcmp.ge.s32.totalorder %v38, 144
    %vm2572 = vcmp.ge.s32.totalorder %v39, 144
    %vm2573 = vcmp.ge.s32.totalorder %v40, 144
    %vm2574 = vcmp.ge.s32.totalorder %v41, 144
    %v2575 = vsel %vm2563, 1, 0
    %v2576 = vsel %vm2564, 1, 0
    %v2577 = vsel %vm2565, 1, 0
    %v2578 = vsel %vm2566, 1, 0
    %v2579 = vsel %vm2567, 1, 0
    %v2580 = vsel %vm2568, 1, 0
    %v2581 = vsel %vm2569, 1, 0
    %v2582 = vsel %vm2570, 1, 0
    %v2583 = vsel %vm2571, 1, 0
    %v2584 = vsel %vm2572, 1, 0
    %v2585 = vsel %vm2573, 1, 0
    %v2586 = vsel %vm2574, 1, 0
    %vm2587 = vcmp.eq.s32.totalorder %v2575, 1
    %vm2588 = vcmp.eq.s32.totalorder %v2576, 1
    %vm2589 = vcmp.eq.s32.totalorder %v2577, 1
    %vm2590 = vcmp.eq.s32.totalorder %v2578, 1
    %vm2591 = vcmp.eq.s32.totalorder %v2579, 1
    %vm2592 = vcmp.eq.s32.totalorder %v2580, 1
    %vm2593 = vcmp.eq.s32.totalorder %v2581, 1
    %vm2594 = vcmp.eq.s32.totalorder %v2582, 1
    %vm2595 = vcmp.eq.s32.totalorder %v2583, 1
    %vm2596 = vcmp.eq.s32.totalorder %v2584, 1
    %vm2597 = vcmp.eq.s32.totalorder %v2585, 1
    %vm2598 = vcmp.eq.s32.totalorder %v2586, 1
    %v2599 = vsel %vm2587, %v2551, 0.0
    %v2600 = vsel %vm2588, %v2562, 0.0
    %v2601 = vsel %vm2589, %v2561, 0.0
    %v2602 = vsel %vm2590, %v2560, 0.0
    %v2603 = vsel %vm2591, %v2559, 0.0
    %v2604 = vsel %vm2592, %v2558, 0.0
    %v2605 = vsel %vm2593, %v2557, 0.0
    %v2606 = vsel %vm2594, %v2556, 0.0
    %v2607 = vsel %vm2595, %v2555, 0.0
    %v2608 = vsel %vm2596, %v2554, 0.0
    %v2609 = vsel %vm2597, %v2553, 0.0
    %v2610 = vsel %vm2598, %v2552, 0.0
    %v2623 = vrot.slane %v2600, 6
    %v2624 = vrot.slane %v2601, 4
    %v2625 = vrot.slane %v2602, 2
    %v2626 = vrot.slane %v2604, 6
    %v2627 = vrot.slane %v2605, 4
    %v2628 = vrot.slane %v2606, 2
    %v2629 = vrot.slane %v2608, 6
    %v2630 = vrot.slane %v2609, 4
    %v2631 = vrot.slane %v2610, 2
    %v2632 = vsel %vm179, %v2599, %v2623
    %v2633 = vsel %vm181, %v2624, %v2625
    %v2634 = vsel %vm183, %v2632, %v2633
    %v2635 = vsel %vm179, %v2603, %v2626
    %v2636 = vsel %vm181, %v2627, %v2628
    %v2637 = vsel %vm183, %v2635, %v2636
    %v2638 = vsel %vm179, %v2607, %v2629
    %v2639 = vsel %vm181, %v2630, %v2631
    %v2640 = vsel %vm183, %v2638, %v2639
    %v2644 = vadd.f32 %v2496, %v2634
    %v2645 = vadd.f32 %v2497, %v2637
    %v2646 = vadd.f32 %v2498, %v2640
    %2647 = vst [vmem:[#allocation1] ss:$4 sm:$0xff] %v26
    %s2648 = scalar_lea.vmem [#allocation1], 32
    %2649 = vst [vmem:[%s2648] ss:$4 sm:$0xff] %v27
    %v2650 = vld.sshfl [vmem:[#allocation1] sm:$0xff pattern:$0x73625140]
    %v2651 = vld.sshfl [vmem:[#allocation1 + $0x8] sm:$0xff pattern:$0x73625140]
    %v2652 = vld.sshfl [vmem:[#allocation1 + $0x10] sm:$0xff pattern:$0x73625140]
    %v2653 = vld.sshfl [vmem:[#allocation1 + $0x18] sm:$0xff pattern:$0x73625140]
    %v2654 = vld.sshfl [vmem:[#allocation1 + $0x20] sm:$0xff pattern:$0x73625140]
    %v2655 = vld.sshfl [vmem:[#allocation1 + $0x28] sm:$0xff pattern:$0x73625140]
    %v2656 = vld.sshfl [vmem:[#allocation1 + $0x30] sm:$0xff pattern:$0x73625140]
    %v2657 = vld.sshfl [vmem:[#allocation1 + $0x38] sm:$0xff pattern:$0x73625140]
    %2658 = vst [vmem:[#allocation1] ss:$4 sm:$0xff] %v28
    %v2659 = vld.sshfl [vmem:[#allocation1] sm:$0xff pattern:$0x73625140]
    %v2660 = vld.sshfl [vmem:[#allocation1 + $0x8] sm:$0xff pattern:$0x73625140]
    %v2661 = vld.sshfl [vmem:[#allocation1 + $0x10] sm:$0xff pattern:$0x73625140]
    %v2662 = vld.sshfl [vmem:[#allocation1 + $0x18] sm:$0xff pattern:$0x73625140]
    %2675 = vrot.lane.b32.xlu0 %v2650, 96
    %v2676 = vpop.permute.xlu0 %2675
    %2677 = vrot.lane.b32.xlu0 %v2651, 96
    %v2678 = vpop.permute.xlu0 %2677
    %2679 = vrot.lane.b32.xlu0 %v2652, 96
    %v2680 = vpop.permute.xlu0 %2679
    %2681 = vrot.lane.b32.xlu0 %v2653, 96
    %v2682 = vpop.permute.xlu0 %2681
    %2683 = vrot.lane.b32.xlu0 %v2654, 96
    %v2684 = vpop.permute.xlu0 %2683
    %2685 = vrot.lane.b32.xlu0 %v2655, 96
    %v2686 = vpop.permute.xlu0 %2685
    %2687 = vrot.lane.b32.xlu0 %v2656, 96
    %v2688 = vpop.permute.xlu0 %2687
    %2689 = vrot.lane.b32.xlu0 %v2657, 96
    %v2690 = vpop.permute.xlu0 %2689
    %2691 = vrot.lane.b32.xlu0 %v2659, 96
    %v2692 = vpop.permute.xlu0 %2691
    %2693 = vrot.lane.b32.xlu0 %v2660, 96
    %v2694 = vpop.permute.xlu0 %2693
    %2695 = vrot.lane.b32.xlu0 %v2661, 96
    %v2696 = vpop.permute.xlu0 %2695
    %2697 = vrot.lane.b32.xlu0 %v2662, 96
    %v2698 = vpop.permute.xlu0 %2697
    %v2699 = vsel %vm398, %v2696, %v2698
    %v2700 = vsel %vm398, %v2694, %v2696
    %v2701 = vsel %vm398, %v2692, %v2694
    %v2702 = vsel %vm398, %v2690, %v2692
    %v2703 = vsel %vm398, %v2688, %v2690
    %v2704 = vsel %vm398, %v2686, %v2688
    %v2705 = vsel %vm398, %v2684, %v2686
    %v2706 = vsel %vm398, %v2682, %v2684
    %v2707 = vsel %vm398, %v2680, %v2682
    %v2708 = vsel %vm398, %v2678, %v2680
    %v2709 = vsel %vm398, %v2676, %v2678
    %v2710 = vsel %vm398, %v2698, %v2676
    %vm2711 = vcmp.lt.s32.totalorder %v30, 1376
    %vm2712 = vcmp.lt.s32.totalorder %v31, 1376
    %vm2713 = vcmp.lt.s32.totalorder %v32, 1376
    %vm2714 = vcmp.lt.s32.totalorder %v33, 1376
    %vm2715 = vcmp.lt.s32.totalorder %v34, 1376
    %vm2716 = vcmp.lt.s32.totalorder %v35, 1376
    %vm2717 = vcmp.lt.s32.totalorder %v36, 1376
    %vm2718 = vcmp.lt.s32.totalorder %v37, 1376
    %vm2719 = vcmp.lt.s32.totalorder %v38, 1376
    %vm2720 = vcmp.lt.s32.totalorder %v39, 1376
    %vm2721 = vcmp.lt.s32.totalorder %v40, 1376
    %vm2722 = vcmp.lt.s32.totalorder %v41, 1376
    %v2723 = vsel %vm2711, 1, 0
    %v2724 = vsel %vm2712, 1, 0
    %v2725 = vsel %vm2713, 1, 0
    %v2726 = vsel %vm2714, 1, 0
    %v2727 = vsel %vm2715, 1, 0
    %v2728 = vsel %vm2716, 1, 0
    %v2729 = vsel %vm2717, 1, 0
    %v2730 = vsel %vm2718, 1, 0
    %v2731 = vsel %vm2719, 1, 0
    %v2732 = vsel %vm2720, 1, 0
    %v2733 = vsel %vm2721, 1, 0
    %v2734 = vsel %vm2722, 1, 0
    %vm2735 = vcmp.eq.s32.totalorder %v2723, 1
    %vm2736 = vcmp.eq.s32.totalorder %v2724, 1
    %vm2737 = vcmp.eq.s32.totalorder %v2725, 1
    %vm2738 = vcmp.eq.s32.totalorder %v2726, 1
    %vm2739 = vcmp.eq.s32.totalorder %v2727, 1
    %vm2740 = vcmp.eq.s32.totalorder %v2728, 1
    %vm2741 = vcmp.eq.s32.totalorder %v2729, 1
    %vm2742 = vcmp.eq.s32.totalorder %v2730, 1
    %vm2743 = vcmp.eq.s32.totalorder %v2731, 1
    %vm2744 = vcmp.eq.s32.totalorder %v2732, 1
    %vm2745 = vcmp.eq.s32.totalorder %v2733, 1
    %vm2746 = vcmp.eq.s32.totalorder %v2734, 1
    %v2747 = vsel %vm2735, %v2708, 0.0
    %v2748 = vsel %vm2736, %v2707, 0.0
    %v2749 = vsel %vm2737, %v2706, 0.0
    %v2750 = vsel %vm2738, %v2705, 0.0
    %v2751 = vsel %vm2739, %v2704, 0.0
    %v2752 = vsel %vm2740, %v2703, 0.0
    %v2753 = vsel %vm2741, %v2702, 0.0
    %v2754 = vsel %vm2742, %v2701, 0.0
    %v2755 = vsel %vm2743, %v2700, 0.0
    %v2756 = vsel %vm2744, %v2699, 0.0
    %v2757 = vsel %vm2745, %v2710, 0.0
    %v2758 = vsel %vm2746, %v2709, 0.0
    %v2771 = vrot.slane %v2748, 6
    %v2772 = vrot.slane %v2749, 4
    %v2773 = vrot.slane %v2750, 2
    %v2774 = vrot.slane %v2752, 6
    %v2775 = vrot.slane %v2753, 4
    %v2776 = vrot.slane %v2754, 2
    %v2777 = vrot.slane %v2756, 6
    %v2778 = vrot.slane %v2757, 4
    %v2779 = vrot.slane %v2758, 2
    %v2780 = vsel %vm179, %v2747, %v2771
    %v2781 = vsel %vm181, %v2772, %v2773
    %v2782 = vsel %vm183, %v2780, %v2781
    %v2783 = vsel %vm179, %v2751, %v2774
    %v2784 = vsel %vm181, %v2775, %v2776
    %v2785 = vsel %vm183, %v2783, %v2784
    %v2786 = vsel %vm179, %v2755, %v2777
    %v2787 = vsel %vm181, %v2778, %v2779
    %v2788 = vsel %vm183, %v2786, %v2787
    %v2792 = vadd.f32 %v2644, %v2782
    %v2793 = vadd.f32 %v2645, %v2785
    %v2794 = vadd.f32 %v2646, %v2788
    %2795 = vst [vmem:[#allocation1] ss:$4 sm:$0xff] %v26
    %s2796 = scalar_lea.vmem [#allocation1], 32
    %2797 = vst [vmem:[%s2796] ss:$4 sm:$0xff] %v27
    %v2798 = vld.sshfl [vmem:[#allocation1] sm:$0xff pattern:$0x73625140]
    %v2799 = vld.sshfl [vmem:[#allocation1 + $0x8] sm:$0xff pattern:$0x73625140]
    %v2800 = vld.sshfl [vmem:[#allocation1 + $0x10] sm:$0xff pattern:$0x73625140]
    %v2801 = vld.sshfl [vmem:[#allocation1 + $0x18] sm:$0xff pattern:$0x73625140]
    %v2802 = vld.sshfl [vmem:[#allocation1 + $0x20] sm:$0xff pattern:$0x73625140]
    %v2803 = vld.sshfl [vmem:[#allocation1 + $0x28] sm:$0xff pattern:$0x73625140]
    %v2804 = vld.sshfl [vmem:[#allocation1 + $0x30] sm:$0xff pattern:$0x73625140]
    %v2805 = vld.sshfl [vmem:[#allocation1 + $0x38] sm:$0xff pattern:$0x73625140]
    %2806 = vst [vmem:[#allocation1] ss:$4 sm:$0xff] %v28
    %v2807 = vld.sshfl [vmem:[#allocation1] sm:$0xff pattern:$0x73625140]
    %v2808 = vld.sshfl [vmem:[#allocation1 + $0x8] sm:$0xff pattern:$0x73625140]
    %v2809 = vld.sshfl [vmem:[#allocation1 + $0x10] sm:$0xff pattern:$0x73625140]
    %v2810 = vld.sshfl [vmem:[#allocation1 + $0x18] sm:$0xff pattern:$0x73625140]
    %2823 = vrot.lane.b32.xlu0 %v2798, 32
    %v2824 = vpop.permute.xlu0 %2823
    %2825 = vrot.lane.b32.xlu0 %v2799, 32
    %v2826 = vpop.permute.xlu0 %2825
    %2827 = vrot.lane.b32.xlu0 %v2800, 32
    %v2828 = vpop.permute.xlu0 %2827
    %2829 = vrot.lane.b32.xlu0 %v2801, 32
    %v2830 = vpop.permute.xlu0 %2829
    %2831 = vrot.lane.b32.xlu0 %v2802, 32
    %v2832 = vpop.permute.xlu0 %2831
    %2833 = vrot.lane.b32.xlu0 %v2803, 32
    %v2834 = vpop.permute.xlu0 %2833
    %2835 = vrot.lane.b32.xlu0 %v2804, 32
    %v2836 = vpop.permute.xlu0 %2835
    %2837 = vrot.lane.b32.xlu0 %v2805, 32
    %v2838 = vpop.permute.xlu0 %2837
    %2839 = vrot.lane.b32.xlu0 %v2807, 32
    %v2840 = vpop.permute.xlu0 %2839
    %2841 = vrot.lane.b32.xlu0 %v2808, 32
    %v2842 = vpop.permute.xlu0 %2841
    %2843 = vrot.lane.b32.xlu0 %v2809, 32
    %v2844 = vpop.permute.xlu0 %2843
    %2845 = vrot.lane.b32.xlu0 %v2810, 32
    %v2846 = vpop.permute.xlu0 %2845
    %v2847 = vsel %vm547, %v2844, %v2846
    %v2848 = vsel %vm547, %v2842, %v2844
    %v2849 = vsel %vm547, %v2840, %v2842
    %v2850 = vsel %vm547, %v2838, %v2840
    %v2851 = vsel %vm547, %v2836, %v2838
    %v2852 = vsel %vm547, %v2834, %v2836
    %v2853 = vsel %vm547, %v2832, %v2834
    %v2854 = vsel %vm547, %v2830, %v2832
    %v2855 = vsel %vm547, %v2828, %v2830
    %v2856 = vsel %vm547, %v2826, %v2828
    %v2857 = vsel %vm547, %v2824, %v2826
    %v2858 = vsel %vm547, %v2846, %v2824
    %vm2859 = vcmp.ge.s32.totalorder %v30, 160
    %vm2860 = vcmp.ge.s32.totalorder %v31, 160
    %vm2861 = vcmp.ge.s32.totalorder %v32, 160
    %vm2862 = vcmp.ge.s32.totalorder %v33, 160
    %vm2863 = vcmp.ge.s32.totalorder %v34, 160
    %vm2864 = vcmp.ge.s32.totalorder %v35, 160
    %vm2865 = vcmp.ge.s32.totalorder %v36, 160
    %vm2866 = vcmp.ge.s32.totalorder %v37, 160
    %vm2867 = vcmp.ge.s32.totalorder %v38, 160
    %vm2868 = vcmp.ge.s32.totalorder %v39, 160
    %vm2869 = vcmp.ge.s32.totalorder %v40, 160
    %vm2870 = vcmp.ge.s32.totalorder %v41, 160
    %v2871 = vsel %vm2859, 1, 0
    %v2872 = vsel %vm2860, 1, 0
    %v2873 = vsel %vm2861, 1, 0
    %v2874 = vsel %vm2862, 1, 0
    %v2875 = vsel %vm2863, 1, 0
    %v2876 = vsel %vm2864, 1, 0
    %v2877 = vsel %vm2865, 1, 0
    %v2878 = vsel %vm2866, 1, 0
    %v2879 = vsel %vm2867, 1, 0
    %v2880 = vsel %vm2868, 1, 0
    %v2881 = vsel %vm2869, 1, 0
    %v2882 = vsel %vm2870, 1, 0
    %vm2883 = vcmp.eq.s32.totalorder %v2871, 1
    %vm2884 = vcmp.eq.s32.totalorder %v2872, 1
    %vm2885 = vcmp.eq.s32.totalorder %v2873, 1
    %vm2886 = vcmp.eq.s32.totalorder %v2874, 1
    %vm2887 = vcmp.eq.s32.totalorder %v2875, 1
    %vm2888 = vcmp.eq.s32.totalorder %v2876, 1
    %vm2889 = vcmp.eq.s32.totalorder %v2877, 1
    %vm2890 = vcmp.eq.s32.totalorder %v2878, 1
    %vm2891 = vcmp.eq.s32.totalorder %v2879, 1
    %vm2892 = vcmp.eq.s32.totalorder %v2880, 1
    %vm2893 = vcmp.eq.s32.totalorder %v2881, 1
    %vm2894 = vcmp.eq.s32.totalorder %v2882, 1
    %v2895 = vsel %vm2883, %v2847, 0.0
    %v2896 = vsel %vm2884, %v2858, 0.0
    %v2897 = vsel %vm2885, %v2857, 0.0
    %v2898 = vsel %vm2886, %v2856, 0.0
    %v2899 = vsel %vm2887, %v2855, 0.0
    %v2900 = vsel %vm2888, %v2854, 0.0
    %v2901 = vsel %vm2889, %v2853, 0.0
    %v2902 = vsel %vm2890, %v2852, 0.0
    %v2903 = vsel %vm2891, %v2851, 0.0
    %v2904 = vsel %vm2892, %v2850, 0.0
    %v2905 = vsel %vm2893, %v2849, 0.0
    %v2906 = vsel %vm2894, %v2848, 0.0
    %v2919 = vrot.slane %v2896, 6
    %v2920 = vrot.slane %v2897, 4
    %v2921 = vrot.slane %v2898, 2
    %v2922 = vrot.slane %v2900, 6
    %v2923 = vrot.slane %v2901, 4
    %v2924 = vrot.slane %v2902, 2
    %v2925 = vrot.slane %v2904, 6
    %v2926 = vrot.slane %v2905, 4
    %v2927 = vrot.slane %v2906, 2
    %v2928 = vsel %vm179, %v2895, %v2919
    %v2929 = vsel %vm181, %v2920, %v2921
    %v2930 = vsel %vm183, %v2928, %v2929
    %v2931 = vsel %vm179, %v2899, %v2922
    %v2932 = vsel %vm181, %v2923, %v2924
    %v2933 = vsel %vm183, %v2931, %v2932
    %v2934 = vsel %vm179, %v2903, %v2925
    %v2935 = vsel %vm181, %v2926, %v2927
    %v2936 = vsel %vm183, %v2934, %v2935
    %v2940 = vadd.f32 %v2792, %v2930
    %v2941 = vadd.f32 %v2793, %v2933
    %v2942 = vadd.f32 %v2794, %v2936
    %2943 = vst [vmem:[#allocation1] ss:$4 sm:$0xff] %v26
    %s2944 = scalar_lea.vmem [#allocation1], 32
    %2945 = vst [vmem:[%s2944] ss:$4 sm:$0xff] %v27
    %v2946 = vld.sshfl [vmem:[#allocation1] sm:$0xff pattern:$0x73625140]
    %v2947 = vld.sshfl [vmem:[#allocation1 + $0x8] sm:$0xff pattern:$0x73625140]
    %v2948 = vld.sshfl [vmem:[#allocation1 + $0x10] sm:$0xff pattern:$0x73625140]
    %v2949 = vld.sshfl [vmem:[#allocation1 + $0x18] sm:$0xff pattern:$0x73625140]
    %v2950 = vld.sshfl [vmem:[#allocation1 + $0x20] sm:$0xff pattern:$0x73625140]
    %v2951 = vld.sshfl [vmem:[#allocation1 + $0x28] sm:$0xff pattern:$0x73625140]
    %v2952 = vld.sshfl [vmem:[#allocation1 + $0x30] sm:$0xff pattern:$0x73625140]
    %v2953 = vld.sshfl [vmem:[#allocation1 + $0x38] sm:$0xff pattern:$0x73625140]
    %2954 = vst [vmem:[#allocation1] ss:$4 sm:$0xff] %v28
    %v2955 = vld.sshfl [vmem:[#allocation1] sm:$0xff pattern:$0x73625140]
    %v2956 = vld.sshfl [vmem:[#allocation1 + $0x8] sm:$0xff pattern:$0x73625140]
    %v2957 = vld.sshfl [vmem:[#allocation1 + $0x10] sm:$0xff pattern:$0x73625140]
    %v2958 = vld.sshfl [vmem:[#allocation1 + $0x18] sm:$0xff pattern:$0x73625140]
    %2971 = vrot.lane.b32.xlu0 %v2946, 80
    %v2972 = vpop.permute.xlu0 %2971
    %2973 = vrot.lane.b32.xlu0 %v2947, 80
    %v2974 = vpop.permute.xlu0 %2973
    %2975 = vrot.lane.b32.xlu0 %v2948, 80
    %v2976 = vpop.permute.xlu0 %2975
    %2977 = vrot.lane.b32.xlu0 %v2949, 80
    %v2978 = vpop.permute.xlu0 %2977
    %2979 = vrot.lane.b32.xlu0 %v2950, 80
    %v2980 = vpop.permute.xlu0 %2979
    %2981 = vrot.lane.b32.xlu0 %v2951, 80
    %v2982 = vpop.permute.xlu0 %2981
    %2983 = vrot.lane.b32.xlu0 %v2952, 80
    %v2984 = vpop.permute.xlu0 %2983
    %2985 = vrot.lane.b32.xlu0 %v2953, 80
    %v2986 = vpop.permute.xlu0 %2985
    %2987 = vrot.lane.b32.xlu0 %v2955, 80
    %v2988 = vpop.permute.xlu0 %2987
    %2989 = vrot.lane.b32.xlu0 %v2956, 80
    %v2990 = vpop.permute.xlu0 %2989
    %2991 = vrot.lane.b32.xlu0 %v2957, 80
    %v2992 = vpop.permute.xlu0 %2991
    %2993 = vrot.lane.b32.xlu0 %v2958, 80
    %v2994 = vpop.permute.xlu0 %2993
    %v2995 = vsel %vm696, %v2992, %v2994
    %v2996 = vsel %vm696, %v2990, %v2992
    %v2997 = vsel %vm696, %v2988, %v2990
    %v2998 = vsel %vm696, %v2986, %v2988
    %v2999 = vsel %vm696, %v2984, %v2986
    %v3000 = vsel %vm696, %v2982, %v2984
    %v3001 = vsel %vm696, %v2980, %v2982
    %v3002 = vsel %vm696, %v2978, %v2980
    %v3003 = vsel %vm696, %v2976, %v2978
    %v3004 = vsel %vm696, %v2974, %v2976
    %v3005 = vsel %vm696, %v2972, %v2974
    %v3006 = vsel %vm696, %v2994, %v2972
    %vm3007 = vcmp.lt.s32.totalorder %v30, 1360
    %vm3008 = vcmp.lt.s32.totalorder %v31, 1360
    %vm3009 = vcmp.lt.s32.totalorder %v32, 1360
    %vm3010 = vcmp.lt.s32.totalorder %v33, 1360
    %vm3011 = vcmp.lt.s32.totalorder %v34, 1360
    %vm3012 = vcmp.lt.s32.totalorder %v35, 1360
    %vm3013 = vcmp.lt.s32.totalorder %v36, 1360
    %vm3014 = vcmp.lt.s32.totalorder %v37, 1360
    %vm3015 = vcmp.lt.s32.totalorder %v38, 1360
    %vm3016 = vcmp.lt.s32.totalorder %v39, 1360
    %vm3017 = vcmp.lt.s32.totalorder %v40, 1360
    %vm3018 = vcmp.lt.s32.totalorder %v41, 1360
    %v3019 = vsel %vm3007, 1, 0
    %v3020 = vsel %vm3008, 1, 0
    %v3021 = vsel %vm3009, 1, 0
    %v3022 = vsel %vm3010, 1, 0
    %v3023 = vsel %vm3011, 1, 0
    %v3024 = vsel %vm3012, 1, 0
    %v3025 = vsel %vm3013, 1, 0
    %v3026 = vsel %vm3014, 1, 0
    %v3027 = vsel %vm3015, 1, 0
    %v3028 = vsel %vm3016, 1, 0
    %v3029 = vsel %vm3017, 1, 0
    %v3030 = vsel %vm3018, 1, 0
    %vm3031 = vcmp.eq.s32.totalorder %v3019, 1
    %vm3032 = vcmp.eq.s32.totalorder %v3020, 1
    %vm3033 = vcmp.eq.s32.totalorder %v3021, 1
    %vm3034 = vcmp.eq.s32.totalorder %v3022, 1
    %vm3035 = vcmp.eq.s32.totalorder %v3023, 1
    %vm3036 = vcmp.eq.s32.totalorder %v3024, 1
    %vm3037 = vcmp.eq.s32.totalorder %v3025, 1
    %vm3038 = vcmp.eq.s32.totalorder %v3026, 1
    %vm3039 = vcmp.eq.s32.totalorder %v3027, 1
    %vm3040 = vcmp.eq.s32.totalorder %v3028, 1
    %vm3041 = vcmp.eq.s32.totalorder %v3029, 1
    %vm3042 = vcmp.eq.s32.totalorder %v3030, 1
    %v3043 = vsel %vm3031, %v3004, 0.0
    %v3044 = vsel %vm3032, %v3003, 0.0
    %v3045 = vsel %vm3033, %v3002, 0.0
    %v3046 = vsel %vm3034, %v3001, 0.0
    %v3047 = vsel %vm3035, %v3000, 0.0
    %v3048 = vsel %vm3036, %v2999, 0.0
    %v3049 = vsel %vm3037, %v2998, 0.0
    %v3050 = vsel %vm3038, %v2997, 0.0
    %v3051 = vsel %vm3039, %v2996, 0.0
    %v3052 = vsel %vm3040, %v2995, 0.0
    %v3053 = vsel %vm3041, %v3006, 0.0
    %v3054 = vsel %vm3042, %v3005, 0.0
    %v3067 = vrot.slane %v3044, 6
    %v3068 = vrot.slane %v3045, 4
    %v3069 = vrot.slane %v3046, 2
    %v3070 = vrot.slane %v3048, 6
    %v3071 = vrot.slane %v3049, 4
    %v3072 = vrot.slane %v3050, 2
    %v3073 = vrot.slane %v3052, 6
    %v3074 = vrot.slane %v3053, 4
    %v3075 = vrot.slane %v3054, 2
    %v3076 = vsel %vm179, %v3043, %v3067
    %v3077 = vsel %vm181, %v3068, %v3069
    %v3078 = vsel %vm183, %v3076, %v3077
    %v3079 = vsel %vm179, %v3047, %v3070
    %v3080 = vsel %vm181, %v3071, %v3072
    %v3081 = vsel %vm183, %v3079, %v3080
    %v3082 = vsel %vm179, %v3051, %v3073
    %v3083 = vsel %vm181, %v3074, %v3075
    %v3084 = vsel %vm183, %v3082, %v3083
    %v3088 = vadd.f32 %v2940, %v3078
    %v3089 = vadd.f32 %v2941, %v3081
    %v3090 = vadd.f32 %v2942, %v3084
    %3091 = vst [vmem:[#allocation1] ss:$4 sm:$0xff] %v26
    %s3092 = scalar_lea.vmem [#allocation1], 32
    %3093 = vst [vmem:[%s3092] ss:$4 sm:$0xff] %v27
    %v3094 = vld.sshfl [vmem:[#allocation1] sm:$0xff pattern:$0x73625140]
    %v3095 = vld.sshfl [vmem:[#allocation1 + $0x8] sm:$0xff pattern:$0x73625140]
    %v3096 = vld.sshfl [vmem:[#allocation1 + $0x10] sm:$0xff pattern:$0x73625140]
    %v3097 = vld.sshfl [vmem:[#allocation1 + $0x18] sm:$0xff pattern:$0x73625140]
    %v3098 = vld.sshfl [vmem:[#allocation1 + $0x20] sm:$0xff pattern:$0x73625140]
    %v3099 = vld.sshfl [vmem:[#allocation1 + $0x28] sm:$0xff pattern:$0x73625140]
    %v3100 = vld.sshfl [vmem:[#allocation1 + $0x30] sm:$0xff pattern:$0x73625140]
    %v3101 = vld.sshfl [vmem:[#allocation1 + $0x38] sm:$0xff pattern:$0x73625140]
    %3102 = vst [vmem:[#allocation1] ss:$4 sm:$0xff] %v28
    %v3103 = vld.sshfl [vmem:[#allocation1] sm:$0xff pattern:$0x73625140]
    %v3104 = vld.sshfl [vmem:[#allocation1 + $0x8] sm:$0xff pattern:$0x73625140]
    %v3105 = vld.sshfl [vmem:[#allocation1 + $0x10] sm:$0xff pattern:$0x73625140]
    %v3106 = vld.sshfl [vmem:[#allocation1 + $0x18] sm:$0xff pattern:$0x73625140]
    %3119 = vrot.lane.b32.xlu0 %v3094, 48
    %v3120 = vpop.permute.xlu0 %3119
    %3121 = vrot.lane.b32.xlu0 %v3095, 48
    %v3122 = vpop.permute.xlu0 %3121
    %3123 = vrot.lane.b32.xlu0 %v3096, 48
    %v3124 = vpop.permute.xlu0 %3123
    %3125 = vrot.lane.b32.xlu0 %v3097, 48
    %v3126 = vpop.permute.xlu0 %3125
    %3127 = vrot.lane.b32.xlu0 %v3098, 48
    %v3128 = vpop.permute.xlu0 %3127
    %3129 = vrot.lane.b32.xlu0 %v3099, 48
    %v3130 = vpop.permute.xlu0 %3129
    %3131 = vrot.lane.b32.xlu0 %v3100, 48
    %v3132 = vpop.permute.xlu0 %3131
    %3133 = vrot.lane.b32.xlu0 %v3101, 48
    %v3134 = vpop.permute.xlu0 %3133
    %3135 = vrot.lane.b32.xlu0 %v3103, 48
    %v3136 = vpop.permute.xlu0 %3135
    %3137 = vrot.lane.b32.xlu0 %v3104, 48
    %v3138 = vpop.permute.xlu0 %3137
    %3139 = vrot.lane.b32.xlu0 %v3105, 48
    %v3140 = vpop.permute.xlu0 %3139
    %3141 = vrot.lane.b32.xlu0 %v3106, 48
    %v3142 = vpop.permute.xlu0 %3141
    %v3143 = vsel %vm845, %v3140, %v3142
    %v3144 = vsel %vm845, %v3138, %v3140
    %v3145 = vsel %vm845, %v3136, %v3138
    %v3146 = vsel %vm845, %v3134, %v3136
    %v3147 = vsel %vm845, %v3132, %v3134
    %v3148 = vsel %vm845, %v3130, %v3132
    %v3149 = vsel %vm845, %v3128, %v3130
    %v3150 = vsel %vm845, %v3126, %v3128
    %v3151 = vsel %vm845, %v3124, %v3126
    %v3152 = vsel %vm845, %v3122, %v3124
    %v3153 = vsel %vm845, %v3120, %v3122
    %v3154 = vsel %vm845, %v3142, %v3120
    %vm3155 = vcmp.ge.s32.totalorder %v30, 176
    %vm3156 = vcmp.ge.s32.totalorder %v31, 176
    %vm3157 = vcmp.ge.s32.totalorder %v32, 176
    %vm3158 = vcmp.ge.s32.totalorder %v33, 176
    %vm3159 = vcmp.ge.s32.totalorder %v34, 176
    %vm3160 = vcmp.ge.s32.totalorder %v35, 176
    %vm3161 = vcmp.ge.s32.totalorder %v36, 176
    %vm3162 = vcmp.ge.s32.totalorder %v37, 176
    %vm3163 = vcmp.ge.s32.totalorder %v38, 176
    %vm3164 = vcmp.ge.s32.totalorder %v39, 176
    %vm3165 = vcmp.ge.s32.totalorder %v40, 176
    %vm3166 = vcmp.ge.s32.totalorder %v41, 176
    %v3167 = vsel %vm3155, 1, 0
    %v3168 = vsel %vm3156, 1, 0
    %v3169 = vsel %vm3157, 1, 0
    %v3170 = vsel %vm3158, 1, 0
    %v3171 = vsel %vm3159, 1, 0
    %v3172 = vsel %vm3160, 1, 0
    %v3173 = vsel %vm3161, 1, 0
    %v3174 = vsel %vm3162, 1, 0
    %v3175 = vsel %vm3163, 1, 0
    %v3176 = vsel %vm3164, 1, 0
    %v3177 = vsel %vm3165, 1, 0
    %v3178 = vsel %vm3166, 1, 0
    %vm3179 = vcmp.eq.s32.totalorder %v3167, 1
    %vm3180 = vcmp.eq.s32.totalorder %v3168, 1
    %vm3181 = vcmp.eq.s32.totalorder %v3169, 1
    %vm3182 = vcmp.eq.s32.totalorder %v3170, 1
    %vm3183 = vcmp.eq.s32.totalorder %v3171, 1
    %vm3184 = vcmp.eq.s32.totalorder %v3172, 1
    %vm3185 = vcmp.eq.s32.totalorder %v3173, 1
    %vm3186 = vcmp.eq.s32.totalorder %v3174, 1
    %vm3187 = vcmp.eq.s32.totalorder %v3175, 1
    %vm3188 = vcmp.eq.s32.totalorder %v3176, 1
    %vm3189 = vcmp.eq.s32.totalorder %v3177, 1
    %vm3190 = vcmp.eq.s32.totalorder %v3178, 1
    %v3191 = vsel %vm3179, %v3143, 0.0
    %v3192 = vsel %vm3180, %v3154, 0.0
    %v3193 = vsel %vm3181, %v3153, 0.0
    %v3194 = vsel %vm3182, %v3152, 0.0
    %v3195 = vsel %vm3183, %v3151, 0.0
    %v3196 = vsel %vm3184, %v3150, 0.0
    %v3197 = vsel %vm3185, %v3149, 0.0
    %v3198 = vsel %vm3186, %v3148, 0.0
    %v3199 = vsel %vm3187, %v3147, 0.0
    %v3200 = vsel %vm3188, %v3146, 0.0
    %v3201 = vsel %vm3189, %v3145, 0.0
    %v3202 = vsel %vm3190, %v3144, 0.0
    %v3215 = vrot.slane %v3192, 6
    %v3216 = vrot.slane %v3193, 4
    %v3217 = vrot.slane %v3194, 2
    %v3218 = vrot.slane %v3196, 6
    %v3219 = vrot.slane %v3197, 4
    %v3220 = vrot.slane %v3198, 2
    %v3221 = vrot.slane %v3200, 6
    %v3222 = vrot.slane %v3201, 4
    %v3223 = vrot.slane %v3202, 2
    %v3224 = vsel %vm179, %v3191, %v3215
    %v3225 = vsel %vm181, %v3216, %v3217
    %v3226 = vsel %vm183, %v3224, %v3225
    %v3227 = vsel %vm179, %v3195, %v3218
    %v3228 = vsel %vm181, %v3219, %v3220
    %v3229 = vsel %vm183, %v3227, %v3228
    %v3230 = vsel %vm179, %v3199, %v3221
    %v3231 = vsel %vm181, %v3222, %v3223
    %v3232 = vsel %vm183, %v3230, %v3231
    %v3236 = vadd.f32 %v3088, %v3226
    %v3237 = vadd.f32 %v3089, %v3229
    %v3238 = vadd.f32 %v3090, %v3232
    %3239 = vst [vmem:[#allocation1] ss:$4 sm:$0xff] %v26
    %s3240 = scalar_lea.vmem [#allocation1], 32
    %3241 = vst [vmem:[%s3240] ss:$4 sm:$0xff] %v27
    %v3242 = vld.sshfl [vmem:[#allocation1] sm:$0xff pattern:$0x73625140]
    %v3243 = vld.sshfl [vmem:[#allocation1 + $0x8] sm:$0xff pattern:$0x73625140]
    %v3244 = vld.sshfl [vmem:[#allocation1 + $0x10] sm:$0xff pattern:$0x73625140]
    %v3245 = vld.sshfl [vmem:[#allocation1 + $0x18] sm:$0xff pattern:$0x73625140]
    %v3246 = vld.sshfl [vmem:[#allocation1 + $0x20] sm:$0xff pattern:$0x73625140]
    %v3247 = vld.sshfl [vmem:[#allocation1 + $0x28] sm:$0xff pattern:$0x73625140]
    %v3248 = vld.sshfl [vmem:[#allocation1 + $0x30] sm:$0xff pattern:$0x73625140]
    %v3249 = vld.sshfl [vmem:[#allocation1 + $0x38] sm:$0xff pattern:$0x73625140]
    %3250 = vst [vmem:[#allocation1] ss:$4 sm:$0xff] %v28
    %v3251 = vld.sshfl [vmem:[#allocation1] sm:$0xff pattern:$0x73625140]
    %v3252 = vld.sshfl [vmem:[#allocation1 + $0x8] sm:$0xff pattern:$0x73625140]
    %v3253 = vld.sshfl [vmem:[#allocation1 + $0x10] sm:$0xff pattern:$0x73625140]
    %v3254 = vld.sshfl [vmem:[#allocation1 + $0x18] sm:$0xff pattern:$0x73625140]
    %3267 = vrot.lane.b32.xlu0 %v3242, 64
    %v3268 = vpop.permute.xlu0 %3267
    %3269 = vrot.lane.b32.xlu0 %v3243, 64
    %v3270 = vpop.permute.xlu0 %3269
    %3271 = vrot.lane.b32.xlu0 %v3244, 64
    %v3272 = vpop.permute.xlu0 %3271
    %3273 = vrot.lane.b32.xlu0 %v3245, 64
    %v3274 = vpop.permute.xlu0 %3273
    %3275 = vrot.lane.b32.xlu0 %v3246, 64
    %v3276 = vpop.permute.xlu0 %3275
    %3277 = vrot.lane.b32.xlu0 %v3247, 64
    %v3278 = vpop.permute.xlu0 %3277
    %3279 = vrot.lane.b32.xlu0 %v3248, 64
    %v3280 = vpop.permute.xlu0 %3279
    %3281 = vrot.lane.b32.xlu0 %v3249, 64
    %v3282 = vpop.permute.xlu0 %3281
    %3283 = vrot.lane.b32.xlu0 %v3251, 64
    %v3284 = vpop.permute.xlu0 %3283
    %3285 = vrot.lane.b32.xlu0 %v3252, 64
    %v3286 = vpop.permute.xlu0 %3285
    %3287 = vrot.lane.b32.xlu0 %v3253, 64
    %v3288 = vpop.permute.xlu0 %3287
    %3289 = vrot.lane.b32.xlu0 %v3254, 64
    %v3290 = vpop.permute.xlu0 %3289
    %v3291 = vsel %vm994, %v3288, %v3290
    %v3292 = vsel %vm994, %v3286, %v3288
    %v3293 = vsel %vm994, %v3284, %v3286
    %v3294 = vsel %vm994, %v3282, %v3284
    %v3295 = vsel %vm994, %v3280, %v3282
    %v3296 = vsel %vm994, %v3278, %v3280
    %v3297 = vsel %vm994, %v3276, %v3278
    %v3298 = vsel %vm994, %v3274, %v3276
    %v3299 = vsel %vm994, %v3272, %v3274
    %v3300 = vsel %vm994, %v3270, %v3272
    %v3301 = vsel %vm994, %v3268, %v3270
    %v3302 = vsel %vm994, %v3290, %v3268
    %vm3303 = vcmp.lt.s32.totalorder %v30, 1344
    %vm3304 = vcmp.lt.s32.totalorder %v31, 1344
    %vm3305 = vcmp.lt.s32.totalorder %v32, 1344
    %vm3306 = vcmp.lt.s32.totalorder %v33, 1344
    %vm3307 = vcmp.lt.s32.totalorder %v34, 1344
    %vm3308 = vcmp.lt.s32.totalorder %v35, 1344
    %vm3309 = vcmp.lt.s32.totalorder %v36, 1344
    %vm3310 = vcmp.lt.s32.totalorder %v37, 1344
    %vm3311 = vcmp.lt.s32.totalorder %v38, 1344
    %vm3312 = vcmp.lt.s32.totalorder %v39, 1344
    %vm3313 = vcmp.lt.s32.totalorder %v40, 1344
    %vm3314 = vcmp.lt.s32.totalorder %v41, 1344
    %v3315 = vsel %vm3303, 1, 0
    %v3316 = vsel %vm3304, 1, 0
    %v3317 = vsel %vm3305, 1, 0
    %v3318 = vsel %vm3306, 1, 0
    %v3319 = vsel %vm3307, 1, 0
    %v3320 = vsel %vm3308, 1, 0
    %v3321 = vsel %vm3309, 1, 0
    %v3322 = vsel %vm3310, 1, 0
    %v3323 = vsel %vm3311, 1, 0
    %v3324 = vsel %vm3312, 1, 0
    %v3325 = vsel %vm3313, 1, 0
    %v3326 = vsel %vm3314, 1, 0
    %vm3327 = vcmp.eq.s32.totalorder %v3315, 1
    %vm3328 = vcmp.eq.s32.totalorder %v3316, 1
    %vm3329 = vcmp.eq.s32.totalorder %v3317, 1
    %vm3330 = vcmp.eq.s32.totalorder %v3318, 1
    %vm3331 = vcmp.eq.s32.totalorder %v3319, 1
    %vm3332 = vcmp.eq.s32.totalorder %v3320, 1
    %vm3333 = vcmp.eq.s32.totalorder %v3321, 1
    %vm3334 = vcmp.eq.s32.totalorder %v3322, 1
    %vm3335 = vcmp.eq.s32.totalorder %v3323, 1
    %vm3336 = vcmp.eq.s32.totalorder %v3324, 1
    %vm3337 = vcmp.eq.s32.totalorder %v3325, 1
    %vm3338 = vcmp.eq.s32.totalorder %v3326, 1
    %v3339 = vsel %vm3327, %v3300, 0.0
    %v3340 = vsel %vm3328, %v3299, 0.0
    %v3341 = vsel %vm3329, %v3298, 0.0
    %v3342 = vsel %vm3330, %v3297, 0.0
    %v3343 = vsel %vm3331, %v3296, 0.0
    %v3344 = vsel %vm3332, %v3295, 0.0
    %v3345 = vsel %vm3333, %v3294, 0.0
    %v3346 = vsel %vm3334, %v3293, 0.0
    %v3347 = vsel %vm3335, %v3292, 0.0
    %v3348 = vsel %vm3336, %v3291, 0.0
    %v3349 = vsel %vm3337, %v3302, 0.0
    %v3350 = vsel %vm3338, %v3301, 0.0
    %v3363 = vrot.slane %v3340, 6
    %v3364 = vrot.slane %v3341, 4
    %v3365 = vrot.slane %v3342, 2
    %v3366 = vrot.slane %v3344, 6
    %v3367 = vrot.slane %v3345, 4
    %v3368 = vrot.slane %v3346, 2
    %v3369 = vrot.slane %v3348, 6
    %v3370 = vrot.slane %v3349, 4
    %v3371 = vrot.slane %v3350, 2
    %v3372 = vsel %vm179, %v3339, %v3363
    %v3373 = vsel %vm181, %v3364, %v3365
    %v3374 = vsel %vm183, %v3372, %v3373
    %v3375 = vsel %vm179, %v3343, %v3366
    %v3376 = vsel %vm181, %v3367, %v3368
    %v3377 = vsel %vm183, %v3375, %v3376
    %v3378 = vsel %vm179, %v3347, %v3369
    %v3379 = vsel %vm181, %v3370, %v3371
    %v3380 = vsel %vm183, %v3378, %v3379
    %v3384 = vadd.f32 %v3236, %v3374
    %v3385 = vadd.f32 %v3237, %v3377
    %v3386 = vadd.f32 %v3238, %v3380
    %3387 = vst [vmem:[#allocation1] ss:$4 sm:$0xff] %v26
    %s3388 = scalar_lea.vmem [#allocation1], 32
    %3389 = vst [vmem:[%s3388] ss:$4 sm:$0xff] %v27
    %v3390 = vld.sshfl [vmem:[#allocation1] sm:$0xff pattern:$0x73625140]
    %v3391 = vld.sshfl [vmem:[#allocation1 + $0x8] sm:$0xff pattern:$0x73625140]
    %v3392 = vld.sshfl [vmem:[#allocation1 + $0x10] sm:$0xff pattern:$0x73625140]
    %v3393 = vld.sshfl [vmem:[#allocation1 + $0x18] sm:$0xff pattern:$0x73625140]
    %v3394 = vld.sshfl [vmem:[#allocation1 + $0x20] sm:$0xff pattern:$0x73625140]
    %v3395 = vld.sshfl [vmem:[#allocation1 + $0x28] sm:$0xff pattern:$0x73625140]
    %v3396 = vld.sshfl [vmem:[#allocation1 + $0x30] sm:$0xff pattern:$0x73625140]
    %v3397 = vld.sshfl [vmem:[#allocation1 + $0x38] sm:$0xff pattern:$0x73625140]
    %3398 = vst [vmem:[#allocation1] ss:$4 sm:$0xff] %v28
    %v3399 = vld.sshfl [vmem:[#allocation1] sm:$0xff pattern:$0x73625140]
    %v3400 = vld.sshfl [vmem:[#allocation1 + $0x8] sm:$0xff pattern:$0x73625140]
    %v3401 = vld.sshfl [vmem:[#allocation1 + $0x10] sm:$0xff pattern:$0x73625140]
    %v3402 = vld.sshfl [vmem:[#allocation1 + $0x18] sm:$0xff pattern:$0x73625140]
    %3415 = vrot.lane.b32.xlu0 %v3390, 64
    %v3416 = vpop.permute.xlu0 %3415
    %3417 = vrot.lane.b32.xlu0 %v3391, 64
    %v3418 = vpop.permute.xlu0 %3417
    %3419 = vrot.lane.b32.xlu0 %v3392, 64
    %v3420 = vpop.permute.xlu0 %3419
    %3421 = vrot.lane.b32.xlu0 %v3393, 64
    %v3422 = vpop.permute.xlu0 %3421
    %3423 = vrot.lane.b32.xlu0 %v3394, 64
    %v3424 = vpop.permute.xlu0 %3423
    %3425 = vrot.lane.b32.xlu0 %v3395, 64
    %v3426 = vpop.permute.xlu0 %3425
    %3427 = vrot.lane.b32.xlu0 %v3396, 64
    %v3428 = vpop.permute.xlu0 %3427
    %3429 = vrot.lane.b32.xlu0 %v3397, 64
    %v3430 = vpop.permute.xlu0 %3429
    %3431 = vrot.lane.b32.xlu0 %v3399, 64
    %v3432 = vpop.permute.xlu0 %3431
    %3433 = vrot.lane.b32.xlu0 %v3400, 64
    %v3434 = vpop.permute.xlu0 %3433
    %3435 = vrot.lane.b32.xlu0 %v3401, 64
    %v3436 = vpop.permute.xlu0 %3435
    %3437 = vrot.lane.b32.xlu0 %v3402, 64
    %v3438 = vpop.permute.xlu0 %3437
    %v3439 = vsel %vm994, %v3436, %v3438
    %v3440 = vsel %vm994, %v3434, %v3436
    %v3441 = vsel %vm994, %v3432, %v3434
    %v3442 = vsel %vm994, %v3430, %v3432
    %v3443 = vsel %vm994, %v3428, %v3430
    %v3444 = vsel %vm994, %v3426, %v3428
    %v3445 = vsel %vm994, %v3424, %v3426
    %v3446 = vsel %vm994, %v3422, %v3424
    %v3447 = vsel %vm994, %v3420, %v3422
    %v3448 = vsel %vm994, %v3418, %v3420
    %v3449 = vsel %vm994, %v3416, %v3418
    %v3450 = vsel %vm994, %v3438, %v3416
    %vm3451 = vcmp.ge.s32.totalorder %v30, 192
    %vm3452 = vcmp.ge.s32.totalorder %v31, 192
    %vm3453 = vcmp.ge.s32.totalorder %v32, 192
    %vm3454 = vcmp.ge.s32.totalorder %v33, 192
    %vm3455 = vcmp.ge.s32.totalorder %v34, 192
    %vm3456 = vcmp.ge.s32.totalorder %v35, 192
    %vm3457 = vcmp.ge.s32.totalorder %v36, 192
    %vm3458 = vcmp.ge.s32.totalorder %v37, 192
    %vm3459 = vcmp.ge.s32.totalorder %v38, 192
    %vm3460 = vcmp.ge.s32.totalorder %v39, 192
    %vm3461 = vcmp.ge.s32.totalorder %v40, 192
    %vm3462 = vcmp.ge.s32.totalorder %v41, 192
    %v3463 = vsel %vm3451, 1, 0
    %v3464 = vsel %vm3452, 1, 0
    %v3465 = vsel %vm3453, 1, 0
    %v3466 = vsel %vm3454, 1, 0
    %v3467 = vsel %vm3455, 1, 0
    %v3468 = vsel %vm3456, 1, 0
    %v3469 = vsel %vm3457, 1, 0
    %v3470 = vsel %vm3458, 1, 0
    %v3471 = vsel %vm3459, 1, 0
    %v3472 = vsel %vm3460, 1, 0
    %v3473 = vsel %vm3461, 1, 0
    %v3474 = vsel %vm3462, 1, 0
    %vm3475 = vcmp.eq.s32.totalorder %v3463, 1
    %vm3476 = vcmp.eq.s32.totalorder %v3464, 1
    %vm3477 = vcmp.eq.s32.totalorder %v3465, 1
    %vm3478 = vcmp.eq.s32.totalorder %v3466, 1
    %vm3479 = vcmp.eq.s32.totalorder %v3467, 1
    %vm3480 = vcmp.eq.s32.totalorder %v3468, 1
    %vm3481 = vcmp.eq.s32.totalorder %v3469, 1
    %vm3482 = vcmp.eq.s32.totalorder %v3470, 1
    %vm3483 = vcmp.eq.s32.totalorder %v3471, 1
    %vm3484 = vcmp.eq.s32.totalorder %v3472, 1
    %vm3485 = vcmp.eq.s32.totalorder %v3473, 1
    %vm3486 = vcmp.eq.s32.totalorder %v3474, 1
    %v3487 = vsel %vm3475, %v3439, 0.0
    %v3488 = vsel %vm3476, %v3450, 0.0
    %v3489 = vsel %vm3477, %v3449, 0.0
    %v3490 = vsel %vm3478, %v3448, 0.0
    %v3491 = vsel %vm3479, %v3447, 0.0
    %v3492 = vsel %vm3480, %v3446, 0.0
    %v3493 = vsel %vm3481, %v3445, 0.0
    %v3494 = vsel %vm3482, %v3444, 0.0
    %v3495 = vsel %vm3483, %v3443, 0.0
    %v3496 = vsel %vm3484, %v3442, 0.0
    %v3497 = vsel %vm3485, %v3441, 0.0
    %v3498 = vsel %vm3486, %v3440, 0.0
    %v3511 = vrot.slane %v3488, 6
    %v3512 = vrot.slane %v3489, 4
    %v3513 = vrot.slane %v3490, 2
    %v3514 = vrot.slane %v3492, 6
    %v3515 = vrot.slane %v3493, 4
    %v3516 = vrot.slane %v3494, 2
    %v3517 = vrot.slane %v3496, 6
    %v3518 = vrot.slane %v3497, 4
    %v3519 = vrot.slane %v3498, 2
    %v3520 = vsel %vm179, %v3487, %v3511
    %v3521 = vsel %vm181, %v3512, %v3513
    %v3522 = vsel %vm183, %v3520, %v3521
    %v3523 = vsel %vm179, %v3491, %v3514
    %v3524 = vsel %vm181, %v3515, %v3516
    %v3525 = vsel %vm183, %v3523, %v3524
    %v3526 = vsel %vm179, %v3495, %v3517
    %v3527 = vsel %vm181, %v3518, %v3519
    %v3528 = vsel %vm183, %v3526, %v3527
    %v3532 = vadd.f32 %v3384, %v3522
    %v3533 = vadd.f32 %v3385, %v3525
    %v3534 = vadd.f32 %v3386, %v3528
    %vm3535 = vcmp.lt.s32.totalorder %v31, 16
    %vm3536 = vcmp.lt.s32.totalorder %v32, 16
    %vm3537 = vcmp.lt.s32.totalorder %v33, 16
    %vm3538 = vcmp.lt.s32.totalorder %v34, 16
    %vm3539 = vcmp.lt.s32.totalorder %v35, 16
    %vm3540 = vcmp.lt.s32.totalorder %v36, 16
    %vm3541 = vcmp.lt.s32.totalorder %v37, 16
    %vm3542 = vcmp.lt.s32.totalorder %v38, 16
    %vm3543 = vcmp.lt.s32.totalorder %v39, 16
    %vm3544 = vcmp.lt.s32.totalorder %v40, 16
    %vm3545 = vcmp.lt.s32.totalorder %v41, 16
    %v3546 = vsel %vm249, 1, 0
    %v3547 = vsel %vm3535, 1, 0
    %v3548 = vsel %vm3536, 1, 0
    %v3549 = vsel %vm3537, 1, 0
    %v3550 = vsel %vm3538, 1, 0
    %v3551 = vsel %vm3539, 1, 0
    %v3552 = vsel %vm3540, 1, 0
    %v3553 = vsel %vm3541, 1, 0
    %v3554 = vsel %vm3542, 1, 0
    %v3555 = vsel %vm3543, 1, 0
    %v3556 = vsel %vm3544, 1, 0
    %v3557 = vsel %vm3545, 1, 0
    %vm3558 = vcmp.eq.s32.totalorder %v3546, 1
    %vm3559 = vcmp.eq.s32.totalorder %v3547, 1
    %vm3560 = vcmp.eq.s32.totalorder %v3548, 1
    %vm3561 = vcmp.eq.s32.totalorder %v3549, 1
    %vm3562 = vcmp.eq.s32.totalorder %v3550, 1
    %vm3563 = vcmp.eq.s32.totalorder %v3551, 1
    %vm3564 = vcmp.eq.s32.totalorder %v3552, 1
    %vm3565 = vcmp.eq.s32.totalorder %v3553, 1
    %vm3566 = vcmp.eq.s32.totalorder %v3554, 1
    %vm3567 = vcmp.eq.s32.totalorder %v3555, 1
    %vm3568 = vcmp.eq.s32.totalorder %v3556, 1
    %vm3569 = vcmp.eq.s32.totalorder %v3557, 1
    %3570 = vst [vmem:[#allocation1] ss:$4 sm:$0xff] %v26
    %s3571 = scalar_lea.vmem [#allocation1], 32
    %3572 = vst [vmem:[%s3571] ss:$4 sm:$0xff] %v27
    %v3573 = vld.sshfl [vmem:[#allocation1] sm:$0xff pattern:$0x73625140]
    %v3574 = vld.sshfl [vmem:[#allocation1 + $0x8] sm:$0xff pattern:$0x73625140]
    %v3575 = vld.sshfl [vmem:[#allocation1 + $0x10] sm:$0xff pattern:$0x73625140]
    %v3576 = vld.sshfl [vmem:[#allocation1 + $0x18] sm:$0xff pattern:$0x73625140]
    %v3577 = vld.sshfl [vmem:[#allocation1 + $0x20] sm:$0xff pattern:$0x73625140]
    %v3578 = vld.sshfl [vmem:[#allocation1 + $0x28] sm:$0xff pattern:$0x73625140]
    %v3579 = vld.sshfl [vmem:[#allocation1 + $0x30] sm:$0xff pattern:$0x73625140]
    %v3580 = vld.sshfl [vmem:[#allocation1 + $0x38] sm:$0xff pattern:$0x73625140]
    %3581 = vst [vmem:[#allocation1] ss:$4 sm:$0xff] %v28
    %v3582 = vld.sshfl [vmem:[#allocation1] sm:$0xff pattern:$0x73625140]
    %v3583 = vld.sshfl [vmem:[#allocation1 + $0x8] sm:$0xff pattern:$0x73625140]
    %v3584 = vld.sshfl [vmem:[#allocation1 + $0x10] sm:$0xff pattern:$0x73625140]
    %v3585 = vld.sshfl [vmem:[#allocation1 + $0x18] sm:$0xff pattern:$0x73625140]
    %v3598 = vsel %vm3558, %v3573, %v261
    %v3599 = vsel %vm3559, %v3574, %v260
    %v3600 = vsel %vm3560, %v3575, %v259
    %v3601 = vsel %vm3561, %v3576, %v258
    %v3602 = vsel %vm3562, %v3577, %v257
    %v3603 = vsel %vm3563, %v3578, %v256
    %v3604 = vsel %vm3564, %v3579, %v255
    %v3605 = vsel %vm3565, %v3580, %v254
    %v3606 = vsel %vm3566, %v3582, %v253
    %v3607 = vsel %vm3567, %v3583, %v252
    %v3608 = vsel %vm3568, %v3584, %v251
    %v3609 = vsel %vm3569, %v3585, %v250
    %vm3610 = vcmp.ge.s32.totalorder %v30, 1520
    %vm3611 = vcmp.ge.s32.totalorder %v31, 1520
    %vm3612 = vcmp.ge.s32.totalorder %v32, 1520
    %vm3613 = vcmp.ge.s32.totalorder %v33, 1520
    %vm3614 = vcmp.ge.s32.totalorder %v34, 1520
    %vm3615 = vcmp.ge.s32.totalorder %v35, 1520
    %vm3616 = vcmp.ge.s32.totalorder %v36, 1520
    %vm3617 = vcmp.ge.s32.totalorder %v37, 1520
    %vm3618 = vcmp.ge.s32.totalorder %v38, 1520
    %vm3619 = vcmp.ge.s32.totalorder %v39, 1520
    %vm3620 = vcmp.ge.s32.totalorder %v40, 1520
    %vm3621 = vcmp.ge.s32.totalorder %v41, 1520
    %v3622 = vsel %vm3610, 1, 0
    %v3623 = vsel %vm3611, 1, 0
    %v3624 = vsel %vm3612, 1, 0
    %v3625 = vsel %vm3613, 1, 0
    %v3626 = vsel %vm3614, 1, 0
    %v3627 = vsel %vm3615, 1, 0
    %v3628 = vsel %vm3616, 1, 0
    %v3629 = vsel %vm3617, 1, 0
    %v3630 = vsel %vm3618, 1, 0
    %v3631 = vsel %vm3619, 1, 0
    %v3632 = vsel %vm3620, 1, 0
    %v3633 = vsel %vm3621, 1, 0
    %vm3634 = vcmp.eq.s32.totalorder %v3622, 1
    %vm3635 = vcmp.eq.s32.totalorder %v3623, 1
    %vm3636 = vcmp.eq.s32.totalorder %v3624, 1
    %vm3637 = vcmp.eq.s32.totalorder %v3625, 1
    %vm3638 = vcmp.eq.s32.totalorder %v3626, 1
    %vm3639 = vcmp.eq.s32.totalorder %v3627, 1
    %vm3640 = vcmp.eq.s32.totalorder %v3628, 1
    %vm3641 = vcmp.eq.s32.totalorder %v3629, 1
    %vm3642 = vcmp.eq.s32.totalorder %v3630, 1
    %vm3643 = vcmp.eq.s32.totalorder %v3631, 1
    %vm3644 = vcmp.eq.s32.totalorder %v3632, 1
    %vm3645 = vcmp.eq.s32.totalorder %v3633, 1
    %3646 = vst [vmem:[#allocation1] ss:$4 sm:$0xff] %v26
    %s3647 = scalar_lea.vmem [#allocation1], 32
    %3648 = vst [vmem:[%s3647] ss:$4 sm:$0xff] %v27
    %v3649 = vld.sshfl [vmem:[#allocation1] sm:$0xff pattern:$0x73625140]
    %v3650 = vld.sshfl [vmem:[#allocation1 + $0x8] sm:$0xff pattern:$0x73625140]
    %v3651 = vld.sshfl [vmem:[#allocation1 + $0x10] sm:$0xff pattern:$0x73625140]
    %v3652 = vld.sshfl [vmem:[#allocation1 + $0x18] sm:$0xff pattern:$0x73625140]
    %v3653 = vld.sshfl [vmem:[#allocation1 + $0x20] sm:$0xff pattern:$0x73625140]
    %v3654 = vld.sshfl [vmem:[#allocation1 + $0x28] sm:$0xff pattern:$0x73625140]
    %v3655 = vld.sshfl [vmem:[#allocation1 + $0x30] sm:$0xff pattern:$0x73625140]
    %v3656 = vld.sshfl [vmem:[#allocation1 + $0x38] sm:$0xff pattern:$0x73625140]
    %3657 = vst [vmem:[#allocation1] ss:$4 sm:$0xff] %v28
    %v3658 = vld.sshfl [vmem:[#allocation1] sm:$0xff pattern:$0x73625140]
    %v3659 = vld.sshfl [vmem:[#allocation1 + $0x8] sm:$0xff pattern:$0x73625140]
    %v3660 = vld.sshfl [vmem:[#allocation1 + $0x10] sm:$0xff pattern:$0x73625140]
    %v3661 = vld.sshfl [vmem:[#allocation1 + $0x18] sm:$0xff pattern:$0x73625140]
    %v3674 = vsel %vm3634, %v3649, %v108
    %v3675 = vsel %vm3635, %v3650, %v107
    %v3676 = vsel %vm3636, %v3651, %v106
    %v3677 = vsel %vm3637, %v3652, %v105
    %v3678 = vsel %vm3638, %v3653, %v104
    %v3679 = vsel %vm3639, %v3654, %v103
    %v3680 = vsel %vm3640, %v3655, %v102
    %v3681 = vsel %vm3641, %v3656, %v101
    %v3682 = vsel %vm3642, %v3658, %v100
    %v3683 = vsel %vm3643, %v3659, %v99
    %v3684 = vsel %vm3644, %v3660, %v98
    %v3685 = vsel %vm3645, %v3661, %v109
    %vm3686 = vcmp.lt.s32.totalorder %v31, 32
    %vm3687 = vcmp.lt.s32.totalorder %v32, 32
    %vm3688 = vcmp.lt.s32.totalorder %v33, 32
    %vm3689 = vcmp.lt.s32.totalorder %v34, 32
    %vm3690 = vcmp.lt.s32.totalorder %v35, 32
    %vm3691 = vcmp.lt.s32.totalorder %v36, 32
    %vm3692 = vcmp.lt.s32.totalorder %v37, 32
    %vm3693 = vcmp.lt.s32.totalorder %v38, 32
    %vm3694 = vcmp.lt.s32.totalorder %v39, 32
    %vm3695 = vcmp.lt.s32.totalorder %v40, 32
    %vm3696 = vcmp.lt.s32.totalorder %v41, 32
    %3697 = vrot.lane.b32.xlu0 %v3598, 32
    %v3698 = vpop.permute.xlu0 %3697
    %3699 = vrot.lane.b32.xlu0 %v3599, 32
    %v3700 = vpop.permute.xlu0 %3699
    %3701 = vrot.lane.b32.xlu0 %v3600, 32
    %v3702 = vpop.permute.xlu0 %3701
    %3703 = vrot.lane.b32.xlu0 %v3601, 32
    %v3704 = vpop.permute.xlu0 %3703
    %3705 = vrot.lane.b32.xlu0 %v3602, 32
    %v3706 = vpop.permute.xlu0 %3705
    %3707 = vrot.lane.b32.xlu0 %v3603, 32
    %v3708 = vpop.permute.xlu0 %3707
    %3709 = vrot.lane.b32.xlu0 %v3604, 32
    %v3710 = vpop.permute.xlu0 %3709
    %3711 = vrot.lane.b32.xlu0 %v3605, 32
    %v3712 = vpop.permute.xlu0 %3711
    %3713 = vrot.lane.b32.xlu0 %v3606, 32
    %v3714 = vpop.permute.xlu0 %3713
    %3715 = vrot.lane.b32.xlu0 %v3607, 32
    %v3716 = vpop.permute.xlu0 %3715
    %3717 = vrot.lane.b32.xlu0 %v3608, 32
    %v3718 = vpop.permute.xlu0 %3717
    %3719 = vrot.lane.b32.xlu0 %v3609, 32
    %v3720 = vpop.permute.xlu0 %3719
    %v3721 = vsel %vm547, %v3718, %v3720
    %v3722 = vsel %vm547, %v3716, %v3718
    %v3723 = vsel %vm547, %v3714, %v3716
    %v3724 = vsel %vm547, %v3712, %v3714
    %v3725 = vsel %vm547, %v3710, %v3712
    %v3726 = vsel %vm547, %v3708, %v3710
    %v3727 = vsel %vm547, %v3706, %v3708
    %v3728 = vsel %vm547, %v3704, %v3706
    %v3729 = vsel %vm547, %v3702, %v3704
    %v3730 = vsel %vm547, %v3700, %v3702
    %v3731 = vsel %vm547, %v3698, %v3700
    %v3732 = vsel %vm547, %v3720, %v3698
    %v3733 = vsel %vm547, 1, 0
    %v3734 = vsel %vm3686, 1, 0
    %v3735 = vsel %vm3687, 1, 0
    %v3736 = vsel %vm3688, 1, 0
    %v3737 = vsel %vm3689, 1, 0
    %v3738 = vsel %vm3690, 1, 0
    %v3739 = vsel %vm3691, 1, 0
    %v3740 = vsel %vm3692, 1, 0
    %v3741 = vsel %vm3693, 1, 0
    %v3742 = vsel %vm3694, 1, 0
    %v3743 = vsel %vm3695, 1, 0
    %v3744 = vsel %vm3696, 1, 0
    %vm3745 = vcmp.eq.s32.totalorder %v3733, 1
    %vm3746 = vcmp.eq.s32.totalorder %v3734, 1
    %vm3747 = vcmp.eq.s32.totalorder %v3735, 1
    %vm3748 = vcmp.eq.s32.totalorder %v3736, 1
    %vm3749 = vcmp.eq.s32.totalorder %v3737, 1
    %vm3750 = vcmp.eq.s32.totalorder %v3738, 1
    %vm3751 = vcmp.eq.s32.totalorder %v3739, 1
    %vm3752 = vcmp.eq.s32.totalorder %v3740, 1
    %vm3753 = vcmp.eq.s32.totalorder %v3741, 1
    %vm3754 = vcmp.eq.s32.totalorder %v3742, 1
    %vm3755 = vcmp.eq.s32.totalorder %v3743, 1
    %vm3756 = vcmp.eq.s32.totalorder %v3744, 1
    %v3757 = vsel %vm3745, %v3598, %v3732
    %v3758 = vsel %vm3746, %v3599, %v3731
    %v3759 = vsel %vm3747, %v3600, %v3730
    %v3760 = vsel %vm3748, %v3601, %v3729
    %v3761 = vsel %vm3749, %v3602, %v3728
    %v3762 = vsel %vm3750, %v3603, %v3727
    %v3763 = vsel %vm3751, %v3604, %v3726
    %v3764 = vsel %vm3752, %v3605, %v3725
    %v3765 = vsel %vm3753, %v3606, %v3724
    %v3766 = vsel %vm3754, %v3607, %v3723
    %v3767 = vsel %vm3755, %v3608, %v3722
    %v3768 = vsel %vm3756, %v3609, %v3721
    %vm3769 = vcmp.ge.s32.totalorder %v30, 1504
    %vm3770 = vcmp.ge.s32.totalorder %v31, 1504
    %vm3771 = vcmp.ge.s32.totalorder %v32, 1504
    %vm3772 = vcmp.ge.s32.totalorder %v33, 1504
    %vm3773 = vcmp.ge.s32.totalorder %v34, 1504
    %vm3774 = vcmp.ge.s32.totalorder %v35, 1504
    %vm3775 = vcmp.ge.s32.totalorder %v36, 1504
    %vm3776 = vcmp.ge.s32.totalorder %v37, 1504
    %vm3777 = vcmp.ge.s32.totalorder %v38, 1504
    %vm3778 = vcmp.ge.s32.totalorder %v39, 1504
    %vm3779 = vcmp.ge.s32.totalorder %v40, 1504
    %vm3780 = vcmp.ge.s32.totalorder %v41, 1504
    %3781 = vrot.lane.b32.xlu0 %v3674, 96
    %v3782 = vpop.permute.xlu0 %3781
    %3783 = vrot.lane.b32.xlu0 %v3675, 96
    %v3784 = vpop.permute.xlu0 %3783
    %3785 = vrot.lane.b32.xlu0 %v3676, 96
    %v3786 = vpop.permute.xlu0 %3785
    %3787 = vrot.lane.b32.xlu0 %v3677, 96
    %v3788 = vpop.permute.xlu0 %3787
    %3789 = vrot.lane.b32.xlu0 %v3678, 96
    %v3790 = vpop.permute.xlu0 %3789
    %3791 = vrot.lane.b32.xlu0 %v3679, 96
    %v3792 = vpop.permute.xlu0 %3791
    %3793 = vrot.lane.b32.xlu0 %v3680, 96
    %v3794 = vpop.permute.xlu0 %3793
    %3795 = vrot.lane.b32.xlu0 %v3681, 96
    %v3796 = vpop.permute.xlu0 %3795
    %3797 = vrot.lane.b32.xlu0 %v3682, 96
    %v3798 = vpop.permute.xlu0 %3797
    %3799 = vrot.lane.b32.xlu0 %v3683, 96
    %v3800 = vpop.permute.xlu0 %3799
    %3801 = vrot.lane.b32.xlu0 %v3684, 96
    %v3802 = vpop.permute.xlu0 %3801
    %3803 = vrot.lane.b32.xlu0 %v3685, 96
    %v3804 = vpop.permute.xlu0 %3803
    %v3805 = vsel %vm398, %v3802, %v3804
    %v3806 = vsel %vm398, %v3800, %v3802
    %v3807 = vsel %vm398, %v3798, %v3800
    %v3808 = vsel %vm398, %v3796, %v3798
    %v3809 = vsel %vm398, %v3794, %v3796
    %v3810 = vsel %vm398, %v3792, %v3794
    %v3811 = vsel %vm398, %v3790, %v3792
    %v3812 = vsel %vm398, %v3788, %v3790
    %v3813 = vsel %vm398, %v3786, %v3788
    %v3814 = vsel %vm398, %v3784, %v3786
    %v3815 = vsel %vm398, %v3782, %v3784
    %v3816 = vsel %vm398, %v3804, %v3782
    %v3817 = vsel %vm3769, 1, 0
    %v3818 = vsel %vm3770, 1, 0
    %v3819 = vsel %vm3771, 1, 0
    %v3820 = vsel %vm3772, 1, 0
    %v3821 = vsel %vm3773, 1, 0
    %v3822 = vsel %vm3774, 1, 0
    %v3823 = vsel %vm3775, 1, 0
    %v3824 = vsel %vm3776, 1, 0
    %v3825 = vsel %vm3777, 1, 0
    %v3826 = vsel %vm3778, 1, 0
    %v3827 = vsel %vm3779, 1, 0
    %v3828 = vsel %vm3780, 1, 0
    %vm3829 = vcmp.eq.s32.totalorder %v3817, 1
    %vm3830 = vcmp.eq.s32.totalorder %v3818, 1
    %vm3831 = vcmp.eq.s32.totalorder %v3819, 1
    %vm3832 = vcmp.eq.s32.totalorder %v3820, 1
    %vm3833 = vcmp.eq.s32.totalorder %v3821, 1
    %vm3834 = vcmp.eq.s32.totalorder %v3822, 1
    %vm3835 = vcmp.eq.s32.totalorder %v3823, 1
    %vm3836 = vcmp.eq.s32.totalorder %v3824, 1
    %vm3837 = vcmp.eq.s32.totalorder %v3825, 1
    %vm3838 = vcmp.eq.s32.totalorder %v3826, 1
    %vm3839 = vcmp.eq.s32.totalorder %v3827, 1
    %vm3840 = vcmp.eq.s32.totalorder %v3828, 1
    %v3841 = vsel %vm3829, %v3674, %v3815
    %v3842 = vsel %vm3830, %v3675, %v3814
    %v3843 = vsel %vm3831, %v3676, %v3813
    %v3844 = vsel %vm3832, %v3677, %v3812
    %v3845 = vsel %vm3833, %v3678, %v3811
    %v3846 = vsel %vm3834, %v3679, %v3810
    %v3847 = vsel %vm3835, %v3680, %v3809
    %v3848 = vsel %vm3836, %v3681, %v3808
    %v3849 = vsel %vm3837, %v3682, %v3807
    %v3850 = vsel %vm3838, %v3683, %v3806
    %v3851 = vsel %vm3839, %v3684, %v3805
    %v3852 = vsel %vm3840, %v3685, %v3816
    %vm3853 = vcmp.lt.s32.totalorder %v31, 64
    %vm3854 = vcmp.lt.s32.totalorder %v32, 64
    %vm3855 = vcmp.lt.s32.totalorder %v33, 64
    %vm3856 = vcmp.lt.s32.totalorder %v34, 64
    %vm3857 = vcmp.lt.s32.totalorder %v35, 64
    %vm3858 = vcmp.lt.s32.totalorder %v36, 64
    %vm3859 = vcmp.lt.s32.totalorder %v37, 64
    %vm3860 = vcmp.lt.s32.totalorder %v38, 64
    %vm3861 = vcmp.lt.s32.totalorder %v39, 64
    %vm3862 = vcmp.lt.s32.totalorder %v40, 64
    %vm3863 = vcmp.lt.s32.totalorder %v41, 64
    %3864 = vrot.lane.b32.xlu0 %v3757, 64
    %v3865 = vpop.permute.xlu0 %3864
    %3866 = vrot.lane.b32.xlu0 %v3758, 64
    %v3867 = vpop.permute.xlu0 %3866
    %3868 = vrot.lane.b32.xlu0 %v3759, 64
    %v3869 = vpop.permute.xlu0 %3868
    %3870 = vrot.lane.b32.xlu0 %v3760, 64
    %v3871 = vpop.permute.xlu0 %3870
    %3872 = vrot.lane.b32.xlu0 %v3761, 64
    %v3873 = vpop.permute.xlu0 %3872
    %3874 = vrot.lane.b32.xlu0 %v3762, 64
    %v3875 = vpop.permute.xlu0 %3874
    %3876 = vrot.lane.b32.xlu0 %v3763, 64
    %v3877 = vpop.permute.xlu0 %3876
    %3878 = vrot.lane.b32.xlu0 %v3764, 64
    %v3879 = vpop.permute.xlu0 %3878
    %3880 = vrot.lane.b32.xlu0 %v3765, 64
    %v3881 = vpop.permute.xlu0 %3880
    %3882 = vrot.lane.b32.xlu0 %v3766, 64
    %v3883 = vpop.permute.xlu0 %3882
    %3884 = vrot.lane.b32.xlu0 %v3767, 64
    %v3885 = vpop.permute.xlu0 %3884
    %3886 = vrot.lane.b32.xlu0 %v3768, 64
    %v3887 = vpop.permute.xlu0 %3886
    %v3888 = vsel %vm994, %v3885, %v3887
    %v3889 = vsel %vm994, %v3883, %v3885
    %v3890 = vsel %vm994, %v3881, %v3883
    %v3891 = vsel %vm994, %v3879, %v3881
    %v3892 = vsel %vm994, %v3877, %v3879
    %v3893 = vsel %vm994, %v3875, %v3877
    %v3894 = vsel %vm994, %v3873, %v3875
    %v3895 = vsel %vm994, %v3871, %v3873
    %v3896 = vsel %vm994, %v3869, %v3871
    %v3897 = vsel %vm994, %v3867, %v3869
    %v3898 = vsel %vm994, %v3865, %v3867
    %v3899 = vsel %vm994, %v3887, %v3865
    %v3900 = vsel %vm994, 1, 0
    %v3901 = vsel %vm3853, 1, 0
    %v3902 = vsel %vm3854, 1, 0
    %v3903 = vsel %vm3855, 1, 0
    %v3904 = vsel %vm3856, 1, 0
    %v3905 = vsel %vm3857, 1, 0
    %v3906 = vsel %vm3858, 1, 0
    %v3907 = vsel %vm3859, 1, 0
    %v3908 = vsel %vm3860, 1, 0
    %v3909 = vsel %vm3861, 1, 0
    %v3910 = vsel %vm3862, 1, 0
    %v3911 = vsel %vm3863, 1, 0
    %vm3912 = vcmp.eq.s32.totalorder %v3900, 1
    %vm3913 = vcmp.eq.s32.totalorder %v3901, 1
    %vm3914 = vcmp.eq.s32.totalorder %v3902, 1
    %vm3915 = vcmp.eq.s32.totalorder %v3903, 1
    %vm3916 = vcmp.eq.s32.totalorder %v3904, 1
    %vm3917 = vcmp.eq.s32.totalorder %v3905, 1
    %vm3918 = vcmp.eq.s32.totalorder %v3906, 1
    %vm3919 = vcmp.eq.s32.totalorder %v3907, 1
    %vm3920 = vcmp.eq.s32.totalorder %v3908, 1
    %vm3921 = vcmp.eq.s32.totalorder %v3909, 1
    %vm3922 = vcmp.eq.s32.totalorder %v3910, 1
    %vm3923 = vcmp.eq.s32.totalorder %v3911, 1
    %v3924 = vsel %vm3912, %v3757, %v3899
    %v3925 = vsel %vm3913, %v3758, %v3898
    %v3926 = vsel %vm3914, %v3759, %v3897
    %v3927 = vsel %vm3915, %v3760, %v3896
    %v3928 = vsel %vm3916, %v3761, %v3895
    %v3929 = vsel %vm3917, %v3762, %v3894
    %v3930 = vsel %vm3918, %v3763, %v3893
    %v3931 = vsel %vm3919, %v3764, %v3892
    %v3932 = vsel %vm3920, %v3765, %v3891
    %v3933 = vsel %vm3921, %v3766, %v3890
    %v3934 = vsel %vm3922, %v3767, %v3889
    %v3935 = vsel %vm3923, %v3768, %v3888
    %vm3936 = vcmp.ge.s32.totalorder %v30, 1472
    %vm3937 = vcmp.ge.s32.totalorder %v31, 1472
    %vm3938 = vcmp.ge.s32.totalorder %v32, 1472
    %vm3939 = vcmp.ge.s32.totalorder %v33, 1472
    %vm3940 = vcmp.ge.s32.totalorder %v34, 1472
    %vm3941 = vcmp.ge.s32.totalorder %v35, 1472
    %vm3942 = vcmp.ge.s32.totalorder %v36, 1472
    %vm3943 = vcmp.ge.s32.totalorder %v37, 1472
    %vm3944 = vcmp.ge.s32.totalorder %v38, 1472
    %vm3945 = vcmp.ge.s32.totalorder %v39, 1472
    %vm3946 = vcmp.ge.s32.totalorder %v40, 1472
    %vm3947 = vcmp.ge.s32.totalorder %v41, 1472
    %3948 = vrot.lane.b32.xlu0 %v3841, 64
    %v3949 = vpop.permute.xlu0 %3948
    %3950 = vrot.lane.b32.xlu0 %v3842, 64
    %v3951 = vpop.permute.xlu0 %3950
    %3952 = vrot.lane.b32.xlu0 %v3843, 64
    %v3953 = vpop.permute.xlu0 %3952
    %3954 = vrot.lane.b32.xlu0 %v3844, 64
    %v3955 = vpop.permute.xlu0 %3954
    %3956 = vrot.lane.b32.xlu0 %v3845, 64
    %v3957 = vpop.permute.xlu0 %3956
    %3958 = vrot.lane.b32.xlu0 %v3846, 64
    %v3959 = vpop.permute.xlu0 %3958
    %3960 = vrot.lane.b32.xlu0 %v3847, 64
    %v3961 = vpop.permute.xlu0 %3960
    %3962 = vrot.lane.b32.xlu0 %v3848, 64
    %v3963 = vpop.permute.xlu0 %3962
    %3964 = vrot.lane.b32.xlu0 %v3849, 64
    %v3965 = vpop.permute.xlu0 %3964
    %3966 = vrot.lane.b32.xlu0 %v3850, 64
    %v3967 = vpop.permute.xlu0 %3966
    %3968 = vrot.lane.b32.xlu0 %v3851, 64
    %v3969 = vpop.permute.xlu0 %3968
    %3970 = vrot.lane.b32.xlu0 %v3852, 64
    %v3971 = vpop.permute.xlu0 %3970
    %v3972 = vsel %vm994, %v3969, %v3971
    %v3973 = vsel %vm994, %v3967, %v3969
    %v3974 = vsel %vm994, %v3965, %v3967
    %v3975 = vsel %vm994, %v3963, %v3965
    %v3976 = vsel %vm994, %v3961, %v3963
    %v3977 = vsel %vm994, %v3959, %v3961
    %v3978 = vsel %vm994, %v3957, %v3959
    %v3979 = vsel %vm994, %v3955, %v3957
    %v3980 = vsel %vm994, %v3953, %v3955
    %v3981 = vsel %vm994, %v3951, %v3953
    %v3982 = vsel %vm994, %v3949, %v3951
    %v3983 = vsel %vm994, %v3971, %v3949
    %v3984 = vsel %vm3936, 1, 0
    %v3985 = vsel %vm3937, 1, 0
    %v3986 = vsel %vm3938, 1, 0
    %v3987 = vsel %vm3939, 1, 0
    %v3988 = vsel %vm3940, 1, 0
    %v3989 = vsel %vm3941, 1, 0
    %v3990 = vsel %vm3942, 1, 0
    %v3991 = vsel %vm3943, 1, 0
    %v3992 = vsel %vm3944, 1, 0
    %v3993 = vsel %vm3945, 1, 0
    %v3994 = vsel %vm3946, 1, 0
    %v3995 = vsel %vm3947, 1, 0
    %vm3996 = vcmp.eq.s32.totalorder %v3984, 1
    %vm3997 = vcmp.eq.s32.totalorder %v3985, 1
    %vm3998 = vcmp.eq.s32.totalorder %v3986, 1
    %vm3999 = vcmp.eq.s32.totalorder %v3987, 1
    %vm4000 = vcmp.eq.s32.totalorder %v3988, 1
    %vm4001 = vcmp.eq.s32.totalorder %v3989, 1
    %vm4002 = vcmp.eq.s32.totalorder %v3990, 1
    %vm4003 = vcmp.eq.s32.totalorder %v3991, 1
    %vm4004 = vcmp.eq.s32.totalorder %v3992, 1
    %vm4005 = vcmp.eq.s32.totalorder %v3993, 1
    %vm4006 = vcmp.eq.s32.totalorder %v3994, 1
    %vm4007 = vcmp.eq.s32.totalorder %v3995, 1
    %v4008 = vsel %vm3996, %v3841, %v3982
    %v4009 = vsel %vm3997, %v3842, %v3981
    %v4010 = vsel %vm3998, %v3843, %v3980
    %v4011 = vsel %vm3999, %v3844, %v3979
    %v4012 = vsel %vm4000, %v3845, %v3978
    %v4013 = vsel %vm4001, %v3846, %v3977
    %v4014 = vsel %vm4002, %v3847, %v3976
    %v4015 = vsel %vm4003, %v3848, %v3975
    %v4016 = vsel %vm4004, %v3849, %v3974
    %v4017 = vsel %vm4005, %v3850, %v3973
    %v4018 = vsel %vm4006, %v3851, %v3972
    %v4019 = vsel %vm4007, %v3852, %v3983
    %vm4020 = vcmp.lt.s32.totalorder %v30, 128
    %vm4021 = vcmp.lt.s32.totalorder %v31, 128
    %vm4022 = vcmp.lt.s32.totalorder %v32, 128
    %vm4023 = vcmp.lt.s32.totalorder %v33, 128
    %vm4024 = vcmp.lt.s32.totalorder %v34, 128
    %vm4025 = vcmp.lt.s32.totalorder %v35, 128
    %vm4026 = vcmp.lt.s32.totalorder %v36, 128
    %vm4027 = vcmp.lt.s32.totalorder %v37, 128
    %vm4028 = vcmp.lt.s32.totalorder %v38, 128
    %vm4029 = vcmp.lt.s32.totalorder %v39, 128
    %vm4030 = vcmp.lt.s32.totalorder %v40, 128
    %vm4031 = vcmp.lt.s32.totalorder %v41, 128
    %v4032 = vsel %vm4020, 1, 0
    %v4033 = vsel %vm4021, 1, 0
    %v4034 = vsel %vm4022, 1, 0
    %v4035 = vsel %vm4023, 1, 0
    %v4036 = vsel %vm4024, 1, 0
    %v4037 = vsel %vm4025, 1, 0
    %v4038 = vsel %vm4026, 1, 0
    %v4039 = vsel %vm4027, 1, 0
    %v4040 = vsel %vm4028, 1, 0
    %v4041 = vsel %vm4029, 1, 0
    %v4042 = vsel %vm4030, 1, 0
    %v4043 = vsel %vm4031, 1, 0
    %vm4044 = vcmp.eq.s32.totalorder %v4032, 1
    %vm4045 = vcmp.eq.s32.totalorder %v4033, 1
    %vm4046 = vcmp.eq.s32.totalorder %v4034, 1
    %vm4047 = vcmp.eq.s32.totalorder %v4035, 1
    %vm4048 = vcmp.eq.s32.totalorder %v4036, 1
    %vm4049 = vcmp.eq.s32.totalorder %v4037, 1
    %vm4050 = vcmp.eq.s32.totalorder %v4038, 1
    %vm4051 = vcmp.eq.s32.totalorder %v4039, 1
    %vm4052 = vcmp.eq.s32.totalorder %v4040, 1
    %vm4053 = vcmp.eq.s32.totalorder %v4041, 1
    %vm4054 = vcmp.eq.s32.totalorder %v4042, 1
    %vm4055 = vcmp.eq.s32.totalorder %v4043, 1
    %v4056 = vsel %vm4044, %v3924, %v3935
    %v4057 = vsel %vm4045, %v3925, %v3924
    %v4058 = vsel %vm4046, %v3926, %v3925
    %v4059 = vsel %vm4047, %v3927, %v3926
    %v4060 = vsel %vm4048, %v3928, %v3927
    %v4061 = vsel %vm4049, %v3929, %v3928
    %v4062 = vsel %vm4050, %v3930, %v3929
    %v4063 = vsel %vm4051, %v3931, %v3930
    %v4064 = vsel %vm4052, %v3932, %v3931
    %v4065 = vsel %vm4053, %v3933, %v3932
    %v4066 = vsel %vm4054, %v3934, %v3933
    %v4067 = vsel %vm4055, %v3935, %v3934
    %vm4068 = vcmp.ge.s32.totalorder %v30, 1408
    %vm4069 = vcmp.ge.s32.totalorder %v31, 1408
    %vm4070 = vcmp.ge.s32.totalorder %v32, 1408
    %vm4071 = vcmp.ge.s32.totalorder %v33, 1408
    %vm4072 = vcmp.ge.s32.totalorder %v34, 1408
    %vm4073 = vcmp.ge.s32.totalorder %v35, 1408
    %vm4074 = vcmp.ge.s32.totalorder %v36, 1408
    %vm4075 = vcmp.ge.s32.totalorder %v37, 1408
    %vm4076 = vcmp.ge.s32.totalorder %v38, 1408
    %vm4077 = vcmp.ge.s32.totalorder %v39, 1408
    %vm4078 = vcmp.ge.s32.totalorder %v40, 1408
    %vm4079 = vcmp.ge.s32.totalorder %v41, 1408
    %v4080 = vsel %vm4068, 1, 0
    %v4081 = vsel %vm4069, 1, 0
    %v4082 = vsel %vm4070, 1, 0
    %v4083 = vsel %vm4071, 1, 0
    %v4084 = vsel %vm4072, 1, 0
    %v4085 = vsel %vm4073, 1, 0
    %v4086 = vsel %vm4074, 1, 0
    %v4087 = vsel %vm4075, 1, 0
    %v4088 = vsel %vm4076, 1, 0
    %v4089 = vsel %vm4077, 1, 0
    %v4090 = vsel %vm4078, 1, 0
    %v4091 = vsel %vm4079, 1, 0
    %vm4092 = vcmp.eq.s32.totalorder %v4080, 1
    %vm4093 = vcmp.eq.s32.totalorder %v4081, 1
    %vm4094 = vcmp.eq.s32.totalorder %v4082, 1
    %vm4095 = vcmp.eq.s32.totalorder %v4083, 1
    %vm4096 = vcmp.eq.s32.totalorder %v4084, 1
    %vm4097 = vcmp.eq.s32.totalorder %v4085, 1
    %vm4098 = vcmp.eq.s32.totalorder %v4086, 1
    %vm4099 = vcmp.eq.s32.totalorder %v4087, 1
    %vm4100 = vcmp.eq.s32.totalorder %v4088, 1
    %vm4101 = vcmp.eq.s32.totalorder %v4089, 1
    %vm4102 = vcmp.eq.s32.totalorder %v4090, 1
    %vm4103 = vcmp.eq.s32.totalorder %v4091, 1
    %v4104 = vsel %vm4092, %v4008, %v4009
    %v4105 = vsel %vm4093, %v4009, %v4010
    %v4106 = vsel %vm4094, %v4010, %v4011
    %v4107 = vsel %vm4095, %v4011, %v4012
    %v4108 = vsel %vm4096, %v4012, %v4013
    %v4109 = vsel %vm4097, %v4013, %v4014
    %v4110 = vsel %vm4098, %v4014, %v4015
    %v4111 = vsel %vm4099, %v4015, %v4016
    %v4112 = vsel %vm4100, %v4016, %v4017
    %v4113 = vsel %vm4101, %v4017, %v4018
    %v4114 = vsel %vm4102, %v4018, %v4019
    %v4115 = vsel %vm4103, %v4019, %v4008
    %v4116 = vsel %vm249, 1.0, 0.0
    %v4117 = vsel %vm3535, 1.0, 0.0
    %v4118 = vsel %vm3536, 1.0, 0.0
    %v4119 = vsel %vm3537, 1.0, 0.0
    %v4120 = vsel %vm3538, 1.0, 0.0
    %v4121 = vsel %vm3539, 1.0, 0.0
    %v4122 = vsel %vm3540, 1.0, 0.0
    %v4123 = vsel %vm3541, 1.0, 0.0
    %v4124 = vsel %vm3542, 1.0, 0.0
    %v4125 = vsel %vm3543, 1.0, 0.0
    %v4126 = vsel %vm3544, 1.0, 0.0
    %v4127 = vsel %vm3545, 1.0, 0.0
    %v4128 = vadd.f32 %v4116, 0.0
    %v4129 = vadd.f32 %v4117, 0.0
    %v4130 = vadd.f32 %v4118, 0.0
    %v4131 = vadd.f32 %v4119, 0.0
    %v4132 = vadd.f32 %v4120, 0.0
    %v4133 = vadd.f32 %v4121, 0.0
    %v4134 = vadd.f32 %v4122, 0.0
    %v4135 = vadd.f32 %v4123, 0.0
    %v4136 = vadd.f32 %v4124, 0.0
    %v4137 = vadd.f32 %v4125, 0.0
    %v4138 = vadd.f32 %v4126, 0.0
    %v4139 = vadd.f32 %v4127, 0.0
    %v4140 = vsel %vm3610, 1.0, 0.0
    %v4141 = vsel %vm3611, 1.0, 0.0
    %v4142 = vsel %vm3612, 1.0, 0.0
    %v4143 = vsel %vm3613, 1.0, 0.0
    %v4144 = vsel %vm3614, 1.0, 0.0
    %v4145 = vsel %vm3615, 1.0, 0.0
    %v4146 = vsel %vm3616, 1.0, 0.0
    %v4147 = vsel %vm3617, 1.0, 0.0
    %v4148 = vsel %vm3618, 1.0, 0.0
    %v4149 = vsel %vm3619, 1.0, 0.0
    %v4150 = vsel %vm3620, 1.0, 0.0
    %v4151 = vsel %vm3621, 1.0, 0.0
    %v4152 = vadd.f32 %v4140, 0.0
    %v4153 = vadd.f32 %v4141, 0.0
    %v4154 = vadd.f32 %v4142, 0.0
    %v4155 = vadd.f32 %v4143, 0.0
    %v4156 = vadd.f32 %v4144, 0.0
    %v4157 = vadd.f32 %v4145, 0.0
    %v4158 = vadd.f32 %v4146, 0.0
    %v4159 = vadd.f32 %v4147, 0.0
    %v4160 = vadd.f32 %v4148, 0.0
    %v4161 = vadd.f32 %v4149, 0.0
    %v4162 = vadd.f32 %v4150, 0.0
    %v4163 = vadd.f32 %v4151, 0.0
    %v4164 = vsel %vm547, 1.0, 0.0
    %v4165 = vsel %vm3686, 1.0, 0.0
    %v4166 = vsel %vm3687, 1.0, 0.0
    %v4167 = vsel %vm3688, 1.0, 0.0
    %v4168 = vsel %vm3689, 1.0, 0.0
    %v4169 = vsel %vm3690, 1.0, 0.0
    %v4170 = vsel %vm3691, 1.0, 0.0
    %v4171 = vsel %vm3692, 1.0, 0.0
    %v4172 = vsel %vm3693, 1.0, 0.0
    %v4173 = vsel %vm3694, 1.0, 0.0
    %v4174 = vsel %vm3695, 1.0, 0.0
    %v4175 = vsel %vm3696, 1.0, 0.0
    %v4176 = vadd.f32 %v4128, %v4164
    %v4177 = vadd.f32 %v4129, %v4165
    %v4178 = vadd.f32 %v4130, %v4166
    %v4179 = vadd.f32 %v4131, %v4167
    %v4180 = vadd.f32 %v4132, %v4168
    %v4181 = vadd.f32 %v4133, %v4169
    %v4182 = vadd.f32 %v4134, %v4170
    %v4183 = vadd.f32 %v4135, %v4171
    %v4184 = vadd.f32 %v4136, %v4172
    %v4185 = vadd.f32 %v4137, %v4173
    %v4186 = vadd.f32 %v4138, %v4174
    %v4187 = vadd.f32 %v4139, %v4175
    %v4188 = vsel %vm3769, 1.0, 0.0
    %v4189 = vsel %vm3770, 1.0, 0.0
    %v4190 = vsel %vm3771, 1.0, 0.0
    %v4191 = vsel %vm3772, 1.0, 0.0
    %v4192 = vsel %vm3773, 1.0, 0.0
    %v4193 = vsel %vm3774, 1.0, 0.0
    %v4194 = vsel %vm3775, 1.0, 0.0
    %v4195 = vsel %vm3776, 1.0, 0.0
    %v4196 = vsel %vm3777, 1.0, 0.0
    %v4197 = vsel %vm3778, 1.0, 0.0
    %v4198 = vsel %vm3779, 1.0, 0.0
    %v4199 = vsel %vm3780, 1.0, 0.0
    %v4200 = vadd.f32 %v4152, %v4188
    %v4201 = vadd.f32 %v4153, %v4189
    %v4202 = vadd.f32 %v4154, %v4190
    %v4203 = vadd.f32 %v4155, %v4191
    %v4204 = vadd.f32 %v4156, %v4192
    %v4205 = vadd.f32 %v4157, %v4193
    %v4206 = vadd.f32 %v4158, %v4194
    %v4207 = vadd.f32 %v4159, %v4195
    %v4208 = vadd.f32 %v4160, %v4196
    %v4209 = vadd.f32 %v4161, %v4197
    %v4210 = vadd.f32 %v4162, %v4198
    %v4211 = vadd.f32 %v4163, %v4199
    %vm4212 = vcmp.lt.s32.totalorder %v31, 48
    %vm4213 = vcmp.lt.s32.totalorder %v32, 48
    %vm4214 = vcmp.lt.s32.totalorder %v33, 48
    %vm4215 = vcmp.lt.s32.totalorder %v34, 48
    %vm4216 = vcmp.lt.s32.totalorder %v35, 48
    %vm4217 = vcmp.lt.s32.totalorder %v36, 48
    %vm4218 = vcmp.lt.s32.totalorder %v37, 48
    %vm4219 = vcmp.lt.s32.totalorder %v38, 48
    %vm4220 = vcmp.lt.s32.totalorder %v39, 48
    %vm4221 = vcmp.lt.s32.totalorder %v40, 48
    %vm4222 = vcmp.lt.s32.totalorder %v41, 48
    %v4223 = vsel %vm845, 1.0, 0.0
    %v4224 = vsel %vm4212, 1.0, 0.0
    %v4225 = vsel %vm4213, 1.0, 0.0
    %v4226 = vsel %vm4214, 1.0, 0.0
    %v4227 = vsel %vm4215, 1.0, 0.0
    %v4228 = vsel %vm4216, 1.0, 0.0
    %v4229 = vsel %vm4217, 1.0, 0.0
    %v4230 = vsel %vm4218, 1.0, 0.0
    %v4231 = vsel %vm4219, 1.0, 0.0
    %v4232 = vsel %vm4220, 1.0, 0.0
    %v4233 = vsel %vm4221, 1.0, 0.0
    %v4234 = vsel %vm4222, 1.0, 0.0
    %v4235 = vadd.f32 %v4176, %v4223
    %v4236 = vadd.f32 %v4177, %v4224
    %v4237 = vadd.f32 %v4178, %v4225
    %v4238 = vadd.f32 %v4179, %v4226
    %v4239 = vadd.f32 %v4180, %v4227
    %v4240 = vadd.f32 %v4181, %v4228
    %v4241 = vadd.f32 %v4182, %v4229
    %v4242 = vadd.f32 %v4183, %v4230
    %v4243 = vadd.f32 %v4184, %v4231
    %v4244 = vadd.f32 %v4185, %v4232
    %v4245 = vadd.f32 %v4186, %v4233
    %v4246 = vadd.f32 %v4187, %v4234
    %vm4247 = vcmp.ge.s32.totalorder %v30, 1488
    %vm4248 = vcmp.ge.s32.totalorder %v31, 1488
    %vm4249 = vcmp.ge.s32.totalorder %v32, 1488
    %vm4250 = vcmp.ge.s32.totalorder %v33, 1488
    %vm4251 = vcmp.ge.s32.totalorder %v34, 1488
    %vm4252 = vcmp.ge.s32.totalorder %v35, 1488
    %vm4253 = vcmp.ge.s32.totalorder %v36, 1488
    %vm4254 = vcmp.ge.s32.totalorder %v37, 1488
    %vm4255 = vcmp.ge.s32.totalorder %v38, 1488
    %vm4256 = vcmp.ge.s32.totalorder %v39, 1488
    %vm4257 = vcmp.ge.s32.totalorder %v40, 1488
    %vm4258 = vcmp.ge.s32.totalorder %v41, 1488
    %v4259 = vsel %vm4247, 1.0, 0.0
    %v4260 = vsel %vm4248, 1.0, 0.0
    %v4261 = vsel %vm4249, 1.0, 0.0
    %v4262 = vsel %vm4250, 1.0, 0.0
    %v4263 = vsel %vm4251, 1.0, 0.0
    %v4264 = vsel %vm4252, 1.0, 0.0
    %v4265 = vsel %vm4253, 1.0, 0.0
    %v4266 = vsel %vm4254, 1.0, 0.0
    %v4267 = vsel %vm4255, 1.0, 0.0
    %v4268 = vsel %vm4256, 1.0, 0.0
    %v4269 = vsel %vm4257, 1.0, 0.0
    %v4270 = vsel %vm4258, 1.0, 0.0
    %v4271 = vadd.f32 %v4200, %v4259
    %v4272 = vadd.f32 %v4201, %v4260
    %v4273 = vadd.f32 %v4202, %v4261
    %v4274 = vadd.f32 %v4203, %v4262
    %v4275 = vadd.f32 %v4204, %v4263
    %v4276 = vadd.f32 %v4205, %v4264
    %v4277 = vadd.f32 %v4206, %v4265
    %v4278 = vadd.f32 %v4207, %v4266
    %v4279 = vadd.f32 %v4208, %v4267
    %v4280 = vadd.f32 %v4209, %v4268
    %v4281 = vadd.f32 %v4210, %v4269
    %v4282 = vadd.f32 %v4211, %v4270
    %v4283 = vsel %vm994, 1.0, 0.0
    %v4284 = vsel %vm3853, 1.0, 0.0
    %v4285 = vsel %vm3854, 1.0, 0.0
    %v4286 = vsel %vm3855, 1.0, 0.0
    %v4287 = vsel %vm3856, 1.0, 0.0
    %v4288 = vsel %vm3857, 1.0, 0.0
    %v4289 = vsel %vm3858, 1.0, 0.0
    %v4290 = vsel %vm3859, 1.0, 0.0
    %v4291 = vsel %vm3860, 1.0, 0.0
    %v4292 = vsel %vm3861, 1.0, 0.0
    %v4293 = vsel %vm3862, 1.0, 0.0
    %v4294 = vsel %vm3863, 1.0, 0.0
    %v4295 = vadd.f32 %v4235, %v4283
    %v4296 = vadd.f32 %v4236, %v4284
    %v4297 = vadd.f32 %v4237, %v4285
    %v4298 = vadd.f32 %v4238, %v4286
    %v4299 = vadd.f32 %v4239, %v4287
    %v4300 = vadd.f32 %v4240, %v4288
    %v4301 = vadd.f32 %v4241, %v4289
    %v4302 = vadd.f32 %v4242, %v4290
    %v4303 = vadd.f32 %v4243, %v4291
    %v4304 = vadd.f32 %v4244, %v4292
    %v4305 = vadd.f32 %v4245, %v4293
    %v4306 = vadd.f32 %v4246, %v4294
    %v4307 = vsel %vm3936, 1.0, 0.0
    %v4308 = vsel %vm3937, 1.0, 0.0
    %v4309 = vsel %vm3938, 1.0, 0.0
    %v4310 = vsel %vm3939, 1.0, 0.0
    %v4311 = vsel %vm3940, 1.0, 0.0
    %v4312 = vsel %vm3941, 1.0, 0.0
    %v4313 = vsel %vm3942, 1.0, 0.0
    %v4314 = vsel %vm3943, 1.0, 0.0
    %v4315 = vsel %vm3944, 1.0, 0.0
    %v4316 = vsel %vm3945, 1.0, 0.0
    %v4317 = vsel %vm3946, 1.0, 0.0
    %v4318 = vsel %vm3947, 1.0, 0.0
    %v4319 = vadd.f32 %v4271, %v4307
    %v4320 = vadd.f32 %v4272, %v4308
    %v4321 = vadd.f32 %v4273, %v4309
    %v4322 = vadd.f32 %v4274, %v4310
    %v4323 = vadd.f32 %v4275, %v4311
    %v4324 = vadd.f32 %v4276, %v4312
    %v4325 = vadd.f32 %v4277, %v4313
    %v4326 = vadd.f32 %v4278, %v4314
    %v4327 = vadd.f32 %v4279, %v4315
    %v4328 = vadd.f32 %v4280, %v4316
    %v4329 = vadd.f32 %v4281, %v4317
    %v4330 = vadd.f32 %v4282, %v4318
    %vm4331 = vcmp.lt.s32.totalorder %v31, 80
    %vm4332 = vcmp.lt.s32.totalorder %v32, 80
    %vm4333 = vcmp.lt.s32.totalorder %v33, 80
    %vm4334 = vcmp.lt.s32.totalorder %v34, 80
    %vm4335 = vcmp.lt.s32.totalorder %v35, 80
    %vm4336 = vcmp.lt.s32.totalorder %v36, 80
    %vm4337 = vcmp.lt.s32.totalorder %v37, 80
    %vm4338 = vcmp.lt.s32.totalorder %v38, 80
    %vm4339 = vcmp.lt.s32.totalorder %v39, 80
    %vm4340 = vcmp.lt.s32.totalorder %v40, 80
    %vm4341 = vcmp.lt.s32.totalorder %v41, 80
    %v4342 = vsel %vm696, 1.0, 0.0
    %v4343 = vsel %vm4331, 1.0, 0.0
    %v4344 = vsel %vm4332, 1.0, 0.0
    %v4345 = vsel %vm4333, 1.0, 0.0
    %v4346 = vsel %vm4334, 1.0, 0.0
    %v4347 = vsel %vm4335, 1.0, 0.0
    %v4348 = vsel %vm4336, 1.0, 0.0
    %v4349 = vsel %vm4337, 1.0, 0.0
    %v4350 = vsel %vm4338, 1.0, 0.0
    %v4351 = vsel %vm4339, 1.0, 0.0
    %v4352 = vsel %vm4340, 1.0, 0.0
    %v4353 = vsel %vm4341, 1.0, 0.0
    %v4354 = vadd.f32 %v4295, %v4342
    %v4355 = vadd.f32 %v4296, %v4343
    %v4356 = vadd.f32 %v4297, %v4344
    %v4357 = vadd.f32 %v4298, %v4345
    %v4358 = vadd.f32 %v4299, %v4346
    %v4359 = vadd.f32 %v4300, %v4347
    %v4360 = vadd.f32 %v4301, %v4348
    %v4361 = vadd.f32 %v4302, %v4349
    %v4362 = vadd.f32 %v4303, %v4350
    %v4363 = vadd.f32 %v4304, %v4351
    %v4364 = vadd.f32 %v4305, %v4352
    %v4365 = vadd.f32 %v4306, %v4353
    %vm4366 = vcmp.ge.s32.totalorder %v30, 1456
    %vm4367 = vcmp.ge.s32.totalorder %v31, 1456
    %vm4368 = vcmp.ge.s32.totalorder %v32, 1456
    %vm4369 = vcmp.ge.s32.totalorder %v33, 1456
    %vm4370 = vcmp.ge.s32.totalorder %v34, 1456
    %vm4371 = vcmp.ge.s32.totalorder %v35, 1456
    %vm4372 = vcmp.ge.s32.totalorder %v36, 1456
    %vm4373 = vcmp.ge.s32.totalorder %v37, 1456
    %vm4374 = vcmp.ge.s32.totalorder %v38, 1456
    %vm4375 = vcmp.ge.s32.totalorder %v39, 1456
    %vm4376 = vcmp.ge.s32.totalorder %v40, 1456
    %vm4377 = vcmp.ge.s32.totalorder %v41, 1456
    %v4378 = vsel %vm4366, 1.0, 0.0
    %v4379 = vsel %vm4367, 1.0, 0.0
    %v4380 = vsel %vm4368, 1.0, 0.0
    %v4381 = vsel %vm4369, 1.0, 0.0
    %v4382 = vsel %vm4370, 1.0, 0.0
    %v4383 = vsel %vm4371, 1.0, 0.0
    %v4384 = vsel %vm4372, 1.0, 0.0
    %v4385 = vsel %vm4373, 1.0, 0.0
    %v4386 = vsel %vm4374, 1.0, 0.0
    %v4387 = vsel %vm4375, 1.0, 0.0
    %v4388 = vsel %vm4376, 1.0, 0.0
    %v4389 = vsel %vm4377, 1.0, 0.0
    %v4390 = vadd.f32 %v4319, %v4378
    %v4391 = vadd.f32 %v4320, %v4379
    %v4392 = vadd.f32 %v4321, %v4380
    %v4393 = vadd.f32 %v4322, %v4381
    %v4394 = vadd.f32 %v4323, %v4382
    %v4395 = vadd.f32 %v4324, %v4383
    %v4396 = vadd.f32 %v4325, %v4384
    %v4397 = vadd.f32 %v4326, %v4385
    %v4398 = vadd.f32 %v4327, %v4386
    %v4399 = vadd.f32 %v4328, %v4387
    %v4400 = vadd.f32 %v4329, %v4388
    %v4401 = vadd.f32 %v4330, %v4389
    %vm4402 = vcmp.lt.s32.totalorder %v31, 96
    %vm4403 = vcmp.lt.s32.totalorder %v32, 96
    %vm4404 = vcmp.lt.s32.totalorder %v33, 96
    %vm4405 = vcmp.lt.s32.totalorder %v34, 96
    %vm4406 = vcmp.lt.s32.totalorder %v35, 96
    %vm4407 = vcmp.lt.s32.totalorder %v36, 96
    %vm4408 = vcmp.lt.s32.totalorder %v37, 96
    %vm4409 = vcmp.lt.s32.totalorder %v38, 96
    %vm4410 = vcmp.lt.s32.totalorder %v39, 96
    %vm4411 = vcmp.lt.s32.totalorder %v40, 96
    %vm4412 = vcmp.lt.s32.totalorder %v41, 96
    %v4413 = vsel %vm398, 1.0, 0.0
    %v4414 = vsel %vm4402, 1.0, 0.0
    %v4415 = vsel %vm4403, 1.0, 0.0
    %v4416 = vsel %vm4404, 1.0, 0.0
    %v4417 = vsel %vm4405, 1.0, 0.0
    %v4418 = vsel %vm4406, 1.0, 0.0
    %v4419 = vsel %vm4407, 1.0, 0.0
    %v4420 = vsel %vm4408, 1.0, 0.0
    %v4421 = vsel %vm4409, 1.0, 0.0
    %v4422 = vsel %vm4410, 1.0, 0.0
    %v4423 = vsel %vm4411, 1.0, 0.0
    %v4424 = vsel %vm4412, 1.0, 0.0
    %v4425 = vadd.f32 %v4354, %v4413
    %v4426 = vadd.f32 %v4355, %v4414
    %v4427 = vadd.f32 %v4356, %v4415
    %v4428 = vadd.f32 %v4357, %v4416
    %v4429 = vadd.f32 %v4358, %v4417
    %v4430 = vadd.f32 %v4359, %v4418
    %v4431 = vadd.f32 %v4360, %v4419
    %v4432 = vadd.f32 %v4361, %v4420
    %v4433 = vadd.f32 %v4362, %v4421
    %v4434 = vadd.f32 %v4363, %v4422
    %v4435 = vadd.f32 %v4364, %v4423
    %v4436 = vadd.f32 %v4365, %v4424
    %vm4437 = vcmp.ge.s32.totalorder %v30, 1440
    %vm4438 = vcmp.ge.s32.totalorder %v31, 1440
    %vm4439 = vcmp.ge.s32.totalorder %v32, 1440
    %vm4440 = vcmp.ge.s32.totalorder %v33, 1440
    %vm4441 = vcmp.ge.s32.totalorder %v34, 1440
    %vm4442 = vcmp.ge.s32.totalorder %v35, 1440
    %vm4443 = vcmp.ge.s32.totalorder %v36, 1440
    %vm4444 = vcmp.ge.s32.totalorder %v37, 1440
    %vm4445 = vcmp.ge.s32.totalorder %v38, 1440
    %vm4446 = vcmp.ge.s32.totalorder %v39, 1440
    %vm4447 = vcmp.ge.s32.totalorder %v40, 1440
    %vm4448 = vcmp.ge.s32.totalorder %v41, 1440
    %v4449 = vsel %vm4437, 1.0, 0.0
    %v4450 = vsel %vm4438, 1.0, 0.0
    %v4451 = vsel %vm4439, 1.0, 0.0
    %v4452 = vsel %vm4440, 1.0, 0.0
    %v4453 = vsel %vm4441, 1.0, 0.0
    %v4454 = vsel %vm4442, 1.0, 0.0
    %v4455 = vsel %vm4443, 1.0, 0.0
    %v4456 = vsel %vm4444, 1.0, 0.0
    %v4457 = vsel %vm4445, 1.0, 0.0
    %v4458 = vsel %vm4446, 1.0, 0.0
    %v4459 = vsel %vm4447, 1.0, 0.0
    %v4460 = vsel %vm4448, 1.0, 0.0
    %v4461 = vadd.f32 %v4390, %v4449
    %v4462 = vadd.f32 %v4391, %v4450
    %v4463 = vadd.f32 %v4392, %v4451
    %v4464 = vadd.f32 %v4393, %v4452
    %v4465 = vadd.f32 %v4394, %v4453
    %v4466 = vadd.f32 %v4395, %v4454
    %v4467 = vadd.f32 %v4396, %v4455
    %v4468 = vadd.f32 %v4397, %v4456
    %v4469 = vadd.f32 %v4398, %v4457
    %v4470 = vadd.f32 %v4399, %v4458
    %v4471 = vadd.f32 %v4400, %v4459
    %v4472 = vadd.f32 %v4401, %v4460
    %vm4473 = vcmp.lt.s32.totalorder %v31, 112
    %vm4474 = vcmp.lt.s32.totalorder %v32, 112
    %vm4475 = vcmp.lt.s32.totalorder %v33, 112
    %vm4476 = vcmp.lt.s32.totalorder %v34, 112
    %vm4477 = vcmp.lt.s32.totalorder %v35, 112
    %vm4478 = vcmp.lt.s32.totalorder %v36, 112
    %vm4479 = vcmp.lt.s32.totalorder %v37, 112
    %vm4480 = vcmp.lt.s32.totalorder %v38, 112
    %vm4481 = vcmp.lt.s32.totalorder %v39, 112
    %vm4482 = vcmp.lt.s32.totalorder %v40, 112
    %vm4483 = vcmp.lt.s32.totalorder %v41, 112
    %v4484 = vsel %vm97, 1.0, 0.0
    %v4485 = vsel %vm4473, 1.0, 0.0
    %v4486 = vsel %vm4474, 1.0, 0.0
    %v4487 = vsel %vm4475, 1.0, 0.0
    %v4488 = vsel %vm4476, 1.0, 0.0
    %v4489 = vsel %vm4477, 1.0, 0.0
    %v4490 = vsel %vm4478, 1.0, 0.0
    %v4491 = vsel %vm4479, 1.0, 0.0
    %v4492 = vsel %vm4480, 1.0, 0.0
    %v4493 = vsel %vm4481, 1.0, 0.0
    %v4494 = vsel %vm4482, 1.0, 0.0
    %v4495 = vsel %vm4483, 1.0, 0.0
    %v4496 = vadd.f32 %v4425, %v4484
    %v4497 = vadd.f32 %v4426, %v4485
    %v4498 = vadd.f32 %v4427, %v4486
    %v4499 = vadd.f32 %v4428, %v4487
    %v4500 = vadd.f32 %v4429, %v4488
    %v4501 = vadd.f32 %v4430, %v4489
    %v4502 = vadd.f32 %v4431, %v4490
    %v4503 = vadd.f32 %v4432, %v4491
    %v4504 = vadd.f32 %v4433, %v4492
    %v4505 = vadd.f32 %v4434, %v4493
    %v4506 = vadd.f32 %v4435, %v4494
    %v4507 = vadd.f32 %v4436, %v4495
    %vm4508 = vcmp.ge.s32.totalorder %v30, 1424
    %vm4509 = vcmp.ge.s32.totalorder %v31, 1424
    %vm4510 = vcmp.ge.s32.totalorder %v32, 1424
    %vm4511 = vcmp.ge.s32.totalorder %v33, 1424
    %vm4512 = vcmp.ge.s32.totalorder %v34, 1424
    %vm4513 = vcmp.ge.s32.totalorder %v35, 1424
    %vm4514 = vcmp.ge.s32.totalorder %v36, 1424
    %vm4515 = vcmp.ge.s32.totalorder %v37, 1424
    %vm4516 = vcmp.ge.s32.totalorder %v38, 1424
    %vm4517 = vcmp.ge.s32.totalorder %v39, 1424
    %vm4518 = vcmp.ge.s32.totalorder %v40, 1424
    %vm4519 = vcmp.ge.s32.totalorder %v41, 1424
    %v4520 = vsel %vm4508, 1.0, 0.0
    %v4521 = vsel %vm4509, 1.0, 0.0
    %v4522 = vsel %vm4510, 1.0, 0.0
    %v4523 = vsel %vm4511, 1.0, 0.0
    %v4524 = vsel %vm4512, 1.0, 0.0
    %v4525 = vsel %vm4513, 1.0, 0.0
    %v4526 = vsel %vm4514, 1.0, 0.0
    %v4527 = vsel %vm4515, 1.0, 0.0
    %v4528 = vsel %vm4516, 1.0, 0.0
    %v4529 = vsel %vm4517, 1.0, 0.0
    %v4530 = vsel %vm4518, 1.0, 0.0
    %v4531 = vsel %vm4519, 1.0, 0.0
    %v4532 = vadd.f32 %v4461, %v4520
    %v4533 = vadd.f32 %v4462, %v4521
    %v4534 = vadd.f32 %v4463, %v4522
    %v4535 = vadd.f32 %v4464, %v4523
    %v4536 = vadd.f32 %v4465, %v4524
    %v4537 = vadd.f32 %v4466, %v4525
    %v4538 = vadd.f32 %v4467, %v4526
    %v4539 = vadd.f32 %v4468, %v4527
    %v4540 = vadd.f32 %v4469, %v4528
    %v4541 = vadd.f32 %v4470, %v4529
    %v4542 = vadd.f32 %v4471, %v4530
    %v4543 = vadd.f32 %v4472, %v4531
    %v4544 = vsel %vm4020, 1.0, 0.0
    %v4545 = vsel %vm4021, 1.0, 0.0
    %v4546 = vsel %vm4022, 1.0, 0.0
    %v4547 = vsel %vm4023, 1.0, 0.0
    %v4548 = vsel %vm4024, 1.0, 0.0
    %v4549 = vsel %vm4025, 1.0, 0.0
    %v4550 = vsel %vm4026, 1.0, 0.0
    %v4551 = vsel %vm4027, 1.0, 0.0
    %v4552 = vsel %vm4028, 1.0, 0.0
    %v4553 = vsel %vm4029, 1.0, 0.0
    %v4554 = vsel %vm4030, 1.0, 0.0
    %v4555 = vsel %vm4031, 1.0, 0.0
    %v4556 = vadd.f32 %v4496, %v4544
    %v4557 = vadd.f32 %v4497, %v4545
    %v4558 = vadd.f32 %v4498, %v4546
    %v4559 = vadd.f32 %v4499, %v4547
    %v4560 = vadd.f32 %v4500, %v4548
    %v4561 = vadd.f32 %v4501, %v4549
    %v4562 = vadd.f32 %v4502, %v4550
    %v4563 = vadd.f32 %v4503, %v4551
    %v4564 = vadd.f32 %v4504, %v4552
    %v4565 = vadd.f32 %v4505, %v4553
    %v4566 = vadd.f32 %v4506, %v4554
    %v4567 = vadd.f32 %v4507, %v4555
    %v4568 = vsel %vm4068, 1.0, 0.0
    %v4569 = vsel %vm4069, 1.0, 0.0
    %v4570 = vsel %vm4070, 1.0, 0.0
    %v4571 = vsel %vm4071, 1.0, 0.0
    %v4572 = vsel %vm4072, 1.0, 0.0
    %v4573 = vsel %vm4073, 1.0, 0.0
    %v4574 = vsel %vm4074, 1.0, 0.0
    %v4575 = vsel %vm4075, 1.0, 0.0
    %v4576 = vsel %vm4076, 1.0, 0.0
    %v4577 = vsel %vm4077, 1.0, 0.0
    %v4578 = vsel %vm4078, 1.0, 0.0
    %v4579 = vsel %vm4079, 1.0, 0.0
    %v4580 = vadd.f32 %v4532, %v4568
    %v4581 = vadd.f32 %v4533, %v4569
    %v4582 = vadd.f32 %v4534, %v4570
    %v4583 = vadd.f32 %v4535, %v4571
    %v4584 = vadd.f32 %v4536, %v4572
    %v4585 = vadd.f32 %v4537, %v4573
    %v4586 = vadd.f32 %v4538, %v4574
    %v4587 = vadd.f32 %v4539, %v4575
    %v4588 = vadd.f32 %v4540, %v4576
    %v4589 = vadd.f32 %v4541, %v4577
    %v4590 = vadd.f32 %v4542, %v4578
    %v4591 = vadd.f32 %v4543, %v4579
    %vm4592 = vcmp.lt.s32.totalorder %v30, 144
    %vm4593 = vcmp.lt.s32.totalorder %v31, 144
    %vm4594 = vcmp.lt.s32.totalorder %v32, 144
    %vm4595 = vcmp.lt.s32.totalorder %v33, 144
    %vm4596 = vcmp.lt.s32.totalorder %v34, 144
    %vm4597 = vcmp.lt.s32.totalorder %v35, 144
    %vm4598 = vcmp.lt.s32.totalorder %v36, 144
    %vm4599 = vcmp.lt.s32.totalorder %v37, 144
    %vm4600 = vcmp.lt.s32.totalorder %v38, 144
    %vm4601 = vcmp.lt.s32.totalorder %v39, 144
    %vm4602 = vcmp.lt.s32.totalorder %v40, 144
    %vm4603 = vcmp.lt.s32.totalorder %v41, 144
    %v4604 = vsel %vm4592, 1.0, 0.0
    %v4605 = vsel %vm4593, 1.0, 0.0
    %v4606 = vsel %vm4594, 1.0, 0.0
    %v4607 = vsel %vm4595, 1.0, 0.0
    %v4608 = vsel %vm4596, 1.0, 0.0
    %v4609 = vsel %vm4597, 1.0, 0.0
    %v4610 = vsel %vm4598, 1.0, 0.0
    %v4611 = vsel %vm4599, 1.0, 0.0
    %v4612 = vsel %vm4600, 1.0, 0.0
    %v4613 = vsel %vm4601, 1.0, 0.0
    %v4614 = vsel %vm4602, 1.0, 0.0
    %v4615 = vsel %vm4603, 1.0, 0.0
    %v4616 = vadd.f32 %v4556, %v4604
    %v4617 = vadd.f32 %v4557, %v4605
    %v4618 = vadd.f32 %v4558, %v4606
    %v4619 = vadd.f32 %v4559, %v4607
    %v4620 = vadd.f32 %v4560, %v4608
    %v4621 = vadd.f32 %v4561, %v4609
    %v4622 = vadd.f32 %v4562, %v4610
    %v4623 = vadd.f32 %v4563, %v4611
    %v4624 = vadd.f32 %v4564, %v4612
    %v4625 = vadd.f32 %v4565, %v4613
    %v4626 = vadd.f32 %v4566, %v4614
    %v4627 = vadd.f32 %v4567, %v4615
    %vm4628 = vcmp.ge.s32.totalorder %v30, 1392
    %vm4629 = vcmp.ge.s32.totalorder %v31, 1392
    %vm4630 = vcmp.ge.s32.totalorder %v32, 1392
    %vm4631 = vcmp.ge.s32.totalorder %v33, 1392
    %vm4632 = vcmp.ge.s32.totalorder %v34, 1392
    %vm4633 = vcmp.ge.s32.totalorder %v35, 1392
    %vm4634 = vcmp.ge.s32.totalorder %v36, 1392
    %vm4635 = vcmp.ge.s32.totalorder %v37, 1392
    %vm4636 = vcmp.ge.s32.totalorder %v38, 1392
    %vm4637 = vcmp.ge.s32.totalorder %v39, 1392
    %vm4638 = vcmp.ge.s32.totalorder %v40, 1392
    %vm4639 = vcmp.ge.s32.totalorder %v41, 1392
    %v4640 = vsel %vm4628, 1.0, 0.0
    %v4641 = vsel %vm4629, 1.0, 0.0
    %v4642 = vsel %vm4630, 1.0, 0.0
    %v4643 = vsel %vm4631, 1.0, 0.0
    %v4644 = vsel %vm4632, 1.0, 0.0
    %v4645 = vsel %vm4633, 1.0, 0.0
    %v4646 = vsel %vm4634, 1.0, 0.0
    %v4647 = vsel %vm4635, 1.0, 0.0
    %v4648 = vsel %vm4636, 1.0, 0.0
    %v4649 = vsel %vm4637, 1.0, 0.0
    %v4650 = vsel %vm4638, 1.0, 0.0
    %v4651 = vsel %vm4639, 1.0, 0.0
    %v4652 = vadd.f32 %v4580, %v4640
    %v4653 = vadd.f32 %v4581, %v4641
    %v4654 = vadd.f32 %v4582, %v4642
    %v4655 = vadd.f32 %v4583, %v4643
    %v4656 = vadd.f32 %v4584, %v4644
    %v4657 = vadd.f32 %v4585, %v4645
    %v4658 = vadd.f32 %v4586, %v4646
    %v4659 = vadd.f32 %v4587, %v4647
    %v4660 = vadd.f32 %v4588, %v4648
    %v4661 = vadd.f32 %v4589, %v4649
    %v4662 = vadd.f32 %v4590, %v4650
    %v4663 = vadd.f32 %v4591, %v4651
    %vm4664 = vcmp.lt.s32.totalorder %v30, 160
    %vm4665 = vcmp.lt.s32.totalorder %v31, 160
    %vm4666 = vcmp.lt.s32.totalorder %v32, 160
    %vm4667 = vcmp.lt.s32.totalorder %v33, 160
    %vm4668 = vcmp.lt.s32.totalorder %v34, 160
    %vm4669 = vcmp.lt.s32.totalorder %v35, 160
    %vm4670 = vcmp.lt.s32.totalorder %v36, 160
    %vm4671 = vcmp.lt.s32.totalorder %v37, 160
    %vm4672 = vcmp.lt.s32.totalorder %v38, 160
    %vm4673 = vcmp.lt.s32.totalorder %v39, 160
    %vm4674 = vcmp.lt.s32.totalorder %v40, 160
    %vm4675 = vcmp.lt.s32.totalorder %v41, 160
    %v4676 = vsel %vm4664, 1.0, 0.0
    %v4677 = vsel %vm4665, 1.0, 0.0
    %v4678 = vsel %vm4666, 1.0, 0.0
    %v4679 = vsel %vm4667, 1.0, 0.0
    %v4680 = vsel %vm4668, 1.0, 0.0
    %v4681 = vsel %vm4669, 1.0, 0.0
    %v4682 = vsel %vm4670, 1.0, 0.0
    %v4683 = vsel %vm4671, 1.0, 0.0
    %v4684 = vsel %vm4672, 1.0, 0.0
    %v4685 = vsel %vm4673, 1.0, 0.0
    %v4686 = vsel %vm4674, 1.0, 0.0
    %v4687 = vsel %vm4675, 1.0, 0.0
    %v4688 = vadd.f32 %v4616, %v4676
    %v4689 = vadd.f32 %v4617, %v4677
    %v4690 = vadd.f32 %v4618, %v4678
    %v4691 = vadd.f32 %v4619, %v4679
    %v4692 = vadd.f32 %v4620, %v4680
    %v4693 = vadd.f32 %v4621, %v4681
    %v4694 = vadd.f32 %v4622, %v4682
    %v4695 = vadd.f32 %v4623, %v4683
    %v4696 = vadd.f32 %v4624, %v4684
    %v4697 = vadd.f32 %v4625, %v4685
    %v4698 = vadd.f32 %v4626, %v4686
    %v4699 = vadd.f32 %v4627, %v4687
    %vm4700 = vcmp.ge.s32.totalorder %v30, 1376
    %vm4701 = vcmp.ge.s32.totalorder %v31, 1376
    %vm4702 = vcmp.ge.s32.totalorder %v32, 1376
    %vm4703 = vcmp.ge.s32.totalorder %v33, 1376
    %vm4704 = vcmp.ge.s32.totalorder %v34, 1376
    %vm4705 = vcmp.ge.s32.totalorder %v35, 1376
    %vm4706 = vcmp.ge.s32.totalorder %v36, 1376
    %vm4707 = vcmp.ge.s32.totalorder %v37, 1376
    %vm4708 = vcmp.ge.s32.totalorder %v38, 1376
    %vm4709 = vcmp.ge.s32.totalorder %v39, 1376
    %vm4710 = vcmp.ge.s32.totalorder %v40, 1376
    %vm4711 = vcmp.ge.s32.totalorder %v41, 1376
    %v4712 = vsel %vm4700, 1.0, 0.0
    %v4713 = vsel %vm4701, 1.0, 0.0
    %v4714 = vsel %vm4702, 1.0, 0.0
    %v4715 = vsel %vm4703, 1.0, 0.0
    %v4716 = vsel %vm4704, 1.0, 0.0
    %v4717 = vsel %vm4705, 1.0, 0.0
    %v4718 = vsel %vm4706, 1.0, 0.0
    %v4719 = vsel %vm4707, 1.0, 0.0
    %v4720 = vsel %vm4708, 1.0, 0.0
    %v4721 = vsel %vm4709, 1.0, 0.0
    %v4722 = vsel %vm4710, 1.0, 0.0
    %v4723 = vsel %vm4711, 1.0, 0.0
    %v4724 = vadd.f32 %v4652, %v4712
    %v4725 = vadd.f32 %v4653, %v4713
    %v4726 = vadd.f32 %v4654, %v4714
    %v4727 = vadd.f32 %v4655, %v4715
    %v4728 = vadd.f32 %v4656, %v4716
    %v4729 = vadd.f32 %v4657, %v4717
    %v4730 = vadd.f32 %v4658, %v4718
    %v4731 = vadd.f32 %v4659, %v4719
    %v4732 = vadd.f32 %v4660, %v4720
    %v4733 = vadd.f32 %v4661, %v4721
    %v4734 = vadd.f32 %v4662, %v4722
    %v4735 = vadd.f32 %v4663, %v4723
    %vm4736 = vcmp.lt.s32.totalorder %v30, 176
    %vm4737 = vcmp.lt.s32.totalorder %v31, 176
    %vm4738 = vcmp.lt.s32.totalorder %v32, 176
    %vm4739 = vcmp.lt.s32.totalorder %v33, 176
    %vm4740 = vcmp.lt.s32.totalorder %v34, 176
    %vm4741 = vcmp.lt.s32.totalorder %v35, 176
    %vm4742 = vcmp.lt.s32.totalorder %v36, 176
    %vm4743 = vcmp.lt.s32.totalorder %v37, 176
    %vm4744 = vcmp.lt.s32.totalorder %v38, 176
    %vm4745 = vcmp.lt.s32.totalorder %v39, 176
    %vm4746 = vcmp.lt.s32.totalorder %v40, 176
    %vm4747 = vcmp.lt.s32.totalorder %v41, 176
    %v4748 = vsel %vm4736, 1.0, 0.0
    %v4749 = vsel %vm4737, 1.0, 0.0
    %v4750 = vsel %vm4738, 1.0, 0.0
    %v4751 = vsel %vm4739, 1.0, 0.0
    %v4752 = vsel %vm4740, 1.0, 0.0
    %v4753 = vsel %vm4741, 1.0, 0.0
    %v4754 = vsel %vm4742, 1.0, 0.0
    %v4755 = vsel %vm4743, 1.0, 0.0
    %v4756 = vsel %vm4744, 1.0, 0.0
    %v4757 = vsel %vm4745, 1.0, 0.0
    %v4758 = vsel %vm4746, 1.0, 0.0
    %v4759 = vsel %vm4747, 1.0, 0.0
    %v4760 = vadd.f32 %v4688, %v4748
    %v4761 = vadd.f32 %v4689, %v4749
    %v4762 = vadd.f32 %v4690, %v4750
    %v4763 = vadd.f32 %v4691, %v4751
    %v4764 = vadd.f32 %v4692, %v4752
    %v4765 = vadd.f32 %v4693, %v4753
    %v4766 = vadd.f32 %v4694, %v4754
    %v4767 = vadd.f32 %v4695, %v4755
    %v4768 = vadd.f32 %v4696, %v4756
    %v4769 = vadd.f32 %v4697, %v4757
    %v4770 = vadd.f32 %v4698, %v4758
    %v4771 = vadd.f32 %v4699, %v4759
    %vm4772 = vcmp.ge.s32.totalorder %v30, 1360
    %vm4773 = vcmp.ge.s32.totalorder %v31, 1360
    %vm4774 = vcmp.ge.s32.totalorder %v32, 1360
    %vm4775 = vcmp.ge.s32.totalorder %v33, 1360
    %vm4776 = vcmp.ge.s32.totalorder %v34, 1360
    %vm4777 = vcmp.ge.s32.totalorder %v35, 1360
    %vm4778 = vcmp.ge.s32.totalorder %v36, 1360
    %vm4779 = vcmp.ge.s32.totalorder %v37, 1360
    %vm4780 = vcmp.ge.s32.totalorder %v38, 1360
    %vm4781 = vcmp.ge.s32.totalorder %v39, 1360
    %vm4782 = vcmp.ge.s32.totalorder %v40, 1360
    %vm4783 = vcmp.ge.s32.totalorder %v41, 1360
    %v4784 = vsel %vm4772, 1.0, 0.0
    %v4785 = vsel %vm4773, 1.0, 0.0
    %v4786 = vsel %vm4774, 1.0, 0.0
    %v4787 = vsel %vm4775, 1.0, 0.0
    %v4788 = vsel %vm4776, 1.0, 0.0
    %v4789 = vsel %vm4777, 1.0, 0.0
    %v4790 = vsel %vm4778, 1.0, 0.0
    %v4791 = vsel %vm4779, 1.0, 0.0
    %v4792 = vsel %vm4780, 1.0, 0.0
    %v4793 = vsel %vm4781, 1.0, 0.0
    %v4794 = vsel %vm4782, 1.0, 0.0
    %v4795 = vsel %vm4783, 1.0, 0.0
    %v4796 = vadd.f32 %v4724, %v4784
    %v4797 = vadd.f32 %v4725, %v4785
    %v4798 = vadd.f32 %v4726, %v4786
    %v4799 = vadd.f32 %v4727, %v4787
    %v4800 = vadd.f32 %v4728, %v4788
    %v4801 = vadd.f32 %v4729, %v4789
    %v4802 = vadd.f32 %v4730, %v4790
    %v4803 = vadd.f32 %v4731, %v4791
    %v4804 = vadd.f32 %v4732, %v4792
    %v4805 = vadd.f32 %v4733, %v4793
    %v4806 = vadd.f32 %v4734, %v4794
    %v4807 = vadd.f32 %v4735, %v4795
    %vm4808 = vcmp.lt.s32.totalorder %v30, 192
    %vm4809 = vcmp.lt.s32.totalorder %v31, 192
    %vm4810 = vcmp.lt.s32.totalorder %v32, 192
    %vm4811 = vcmp.lt.s32.totalorder %v33, 192
    %vm4812 = vcmp.lt.s32.totalorder %v34, 192
    %vm4813 = vcmp.lt.s32.totalorder %v35, 192
    %vm4814 = vcmp.lt.s32.totalorder %v36, 192
    %vm4815 = vcmp.lt.s32.totalorder %v37, 192
    %vm4816 = vcmp.lt.s32.totalorder %v38, 192
    %vm4817 = vcmp.lt.s32.totalorder %v39, 192
    %vm4818 = vcmp.lt.s32.totalorder %v40, 192
    %vm4819 = vcmp.lt.s32.totalorder %v41, 192
    %v4820 = vsel %vm4808, 1.0, 0.0
    %v4821 = vsel %vm4809, 1.0, 0.0
    %v4822 = vsel %vm4810, 1.0, 0.0
    %v4823 = vsel %vm4811, 1.0, 0.0
    %v4824 = vsel %vm4812, 1.0, 0.0
    %v4825 = vsel %vm4813, 1.0, 0.0
    %v4826 = vsel %vm4814, 1.0, 0.0
    %v4827 = vsel %vm4815, 1.0, 0.0
    %v4828 = vsel %vm4816, 1.0, 0.0
    %v4829 = vsel %vm4817, 1.0, 0.0
    %v4830 = vsel %vm4818, 1.0, 0.0
    %v4831 = vsel %vm4819, 1.0, 0.0
    %v4832 = vadd.f32 %v4760, %v4820
    %v4833 = vadd.f32 %v4761, %v4821
    %v4834 = vadd.f32 %v4762, %v4822
    %v4835 = vadd.f32 %v4763, %v4823
    %v4836 = vadd.f32 %v4764, %v4824
    %v4837 = vadd.f32 %v4765, %v4825
    %v4838 = vadd.f32 %v4766, %v4826
    %v4839 = vadd.f32 %v4767, %v4827
    %v4840 = vadd.f32 %v4768, %v4828
    %v4841 = vadd.f32 %v4769, %v4829
    %v4842 = vadd.f32 %v4770, %v4830
    %v4843 = vadd.f32 %v4771, %v4831
    %vm4844 = vcmp.ge.s32.totalorder %v30, 1344
    %vm4845 = vcmp.ge.s32.totalorder %v31, 1344
    %vm4846 = vcmp.ge.s32.totalorder %v32, 1344
    %vm4847 = vcmp.ge.s32.totalorder %v33, 1344
    %vm4848 = vcmp.ge.s32.totalorder %v34, 1344
    %vm4849 = vcmp.ge.s32.totalorder %v35, 1344
    %vm4850 = vcmp.ge.s32.totalorder %v36, 1344
    %vm4851 = vcmp.ge.s32.totalorder %v37, 1344
    %vm4852 = vcmp.ge.s32.totalorder %v38, 1344
    %vm4853 = vcmp.ge.s32.totalorder %v39, 1344
    %vm4854 = vcmp.ge.s32.totalorder %v40, 1344
    %vm4855 = vcmp.ge.s32.totalorder %v41, 1344
    %v4856 = vsel %vm4844, 1.0, 0.0
    %v4857 = vsel %vm4845, 1.0, 0.0
    %v4858 = vsel %vm4846, 1.0, 0.0
    %v4859 = vsel %vm4847, 1.0, 0.0
    %v4860 = vsel %vm4848, 1.0, 0.0
    %v4861 = vsel %vm4849, 1.0, 0.0
    %v4862 = vsel %vm4850, 1.0, 0.0
    %v4863 = vsel %vm4851, 1.0, 0.0
    %v4864 = vsel %vm4852, 1.0, 0.0
    %v4865 = vsel %vm4853, 1.0, 0.0
    %v4866 = vsel %vm4854, 1.0, 0.0
    %v4867 = vsel %vm4855, 1.0, 0.0
    %v4868 = vadd.f32 %v4796, %v4856
    %v4869 = vadd.f32 %v4797, %v4857
    %v4870 = vadd.f32 %v4798, %v4858
    %v4871 = vadd.f32 %v4799, %v4859
    %v4872 = vadd.f32 %v4800, %v4860
    %v4873 = vadd.f32 %v4801, %v4861
    %v4874 = vadd.f32 %v4802, %v4862
    %v4875 = vadd.f32 %v4803, %v4863
    %v4876 = vadd.f32 %v4804, %v4864
    %v4877 = vadd.f32 %v4805, %v4865
    %v4878 = vadd.f32 %v4806, %v4866
    %v4879 = vadd.f32 %v4807, %v4867
    %v4880 = vmul.f32 %v4832, %v4056
    %v4881 = vmul.f32 %v4833, %v4057
    %v4882 = vmul.f32 %v4834, %v4058
    %v4883 = vmul.f32 %v4835, %v4059
    %v4884 = vmul.f32 %v4836, %v4060
    %v4885 = vmul.f32 %v4837, %v4061
    %v4886 = vmul.f32 %v4838, %v4062
    %v4887 = vmul.f32 %v4839, %v4063
    %v4888 = vmul.f32 %v4840, %v4064
    %v4889 = vmul.f32 %v4841, %v4065
    %v4890 = vmul.f32 %v4842, %v4066
    %v4891 = vmul.f32 %v4843, %v4067
    %v4904 = vrot.slane %v4881, 6
    %v4905 = vrot.slane %v4882, 4
    %v4906 = vrot.slane %v4883, 2
    %v4907 = vrot.slane %v4885, 6
    %v4908 = vrot.slane %v4886, 4
    %v4909 = vrot.slane %v4887, 2
    %v4910 = vrot.slane %v4889, 6
    %v4911 = vrot.slane %v4890, 4
    %v4912 = vrot.slane %v4891, 2
    %v4913 = vsel %vm179, %v4880, %v4904
    %v4914 = vsel %vm181, %v4905, %v4906
    %v4915 = vsel %vm183, %v4913, %v4914
    %v4916 = vsel %vm179, %v4884, %v4907
    %v4917 = vsel %vm181, %v4908, %v4909
    %v4918 = vsel %vm183, %v4916, %v4917
    %v4919 = vsel %vm179, %v4888, %v4910
    %v4920 = vsel %vm181, %v4911, %v4912
    %v4921 = vsel %vm183, %v4919, %v4920
    %v4925 = vadd.f32 %v3532, %v4915
    %v4926 = vadd.f32 %v3533, %v4918
    %v4927 = vadd.f32 %v3534, %v4921
    %v4928 = vmul.f32 %v4868, %v4104
    %v4929 = vmul.f32 %v4869, %v4105
    %v4930 = vmul.f32 %v4870, %v4106
    %v4931 = vmul.f32 %v4871, %v4107
    %v4932 = vmul.f32 %v4872, %v4108
    %v4933 = vmul.f32 %v4873, %v4109
    %v4934 = vmul.f32 %v4874, %v4110
    %v4935 = vmul.f32 %v4875, %v4111
    %v4936 = vmul.f32 %v4876, %v4112
    %v4937 = vmul.f32 %v4877, %v4113
    %v4938 = vmul.f32 %v4878, %v4114
    %v4939 = vmul.f32 %v4879, %v4115
    %v4952 = vrot.slane %v4929, 6
    %v4953 = vrot.slane %v4930, 4
    %v4954 = vrot.slane %v4931, 2
    %v4955 = vrot.slane %v4933, 6
    %v4956 = vrot.slane %v4934, 4
    %v4957 = vrot.slane %v4935, 2
    %v4958 = vrot.slane %v4937, 6
    %v4959 = vrot.slane %v4938, 4
    %v4960 = vrot.slane %v4939, 2
    %v4961 = vsel %vm179, %v4928, %v4952
    %v4962 = vsel %vm181, %v4953, %v4954
    %v4963 = vsel %vm183, %v4961, %v4962
    %v4964 = vsel %vm179, %v4932, %v4955
    %v4965 = vsel %vm181, %v4956, %v4957
    %v4966 = vsel %vm183, %v4964, %v4965
    %v4967 = vsel %vm179, %v4936, %v4958
    %v4968 = vsel %vm181, %v4959, %v4960
    %v4969 = vsel %vm183, %v4967, %v4968
    %v4973 = vadd.f32 %v4925, %v4963
    %v4974 = vadd.f32 %v4926, %v4966
    %v4975 = vadd.f32 %v4927, %v4969
    %v4976 = vmul.f32 %v4973, 0.04
    %v4977 = vmul.f32 %v4974, 0.04
    %v4978 = vmul.f32 %v4975, 0.04
    %4979 = vst [vmem:[#allocation6] sm:$0xff] %v4976
    %4980 = vst [vmem:[#allocation6 + $0x8] sm:$0xff] %v4977
    %4981 = vst [vmem:[#allocation6 + $0x10] sm:$0xff] %v4978
    %v4982 = vsub.f32 %v26, %v4976
    %v4983 = vsub.f32 %v27, %v4977
    %v4984 = vsub.f32 %v28, %v4978
    %4985 = vst [vmem:[#allocation5] sm:$0xff] %v4982
    %4986 = vst [vmem:[#allocation5 + $0x8] sm:$0xff] %v4983
    %4987 = vst [vmem:[#allocation5 + $0x10] sm:$0xff] %v4984
    // Predicated region
    $region10: #{tpu_custom_call.1} parent=1 // pred_check
      _
    $region11: #{tpu_custom_call.1} parent=1 // pred_check_branch
      %4989 = sbr.rel (0) target = $region13
    $region12: #{tpu_custom_call.1} parent=1 // pred_region
      %4991 = vsyncadd [#allocation4], 0
      %s4993 = sshll.u32 [#allocation5], 4
      %s4994 = int_to_ptr.vmem [resolvable:$true] %s4993
      %s4995 = sshll.u32 %s1, 4
      %s4996 = int_to_ptr.hbm [resolvable:$true] %s4995
      %4998 = dma.vmem_to_hbm [thread:$0]  %s4994, 384, %s4996, [#allocation4]
    $region13: #{tpu_custom_call.1} parent=1 // pred_fallthru
      _
    // Predicated region
    $region14: #{tpu_custom_call.1} parent=1 // pred_check
      _
    $region15: #{tpu_custom_call.1} parent=1 // pred_check_branch
      %5000 = sbr.rel (0) target = $region17
    $region16: #{tpu_custom_call.1} parent=1 // pred_region
      %5002 = vsyncadd [#allocation7], 0
      %s5004 = sshll.u32 [#allocation6], 4
      %s5005 = int_to_ptr.vmem [resolvable:$true] %s5004
      %s5006 = sshll.u32 %s2, 4
      %s5007 = int_to_ptr.hbm [resolvable:$true] %s5006
      %5009 = dma.vmem_to_hbm [thread:$0]  %s5005, 384, %s5007, [#allocation7]
    $region17: #{tpu_custom_call.1} parent=1 // pred_fallthru
      _
    // Predicated region
    $region18: #{tpu_custom_call.1} parent=1 // pred_check
      _
    $region19: #{tpu_custom_call.1} parent=1 // pred_check_branch
      %5011 = sbr.rel (0) target = $region21
    $region20: #{tpu_custom_call.1} parent=1 // pred_region
      %5013 = dma.done [#allocation4], 384
    $region21: #{tpu_custom_call.1} parent=1 // pred_fallthru
      _
    // Predicated region
    $region22: #{tpu_custom_call.1} parent=1 // pred_check
      _
    $region23: #{tpu_custom_call.1} parent=1 // pred_check_branch
      %5015 = sbr.rel (0) target = $region25
    $region24: #{tpu_custom_call.1} parent=1 // pred_region
      %5017 = dma.done [#allocation7], 384
    $region25: #{tpu_custom_call.1} parent=1 // pred_fallthru
      _
    %5018 = vsyncpa [#allocation3], 1
    %5019 = vsyncpa [#allocation4], 1
    %5020 = vsyncpa [#allocation7], 1

</llo_original>
